<compile_context>
chip_gen: v7x
topology: tpu7x:2x2x1
jax: 0.10.0
libtpu: 0.0.40
codegen_flags: <defaults>
</compile_context>

<pallas_src>
import math

import jax
import jax.numpy as jnp
from jax.experimental import pallas as pl

F32 = jnp.float32
BF16 = jnp.bfloat16


def make_kernel(B, S, H, G, A, O, NH):
    DH = H // NH
    scale = 1.0 / math.sqrt(DH)

    def lstm_gates(pre, c, hd):
        # PyTorch gate order: i, f, g, o.  Two whole-vreg activations
        # (pre is exactly one 128-lane row) instead of four per-gate ones.
        sg = jax.nn.sigmoid(pre)
        tg = jnp.tanh(pre)
        ig = sg[:, 0 * hd:1 * hd]
        fg = sg[:, 1 * hd:2 * hd]
        og = sg[:, 3 * hd:4 * hd]
        gg = tg[:, 2 * hd:3 * hd]
        c_new = fg * c + ig * gg
        h_new = og * jnp.tanh(c_new)
        return h_new, c_new

    def kernel(x_ref, mask_ref, adjs_ref,
               w_ih1_ref, w_hh1_ref, b1_ref,
               w_qkv_ref, b_qkv_ref,
               wt_ref, bt_ref, wg_ref, bg_ref, wvs_ref, bvs_ref,
               w_dc1_ref, b_g1_ref, wd2_ref, wc2_ref, b_g2_ref,
               w_ih2_ref, w_hh2_ref, b2_ref, wfc_ref, bfc_ref,
               prob_ref):
        x = x_ref[...]                                       # (B, S, H) f32
        x2d_bf = x.reshape(B * S, H).astype(BF16)

        # ---------------- sent_lstm (batched over B on sublanes) ----------------
        xp1 = (jnp.dot(x2d_bf, w_ih1_ref[...], preferred_element_type=F32)
               + b1_ref[...]).reshape(B, S, 4 * H)
        w_hh1 = w_hh1_ref[...]
        h = jnp.zeros((B, H), F32)
        c = jnp.zeros((B, H), F32)
        hs = []
        for t in range(S):
            pre = xp1[:, t, :] + jnp.dot(h.astype(BF16), w_hh1,
                                         preferred_element_type=F32)
            h, c = lstm_gates(pre, c, H)
            hs.append(h)
        seq1 = jnp.stack(hs, axis=1)                         # (B, S, H)

        # ---------------- BertSelfAttention (fused QKV, per-head einsums) ----------------
        qkv = (jnp.dot(seq1.reshape(B * S, H).astype(BF16), w_qkv_ref[...],
                       preferred_element_type=F32)
               + b_qkv_ref[...]).reshape(B, S, 3 * H)
        qkv_bf = qkv.astype(BF16)
        mask = mask_ref[...]                                 # (B, 1, S) additive
        ctx_heads = []
        for hidx in range(NH):
            qh = qkv_bf[:, :, hidx * DH:(hidx + 1) * DH]
            kh = qkv_bf[:, :, H + hidx * DH:H + (hidx + 1) * DH]
            vh = qkv_bf[:, :, 2 * H + hidx * DH:2 * H + (hidx + 1) * DH]
            sc = jnp.einsum('bqd,bkd->bqk', qh, kh,
                            preferred_element_type=F32) * scale + mask
            m = jnp.max(sc, axis=-1, keepdims=True)
            e = jnp.exp(sc - m)
            p = e * pl.reciprocal(jnp.sum(e, axis=-1, keepdims=True), approx=True)
            ctx_heads.append(jnp.einsum('bqk,bkd->bqd', p.astype(BF16), vh,
                                        preferred_element_type=F32))
        sent_out = jnp.concatenate(ctx_heads, axis=-1)       # (B, S, H)
        han = jnp.sum(sent_out, axis=1)                      # (B, H)

        # ---------------- GCN branches (data/control stacked along 2B) ----------------
        adjs = adjs_ref[...]                                 # (2B, S, S) bf16
        sup1 = jnp.dot(x2d_bf, w_dc1_ref[...], preferred_element_type=F32)   # (B*S, 2G)
        g0 = jnp.concatenate([sup1[:, :G], sup1[:, G:]], axis=0).reshape(2 * B, S, G)
        h1 = jax.nn.relu(
            jnp.einsum('zij,zjg->zig', adjs, g0.astype(BF16),
                       preferred_element_type=F32) + b_g1_ref[...])
        # (dropout p=0.5 between layers is a no-op in eval mode)
        h1_2d = h1.reshape(2 * B * S, G).astype(BF16)
        sup2 = jnp.concatenate(
            [jnp.dot(h1_2d[:B * S], wd2_ref[...], preferred_element_type=F32),
             jnp.dot(h1_2d[B * S:], wc2_ref[...], preferred_element_type=F32)],
            axis=0).reshape(2 * B, S, G)
        h2 = jax.nn.relu(
            jnp.einsum('zij,zjg->zig', adjs, sup2.astype(BF16),
                       preferred_element_type=F32) + b_g2_ref[...])

        # ---------------- SoftAttention (both branches in one pass) ----------------
        t_proj = (jnp.dot(han.astype(BF16), wt_ref[...], preferred_element_type=F32)
                  + bt_ref[...])                             # (B, A)
        t_stack = jnp.concatenate([t_proj, t_proj], axis=0).reshape(2 * B, 1, A)
        g_proj = (jnp.dot(h2.reshape(2 * B * S, G).astype(BF16), wg_ref[...],
                          preferred_element_type=F32)
                  + bg_ref[...]).reshape(2 * B, S, A)
        act = jnp.tanh(t_stack + g_proj)
        sc2 = (jnp.dot(act.reshape(2 * B * S, A).astype(BF16), wvs_ref[...],
                       preferred_element_type=F32)
               + bvs_ref[...]).reshape(2 * B, S, 1)
        m2 = jnp.max(sc2, axis=1, keepdims=True)
        e2 = jnp.exp(sc2 - m2)
        attn = e2 * pl.reciprocal(jnp.sum(e2, axis=1, keepdims=True), approx=True)
        att_g = attn * h2                                    # (2B, S, G)
        ad = att_g[:B]                                       # (B, S, G)
        ac = att_g[B:]

        # ---------------- fusion LSTM (single concat + single input projection) ----------------
        fus_in = jnp.concatenate([sent_out, ad, ac], axis=-1)          # (B, S, H+2G)
        xp2 = (jnp.dot(fus_in.reshape(B * S, H + 2 * G).astype(BF16), w_ih2_ref[...],
                       preferred_element_type=F32)
               + b2_ref[...]).reshape(B, S, 4 * O)
        w_hh2 = w_hh2_ref[...]
        h2l = jnp.zeros((B, O), F32)
        c2l = jnp.zeros((B, O), F32)
        hmax = jnp.full((B, O), -jnp.inf, F32)
        for t in range(S):
            pre = xp2[:, t, :] + jnp.dot(h2l.astype(BF16), w_hh2,
                                         preferred_element_type=F32)
            h2l, c2l = lstm_gates(pre, c2l, O)
            hmax = jnp.maximum(hmax, h2l)

        logit = (jnp.dot(hmax.astype(BF16), wfc_ref[...], preferred_element_type=F32)
                 + bfc_ref[...])                             # (B, 1)
        prob_ref[...] = jax.nn.sigmoid(logit)

    return kernel


def init_params(key, H, G, A, O):
    keys = jax.random.split(key, 32)
    it = iter(keys)

    def w(shape):
        return jax.random.normal(next(it), shape, jnp.float32) * 0.1

    p = {}
    # sent_lstm: LSTM(H -> H)
    p['sent_w_ih'] = w((4 * H, H)); p['sent_w_hh'] = w((4 * H, H))
    p['sent_b_ih'] = w((4 * H,));   p['sent_b_hh'] = w((4 * H,))
    # BertSelfAttention: Linear(H, H) x3
    for name in ('q', 'k', 'v'):
        p[f'attn_{name}_w'] = w((H, H)); p[f'attn_{name}_b'] = w((H,))
    # SoftAttention: Linear(H, A), Linear(G, A), Linear(A, 1)
    p['sa_wt'] = w((A, H)); p['sa_bt'] = w((A,))
    p['sa_wg'] = w((A, G)); p['sa_bg'] = w((A,))
    p['sa_v'] = w((1, A));  p['sa_vb'] = w((1,))
    # GraphConvolution: weight (in, out), bias (out,)
    p['d1_w'] = w((H, G)); p['d1_b'] = w((G,))
    p['d2_w'] = w((G, G)); p['d2_b'] = w((G,))
    p['c1_w'] = w((H, G)); p['c1_b'] = w((G,))
    p['c2_w'] = w((G, G)); p['c2_b'] = w((G,))
    # fusion LSTM: LSTM(H + 2G -> O)
    p['f_w_ih'] = w((4 * O, H + 2 * G)); p['f_w_hh'] = w((4 * O, O))
    p['f_b_ih'] = w((4 * O,));           p['f_b_hh'] = w((4 * O,))
    # fc: Linear(O, 1)
    p['fc_w'] = w((1, O)); p['fc_b'] = w((1,))
    return p


def sent_sel_han_gcn_confusion(x_sbh, attention_mask, labels, data_matrix,
                               control_matrix, params, head_num):
    S, B, H = x_sbh.shape
    G = params['d1_w'].shape[1]
    A = params['sa_wt'].shape[0]
    O = params['f_w_hh'].shape[1]
    NH = head_num

    # ---- data tensors (the module's .permute(1,0,2) happens here) ----
    x_bsh = jnp.transpose(x_sbh.astype(F32), (1, 0, 2))              # (B, S, H)
    # TODO(synk): attention_mask is consumed as a raw additive mask; replicate
    # any BERT-style (1-mask)*-1e4 extension in the caller if needed.
    mask = attention_mask.astype(F32).reshape(B, 1, S)
    adjs = jnp.concatenate([data_matrix, control_matrix], axis=0).astype(BF16)  # (2B,S,S)

    # ---- weights pre-transposed to (in, out); bf16 for MXU, biases f32 ----
    w_ih1 = params['sent_w_ih'].T.astype(BF16)                       # (H, 4H)
    w_hh1 = params['sent_w_hh'].T.astype(BF16)                       # (H, 4H)
    b1 = (params['sent_b_ih'] + params['sent_b_hh']).reshape(1, 4 * H).astype(F32)

    w_qkv = jnp.concatenate([params['attn_q_w'].T, params['attn_k_w'].T,
                             params['attn_v_w'].T], axis=1).astype(BF16)   # (H, 3H)
    b_qkv = jnp.concatenate([params['attn_q_b'], params['attn_k_b'],
                             params['attn_v_b']]).reshape(1, 3 * H).astype(F32)

    wt = params['sa_wt'].T.astype(BF16); bt = params['sa_bt'].reshape(1, A).astype(F32)
    wg = params['sa_wg'].T.astype(BF16); bg = params['sa_bg'].reshape(1, A).astype(F32)
    wvs = params['sa_v'].T.astype(BF16); bvs = params['sa_vb'].reshape(1, 1).astype(F32)

    w_dc1 = jnp.concatenate([params['d1_w'], params['c1_w']], axis=1).astype(BF16)  # (H, 2G)
    b_g1 = jnp.concatenate(
        [jnp.tile(params['d1_b'].reshape(1, 1, G), (B, 1, 1)),
         jnp.tile(params['c1_b'].reshape(1, 1, G), (B, 1, 1))], axis=0).astype(F32)  # (2B,1,G)
    wd2 = params['d2_w'].astype(BF16)
    wc2 = params['c2_w'].astype(BF16)
    b_g2 = jnp.concatenate(
        [jnp.tile(params['d2_b'].reshape(1, 1, G), (B, 1, 1)),
         jnp.tile(params['c2_b'].reshape(1, 1, G), (B, 1, 1))], axis=0).astype(F32)  # (2B,1,G)

    w_ih2 = params['f_w_ih'].T.astype(BF16)                          # (H+2G, 4O)
    w_hh2 = params['f_w_hh'].T.astype(BF16)                          # (O, 4O)
    b2 = (params['f_b_ih'] + params['f_b_hh']).reshape(1, 4 * O).astype(F32)
    wfc = params['fc_w'].T.astype(BF16)                              # (O, 1)
    bfc = params['fc_b'].reshape(1, 1).astype(F32)

    kernel = make_kernel(B, S, H, G, A, O, NH)
    # Single invocation, no grid: every operand is tiny and whole-array VMEM
    # resident (default BlockSpecs), batch B is stacked on sublanes in-kernel.
    prob = pl.pallas_call(
        kernel,
        out_shape=jax.ShapeDtypeStruct((B, 1), F32),
    )(x_bsh, mask, adjs,
      w_ih1, w_hh1, b1, w_qkv, b_qkv,
      wt, bt, wg, bg, wvs, bvs,
      w_dc1, b_g1, wd2, wc2, b_g2,
      w_ih2, w_hh2, b2, wfc, bfc)

    # BCE loss term moved to the wrapper (drops 2 kernel operands + 2 EUP logs).
    lab = labels.astype(F32).reshape(B)
    p0 = prob[:, 0]
    loss = -jnp.mean(jnp.log(p0 + 1e-10) * lab
                     + jnp.log(1.0 - p0 + 1e-10) * (1.0 - lab))
    return loss, prob


if __name__ == "__main__":
    B, S, H, NH, G, A, O = 2, 8, 32, 4, 16, 16, 32
    key = jax.random.PRNGKey(0)
    k_x, k_ad, k_ac, k_p = jax.random.split(key, 4)

    # input_ as the PyTorch module receives it (seq-major, pre-permute)
    x = jax.random.normal(k_x, (S, B, H), jnp.float32)
    attention_mask = jnp.zeros((B, S), jnp.float32)        # additive mask, all attend
    labels = jnp.array([0.0, 1.0], jnp.float32)
    data_matrix = jax.nn.softmax(jax.random.normal(k_ad, (B, S, S)), axis=-1)
    control_matrix = jax.nn.softmax(jax.random.normal(k_ac, (B, S, S)), axis=-1)

    params = init_params(k_p, H, G, A, O)

    loss, prob = sent_sel_han_gcn_confusion(
        x, attention_mask, labels, data_matrix, control_matrix, params, NH)
    jax.block_until_ready((loss, prob))
    assert prob.shape == (B, 1)
    assert bool(jnp.isfinite(loss))
    assert bool(jnp.all(jnp.isfinite(prob)))
    print("KERNEL_OK")
</pallas_src>

<mosaic_0001>
module attributes {stable_mosaic.version = 11 : i64} {
  func.func @kernel(%arg0: memref<2x8x32xf32, #tpu.memory_space<vmem>>, %arg1: memref<2x1x8xf32, #tpu.memory_space<vmem>>, %arg2: memref<4x8x8xbf16, #tpu.memory_space<vmem>>, %arg3: memref<32x128xbf16, #tpu.memory_space<vmem>>, %arg4: memref<32x128xbf16, #tpu.memory_space<vmem>>, %arg5: memref<1x128xf32, #tpu.memory_space<vmem>>, %arg6: memref<32x96xbf16, #tpu.memory_space<vmem>>, %arg7: memref<1x96xf32, #tpu.memory_space<vmem>>, %arg8: memref<32x16xbf16, #tpu.memory_space<vmem>>, %arg9: memref<1x16xf32, #tpu.memory_space<vmem>>, %arg10: memref<16x16xbf16, #tpu.memory_space<vmem>>, %arg11: memref<1x16xf32, #tpu.memory_space<vmem>>, %arg12: memref<16x1xbf16, #tpu.memory_space<vmem>>, %arg13: memref<1x1xf32, #tpu.memory_space<vmem>>, %arg14: memref<32x32xbf16, #tpu.memory_space<vmem>>, %arg15: memref<4x1x16xf32, #tpu.memory_space<vmem>>, %arg16: memref<16x16xbf16, #tpu.memory_space<vmem>>, %arg17: memref<16x16xbf16, #tpu.memory_space<vmem>>, %arg18: memref<4x1x16xf32, #tpu.memory_space<vmem>>, %arg19: memref<64x128xbf16, #tpu.memory_space<vmem>>, %arg20: memref<32x128xbf16, #tpu.memory_space<vmem>>, %arg21: memref<1x128xf32, #tpu.memory_space<vmem>>, %arg22: memref<32x1xbf16, #tpu.memory_space<vmem>>, %arg23: memref<1x1xf32, #tpu.memory_space<vmem>>, %arg24: memref<2x1xf32, #tpu.memory_space<vmem>>) attributes {dimension_semantics = [], scalar_prefetch = 0 : i64, scratch_operands = 0 : i64, tpu.core_type = #tpu.core_type<tc>} {
    %c0 = arith.constant 0 : index
    %c0_0 = arith.constant 0 : index
    %c0_1 = arith.constant 0 : index
    %0 = vector.load %arg0[%c0, %c0_0, %c0_1] : memref<2x8x32xf32, #tpu.memory_space<vmem>>, vector<2x8x32xf32>
    %1 = vector.shape_cast %0 : vector<2x8x32xf32> to vector<16x32xf32>
    %2 = arith.truncf %1 : vector<16x32xf32> to vector<16x32xbf16>
    %c0_2 = arith.constant 0 : index
    %c0_3 = arith.constant 0 : index
    %3 = vector.load %arg3[%c0_2, %c0_3] : memref<32x128xbf16, #tpu.memory_space<vmem>>, vector<32x128xbf16>
    %cst = arith.constant dense<0.000000e+00> : vector<16x128xf32>
    %4 = tpu.matmul %2, %3, %cst {dimension_numbers = #tpu.dot_dimension_numbers<[1], [0], [0], [1], [0, 0, 1, 1], [], []>} : vector<16x32xbf16>, vector<32x128xbf16>, vector<16x128xf32> -> vector<16x128xf32>
    %c0_4 = arith.constant 0 : index
    %c0_5 = arith.constant 0 : index
    %5 = vector.load %arg5[%c0_4, %c0_5] : memref<1x128xf32, #tpu.memory_space<vmem>>, vector<1x128xf32>
    %6 = vector.broadcast %5 : vector<1x128xf32> to vector<16x128xf32>
    %7 = arith.addf %4, %6 : vector<16x128xf32>
    %8 = vector.shape_cast %7 : vector<16x128xf32> to vector<2x8x128xf32>
    %c0_6 = arith.constant 0 : index
    %c0_7 = arith.constant 0 : index
    %9 = vector.load %arg4[%c0_6, %c0_7] : memref<32x128xbf16, #tpu.memory_space<vmem>>, vector<32x128xbf16>
    %cst_8 = arith.constant 0.000000e+00 : f32
    %10 = vector.broadcast %cst_8 : f32 to vector<2x32xf32>
    %cst_9 = arith.constant 0.000000e+00 : f32
    %11 = vector.broadcast %cst_9 : f32 to vector<2x32xf32>
    %12 = vector.extract_strided_slice %8 {offsets = [0, 0, 0], sizes = [2, 1, 128], strides = [1, 1, 1]} : vector<2x8x128xf32> to vector<2x1x128xf32>
    %13 = vector.shape_cast %12 : vector<2x1x128xf32> to vector<2x128xf32>
    %14 = arith.truncf %10 : vector<2x32xf32> to vector<2x32xbf16>
    %cst_10 = arith.constant dense<0.000000e+00> : vector<2x128xf32>
    %15 = tpu.matmul %14, %9, %cst_10 {dimension_numbers = #tpu.dot_dimension_numbers<[1], [0], [0], [1], [0, 0, 1, 1], [], []>} : vector<2x32xbf16>, vector<32x128xbf16>, vector<2x128xf32> -> vector<2x128xf32>
    %16 = arith.addf %13, %15 : vector<2x128xf32>
    %17 = arith.negf %16 : vector<2x128xf32>
    %18 = math.exp %17 : vector<2x128xf32>
    %cst_11 = arith.constant 1.000000e+00 : f32
    %19 = vector.broadcast %cst_11 : f32 to vector<2x128xf32>
    %20 = arith.addf %19, %18 : vector<2x128xf32>
    %21 = arith.divf %19, %20 : vector<2x128xf32>
    %22 = math.tanh %16 : vector<2x128xf32>
    %23 = vector.extract_strided_slice %21 {offsets = [0, 0], sizes = [2, 32], strides = [1, 1]} : vector<2x128xf32> to vector<2x32xf32>
    %24 = vector.extract_strided_slice %21 {offsets = [0, 32], sizes = [2, 32], strides = [1, 1]} : vector<2x128xf32> to vector<2x32xf32>
    %25 = vector.extract_strided_slice %21 {offsets = [0, 96], sizes = [2, 32], strides = [1, 1]} : vector<2x128xf32> to vector<2x32xf32>
    %26 = vector.extract_strided_slice %22 {offsets = [0, 64], sizes = [2, 32], strides = [1, 1]} : vector<2x128xf32> to vector<2x32xf32>
    %27 = arith.mulf %24, %11 : vector<2x32xf32>
    %28 = arith.mulf %23, %26 : vector<2x32xf32>
    %29 = arith.addf %27, %28 : vector<2x32xf32>
    %30 = math.tanh %29 : vector<2x32xf32>
    %31 = arith.mulf %25, %30 : vector<2x32xf32>
    %32 = vector.extract_strided_slice %8 {offsets = [0, 1, 0], sizes = [2, 1, 128], strides = [1, 1, 1]} : vector<2x8x128xf32> to vector<2x1x128xf32>
    %33 = vector.shape_cast %32 : vector<2x1x128xf32> to vector<2x128xf32>
    %34 = arith.truncf %31 : vector<2x32xf32> to vector<2x32xbf16>
    %cst_12 = arith.constant dense<0.000000e+00> : vector<2x128xf32>
    %35 = tpu.matmul %34, %9, %cst_12 {dimension_numbers = #tpu.dot_dimension_numbers<[1], [0], [0], [1], [0, 0, 1, 1], [], []>} : vector<2x32xbf16>, vector<32x128xbf16>, vector<2x128xf32> -> vector<2x128xf32>
    %36 = arith.addf %33, %35 : vector<2x128xf32>
    %37 = arith.negf %36 : vector<2x128xf32>
    %38 = math.exp %37 : vector<2x128xf32>
    %cst_13 = arith.constant 1.000000e+00 : f32
    %39 = vector.broadcast %cst_13 : f32 to vector<2x128xf32>
    %40 = arith.addf %39, %38 : vector<2x128xf32>
    %41 = arith.divf %39, %40 : vector<2x128xf32>
    %42 = math.tanh %36 : vector<2x128xf32>
    %43 = vector.extract_strided_slice %41 {offsets = [0, 0], sizes = [2, 32], strides = [1, 1]} : vector<2x128xf32> to vector<2x32xf32>
    %44 = vector.extract_strided_slice %41 {offsets = [0, 32], sizes = [2, 32], strides = [1, 1]} : vector<2x128xf32> to vector<2x32xf32>
    %45 = vector.extract_strided_slice %41 {offsets = [0, 96], sizes = [2, 32], strides = [1, 1]} : vector<2x128xf32> to vector<2x32xf32>
    %46 = vector.extract_strided_slice %42 {offsets = [0, 64], sizes = [2, 32], strides = [1, 1]} : vector<2x128xf32> to vector<2x32xf32>
    %47 = arith.mulf %44, %29 : vector<2x32xf32>
    %48 = arith.mulf %43, %46 : vector<2x32xf32>
    %49 = arith.addf %47, %48 : vector<2x32xf32>
    %50 = math.tanh %49 : vector<2x32xf32>
    %51 = arith.mulf %45, %50 : vector<2x32xf32>
    %52 = vector.extract_strided_slice %8 {offsets = [0, 2, 0], sizes = [2, 1, 128], strides = [1, 1, 1]} : vector<2x8x128xf32> to vector<2x1x128xf32>
    %53 = vector.shape_cast %52 : vector<2x1x128xf32> to vector<2x128xf32>
    %54 = arith.truncf %51 : vector<2x32xf32> to vector<2x32xbf16>
    %cst_14 = arith.constant dense<0.000000e+00> : vector<2x128xf32>
    %55 = tpu.matmul %54, %9, %cst_14 {dimension_numbers = #tpu.dot_dimension_numbers<[1], [0], [0], [1], [0, 0, 1, 1], [], []>} : vector<2x32xbf16>, vector<32x128xbf16>, vector<2x128xf32> -> vector<2x128xf32>
    %56 = arith.addf %53, %55 : vector<2x128xf32>
    %57 = arith.negf %56 : vector<2x128xf32>
    %58 = math.exp %57 : vector<2x128xf32>
    %cst_15 = arith.constant 1.000000e+00 : f32
    %59 = vector.broadcast %cst_15 : f32 to vector<2x128xf32>
    %60 = arith.addf %59, %58 : vector<2x128xf32>
    %61 = arith.divf %59, %60 : vector<2x128xf32>
    %62 = math.tanh %56 : vector<2x128xf32>
    %63 = vector.extract_strided_slice %61 {offsets = [0, 0], sizes = [2, 32], strides = [1, 1]} : vector<2x128xf32> to vector<2x32xf32>
    %64 = vector.extract_strided_slice %61 {offsets = [0, 32], sizes = [2, 32], strides = [1, 1]} : vector<2x128xf32> to vector<2x32xf32>
    %65 = vector.extract_strided_slice %61 {offsets = [0, 96], sizes = [2, 32], strides = [1, 1]} : vector<2x128xf32> to vector<2x32xf32>
    %66 = vector.extract_strided_slice %62 {offsets = [0, 64], sizes = [2, 32], strides = [1, 1]} : vector<2x128xf32> to vector<2x32xf32>
    %67 = arith.mulf %64, %49 : vector<2x32xf32>
    %68 = arith.mulf %63, %66 : vector<2x32xf32>
    %69 = arith.addf %67, %68 : vector<2x32xf32>
    %70 = math.tanh %69 : vector<2x32xf32>
    %71 = arith.mulf %65, %70 : vector<2x32xf32>
    %72 = vector.extract_strided_slice %8 {offsets = [0, 3, 0], sizes = [2, 1, 128], strides = [1, 1, 1]} : vector<2x8x128xf32> to vector<2x1x128xf32>
    %73 = vector.shape_cast %72 : vector<2x1x128xf32> to vector<2x128xf32>
    %74 = arith.truncf %71 : vector<2x32xf32> to vector<2x32xbf16>
    %cst_16 = arith.constant dense<0.000000e+00> : vector<2x128xf32>
    %75 = tpu.matmul %74, %9, %cst_16 {dimension_numbers = #tpu.dot_dimension_numbers<[1], [0], [0], [1], [0, 0, 1, 1], [], []>} : vector<2x32xbf16>, vector<32x128xbf16>, vector<2x128xf32> -> vector<2x128xf32>
    %76 = arith.addf %73, %75 : vector<2x128xf32>
    %77 = arith.negf %76 : vector<2x128xf32>
    %78 = math.exp %77 : vector<2x128xf32>
    %cst_17 = arith.constant 1.000000e+00 : f32
    %79 = vector.broadcast %cst_17 : f32 to vector<2x128xf32>
    %80 = arith.addf %79, %78 : vector<2x128xf32>
    %81 = arith.divf %79, %80 : vector<2x128xf32>
    %82 = math.tanh %76 : vector<2x128xf32>
    %83 = vector.extract_strided_slice %81 {offsets = [0, 0], sizes = [2, 32], strides = [1, 1]} : vector<2x128xf32> to vector<2x32xf32>
    %84 = vector.extract_strided_slice %81 {offsets = [0, 32], sizes = [2, 32], strides = [1, 1]} : vector<2x128xf32> to vector<2x32xf32>
    %85 = vector.extract_strided_slice %81 {offsets = [0, 96], sizes = [2, 32], strides = [1, 1]} : vector<2x128xf32> to vector<2x32xf32>
    %86 = vector.extract_strided_slice %82 {offsets = [0, 64], sizes = [2, 32], strides = [1, 1]} : vector<2x128xf32> to vector<2x32xf32>
    %87 = arith.mulf %84, %69 : vector<2x32xf32>
    %88 = arith.mulf %83, %86 : vector<2x32xf32>
    %89 = arith.addf %87, %88 : vector<2x32xf32>
    %90 = math.tanh %89 : vector<2x32xf32>
    %91 = arith.mulf %85, %90 : vector<2x32xf32>
    %92 = vector.extract_strided_slice %8 {offsets = [0, 4, 0], sizes = [2, 1, 128], strides = [1, 1, 1]} : vector<2x8x128xf32> to vector<2x1x128xf32>
    %93 = vector.shape_cast %92 : vector<2x1x128xf32> to vector<2x128xf32>
    %94 = arith.truncf %91 : vector<2x32xf32> to vector<2x32xbf16>
    %cst_18 = arith.constant dense<0.000000e+00> : vector<2x128xf32>
    %95 = tpu.matmul %94, %9, %cst_18 {dimension_numbers = #tpu.dot_dimension_numbers<[1], [0], [0], [1], [0, 0, 1, 1], [], []>} : vector<2x32xbf16>, vector<32x128xbf16>, vector<2x128xf32> -> vector<2x128xf32>
    %96 = arith.addf %93, %95 : vector<2x128xf32>
    %97 = arith.negf %96 : vector<2x128xf32>
    %98 = math.exp %97 : vector<2x128xf32>
    %cst_19 = arith.constant 1.000000e+00 : f32
    %99 = vector.broadcast %cst_19 : f32 to vector<2x128xf32>
    %100 = arith.addf %99, %98 : vector<2x128xf32>
    %101 = arith.divf %99, %100 : vector<2x128xf32>
    %102 = math.tanh %96 : vector<2x128xf32>
    %103 = vector.extract_strided_slice %101 {offsets = [0, 0], sizes = [2, 32], strides = [1, 1]} : vector<2x128xf32> to vector<2x32xf32>
    %104 = vector.extract_strided_slice %101 {offsets = [0, 32], sizes = [2, 32], strides = [1, 1]} : vector<2x128xf32> to vector<2x32xf32>
    %105 = vector.extract_strided_slice %101 {offsets = [0, 96], sizes = [2, 32], strides = [1, 1]} : vector<2x128xf32> to vector<2x32xf32>
    %106 = vector.extract_strided_slice %102 {offsets = [0, 64], sizes = [2, 32], strides = [1, 1]} : vector<2x128xf32> to vector<2x32xf32>
    %107 = arith.mulf %104, %89 : vector<2x32xf32>
    %108 = arith.mulf %103, %106 : vector<2x32xf32>
    %109 = arith.addf %107, %108 : vector<2x32xf32>
    %110 = math.tanh %109 : vector<2x32xf32>
    %111 = arith.mulf %105, %110 : vector<2x32xf32>
    %112 = vector.extract_strided_slice %8 {offsets = [0, 5, 0], sizes = [2, 1, 128], strides = [1, 1, 1]} : vector<2x8x128xf32> to vector<2x1x128xf32>
    %113 = vector.shape_cast %112 : vector<2x1x128xf32> to vector<2x128xf32>
    %114 = arith.truncf %111 : vector<2x32xf32> to vector<2x32xbf16>
    %cst_20 = arith.constant dense<0.000000e+00> : vector<2x128xf32>
    %115 = tpu.matmul %114, %9, %cst_20 {dimension_numbers = #tpu.dot_dimension_numbers<[1], [0], [0], [1], [0, 0, 1, 1], [], []>} : vector<2x32xbf16>, vector<32x128xbf16>, vector<2x128xf32> -> vector<2x128xf32>
    %116 = arith.addf %113, %115 : vector<2x128xf32>
    %117 = arith.negf %116 : vector<2x128xf32>
    %118 = math.exp %117 : vector<2x128xf32>
    %cst_21 = arith.constant 1.000000e+00 : f32
    %119 = vector.broadcast %cst_21 : f32 to vector<2x128xf32>
    %120 = arith.addf %119, %118 : vector<2x128xf32>
    %121 = arith.divf %119, %120 : vector<2x128xf32>
    %122 = math.tanh %116 : vector<2x128xf32>
    %123 = vector.extract_strided_slice %121 {offsets = [0, 0], sizes = [2, 32], strides = [1, 1]} : vector<2x128xf32> to vector<2x32xf32>
    %124 = vector.extract_strided_slice %121 {offsets = [0, 32], sizes = [2, 32], strides = [1, 1]} : vector<2x128xf32> to vector<2x32xf32>
    %125 = vector.extract_strided_slice %121 {offsets = [0, 96], sizes = [2, 32], strides = [1, 1]} : vector<2x128xf32> to vector<2x32xf32>
    %126 = vector.extract_strided_slice %122 {offsets = [0, 64], sizes = [2, 32], strides = [1, 1]} : vector<2x128xf32> to vector<2x32xf32>
    %127 = arith.mulf %124, %109 : vector<2x32xf32>
    %128 = arith.mulf %123, %126 : vector<2x32xf32>
    %129 = arith.addf %127, %128 : vector<2x32xf32>
    %130 = math.tanh %129 : vector<2x32xf32>
    %131 = arith.mulf %125, %130 : vector<2x32xf32>
    %132 = vector.extract_strided_slice %8 {offsets = [0, 6, 0], sizes = [2, 1, 128], strides = [1, 1, 1]} : vector<2x8x128xf32> to vector<2x1x128xf32>
    %133 = vector.shape_cast %132 : vector<2x1x128xf32> to vector<2x128xf32>
    %134 = arith.truncf %131 : vector<2x32xf32> to vector<2x32xbf16>
    %cst_22 = arith.constant dense<0.000000e+00> : vector<2x128xf32>
    %135 = tpu.matmul %134, %9, %cst_22 {dimension_numbers = #tpu.dot_dimension_numbers<[1], [0], [0], [1], [0, 0, 1, 1], [], []>} : vector<2x32xbf16>, vector<32x128xbf16>, vector<2x128xf32> -> vector<2x128xf32>
    %136 = arith.addf %133, %135 : vector<2x128xf32>
    %137 = arith.negf %136 : vector<2x128xf32>
    %138 = math.exp %137 : vector<2x128xf32>
    %cst_23 = arith.constant 1.000000e+00 : f32
    %139 = vector.broadcast %cst_23 : f32 to vector<2x128xf32>
    %140 = arith.addf %139, %138 : vector<2x128xf32>
    %141 = arith.divf %139, %140 : vector<2x128xf32>
    %142 = math.tanh %136 : vector<2x128xf32>
    %143 = vector.extract_strided_slice %141 {offsets = [0, 0], sizes = [2, 32], strides = [1, 1]} : vector<2x128xf32> to vector<2x32xf32>
    %144 = vector.extract_strided_slice %141 {offsets = [0, 32], sizes = [2, 32], strides = [1, 1]} : vector<2x128xf32> to vector<2x32xf32>
    %145 = vector.extract_strided_slice %141 {offsets = [0, 96], sizes = [2, 32], strides = [1, 1]} : vector<2x128xf32> to vector<2x32xf32>
    %146 = vector.extract_strided_slice %142 {offsets = [0, 64], sizes = [2, 32], strides = [1, 1]} : vector<2x128xf32> to vector<2x32xf32>
    %147 = arith.mulf %144, %129 : vector<2x32xf32>
    %148 = arith.mulf %143, %146 : vector<2x32xf32>
    %149 = arith.addf %147, %148 : vector<2x32xf32>
    %150 = math.tanh %149 : vector<2x32xf32>
    %151 = arith.mulf %145, %150 : vector<2x32xf32>
    %152 = vector.extract_strided_slice %8 {offsets = [0, 7, 0], sizes = [2, 1, 128], strides = [1, 1, 1]} : vector<2x8x128xf32> to vector<2x1x128xf32>
    %153 = vector.shape_cast %152 : vector<2x1x128xf32> to vector<2x128xf32>
    %154 = arith.truncf %151 : vector<2x32xf32> to vector<2x32xbf16>
    %cst_24 = arith.constant dense<0.000000e+00> : vector<2x128xf32>
    %155 = tpu.matmul %154, %9, %cst_24 {dimension_numbers = #tpu.dot_dimension_numbers<[1], [0], [0], [1], [0, 0, 1, 1], [], []>} : vector<2x32xbf16>, vector<32x128xbf16>, vector<2x128xf32> -> vector<2x128xf32>
    %156 = arith.addf %153, %155 : vector<2x128xf32>
    %157 = arith.negf %156 : vector<2x128xf32>
    %158 = math.exp %157 : vector<2x128xf32>
    %cst_25 = arith.constant 1.000000e+00 : f32
    %159 = vector.broadcast %cst_25 : f32 to vector<2x128xf32>
    %160 = arith.addf %159, %158 : vector<2x128xf32>
    %161 = arith.divf %159, %160 : vector<2x128xf32>
    %162 = math.tanh %156 : vector<2x128xf32>
    %163 = vector.extract_strided_slice %161 {offsets = [0, 0], sizes = [2, 32], strides = [1, 1]} : vector<2x128xf32> to vector<2x32xf32>
    %164 = vector.extract_strided_slice %161 {offsets = [0, 32], sizes = [2, 32], strides = [1, 1]} : vector<2x128xf32> to vector<2x32xf32>
    %165 = vector.extract_strided_slice %161 {offsets = [0, 96], sizes = [2, 32], strides = [1, 1]} : vector<2x128xf32> to vector<2x32xf32>
    %166 = vector.extract_strided_slice %162 {offsets = [0, 64], sizes = [2, 32], strides = [1, 1]} : vector<2x128xf32> to vector<2x32xf32>
    %167 = arith.mulf %164, %149 : vector<2x32xf32>
    %168 = arith.mulf %163, %166 : vector<2x32xf32>
    %169 = arith.addf %167, %168 : vector<2x32xf32>
    %170 = math.tanh %169 : vector<2x32xf32>
    %171 = arith.mulf %165, %170 : vector<2x32xf32>
    %172 = vector.shape_cast %31 : vector<2x32xf32> to vector<2x1x32xf32>
    %173 = vector.shape_cast %51 : vector<2x32xf32> to vector<2x1x32xf32>
    %174 = vector.shape_cast %71 : vector<2x32xf32> to vector<2x1x32xf32>
    %175 = vector.shape_cast %91 : vector<2x32xf32> to vector<2x1x32xf32>
    %176 = vector.shape_cast %111 : vector<2x32xf32> to vector<2x1x32xf32>
    %177 = vector.shape_cast %131 : vector<2x32xf32> to vector<2x1x32xf32>
    %178 = vector.shape_cast %151 : vector<2x32xf32> to vector<2x1x32xf32>
    %179 = vector.shape_cast %171 : vector<2x32xf32> to vector<2x1x32xf32>
    %180 = tpu.concatenate %172, %173, %174, %175, %176, %177, %178, %179 in 1 : vector<2x1x32xf32>, vector<2x1x32xf32>, vector<2x1x32xf32>, vector<2x1x32xf32>, vector<2x1x32xf32>, vector<2x1x32xf32>, vector<2x1x32xf32>, vector<2x1x32xf32> -> vector<2x8x32xf32>
    %181 = vector.shape_cast %180 : vector<2x8x32xf32> to vector<16x32xf32>
    %182 = arith.truncf %181 : vector<16x32xf32> to vector<16x32xbf16>
    %c0_26 = arith.constant 0 : index
    %c0_27 = arith.constant 0 : index
    %183 = vector.load %arg6[%c0_26, %c0_27] : memref<32x96xbf16, #tpu.memory_space<vmem>>, vector<32x96xbf16>
    %cst_28 = arith.constant dense<0.000000e+00> : vector<16x96xf32>
    %184 = tpu.matmul %182, %183, %cst_28 {dimension_numbers = #tpu.dot_dimension_numbers<[1], [0], [0], [1], [0, 0, 1, 1], [], []>} : vector<16x32xbf16>, vector<32x96xbf16>, vector<16x96xf32> -> vector<16x96xf32>
    %c0_29 = arith.constant 0 : index
    %c0_30 = arith.constant 0 : index
    %185 = vector.load %arg7[%c0_29, %c0_30] : memref<1x96xf32, #tpu.memory_space<vmem>>, vector<1x96xf32>
    %186 = vector.broadcast %185 : vector<1x96xf32> to vector<16x96xf32>
    %187 = arith.addf %184, %186 : vector<16x96xf32>
    %188 = vector.shape_cast %187 : vector<16x96xf32> to vector<2x8x96xf32>
    %189 = arith.truncf %188 : vector<2x8x96xf32> to vector<2x8x96xbf16>
    %c0_31 = arith.constant 0 : index
    %c0_32 = arith.constant 0 : index
    %c0_33 = arith.constant 0 : index
    %190 = vector.load %arg1[%c0_31, %c0_32, %c0_33] : memref<2x1x8xf32, #tpu.memory_space<vmem>>, vector<2x1x8xf32>
    %191 = vector.extract_strided_slice %189 {offsets = [0, 0, 0], sizes = [2, 8, 8], strides = [1, 1, 1]} : vector<2x8x96xbf16> to vector<2x8x8xbf16>
    %192 = vector.extract_strided_slice %189 {offsets = [0, 0, 32], sizes = [2, 8, 8], strides = [1, 1, 1]} : vector<2x8x96xbf16> to vector<2x8x8xbf16>
    %193 = vector.extract_strided_slice %189 {offsets = [0, 0, 64], sizes = [2, 8, 8], strides = [1, 1, 1]} : vector<2x8x96xbf16> to vector<2x8x8xbf16>
    "tpu.trace_start"() <{level = 10 : i32, message = "bqd,bkd->bqk"}> : () -> ()
    %cst_34 = arith.constant dense<0.000000e+00> : vector<2x8x8xf32>
    %194 = tpu.matmul %191, %192, %cst_34 {dimension_numbers = #tpu.dot_dimension_numbers<[2], [2], [1], [1], [0, 0, 0, 1, 1, 1], [0], [0]>} : vector<2x8x8xbf16>, vector<2x8x8xbf16>, vector<2x8x8xf32> -> vector<2x8x8xf32>
    "tpu.trace_stop"() : () -> ()
    %cst_35 = arith.constant 0.353553385 : f32
    %195 = vector.broadcast %cst_35 : f32 to vector<2x8x8xf32>
    %196 = arith.mulf %194, %195 : vector<2x8x8xf32>
    %197 = vector.broadcast %190 : vector<2x1x8xf32> to vector<2x8x8xf32>
    %198 = arith.addf %196, %197 : vector<2x8x8xf32>
    %cst_36 = arith.constant dense<0xFF800000> : vector<2x8xf32>
    %199 = vector.multi_reduction <maximumf>, %198, %cst_36 [2] : vector<2x8x8xf32> to vector<2x8xf32>
    %200 = vector.shape_cast %199 : vector<2x8xf32> to vector<2x8x1xf32>
    %201 = vector.broadcast %200 : vector<2x8x1xf32> to vector<2x8x8xf32>
    %202 = arith.subf %198, %201 : vector<2x8x8xf32>
    %203 = math.exp %202 : vector<2x8x8xf32>
    %cst_37 = arith.constant dense<0.000000e+00> : vector<2x8xf32>
    %204 = vector.multi_reduction <add>, %203, %cst_37 [2] : vector<2x8x8xf32> to vector<2x8xf32>
    %205 = vector.shape_cast %204 : vector<2x8xf32> to vector<2x8x1xf32>
    %206 = tpu.reciprocal %205 {approx = true} : vector<2x8x1xf32> -> vector<2x8x1xf32>
    %207 = vector.broadcast %206 : vector<2x8x1xf32> to vector<2x8x8xf32>
    %208 = arith.mulf %203, %207 : vector<2x8x8xf32>
    %209 = arith.truncf %208 : vector<2x8x8xf32> to vector<2x8x8xbf16>
    "tpu.trace_start"() <{level = 10 : i32, message = "bqk,bkd->bqd"}> : () -> ()
    %cst_38 = arith.constant dense<0.000000e+00> : vector<2x8x8xf32>
    %210 = tpu.matmul %209, %193, %cst_38 {dimension_numbers = #tpu.dot_dimension_numbers<[2], [1], [1], [2], [0, 0, 0, 1, 1, 2], [0], [0]>} : vector<2x8x8xbf16>, vector<2x8x8xbf16>, vector<2x8x8xf32> -> vector<2x8x8xf32>
    "tpu.trace_stop"() : () -> ()
    %211 = vector.extract_strided_slice %189 {offsets = [0, 0, 8], sizes = [2, 8, 8], strides = [1, 1, 1]} : vector<2x8x96xbf16> to vector<2x8x8xbf16>
    %212 = vector.extract_strided_slice %189 {offsets = [0, 0, 40], sizes = [2, 8, 8], strides = [1, 1, 1]} : vector<2x8x96xbf16> to vector<2x8x8xbf16>
    %213 = vector.extract_strided_slice %189 {offsets = [0, 0, 72], sizes = [2, 8, 8], strides = [1, 1, 1]} : vector<2x8x96xbf16> to vector<2x8x8xbf16>
    "tpu.trace_start"() <{level = 10 : i32, message = "bqd,bkd->bqk"}> : () -> ()
    %cst_39 = arith.constant dense<0.000000e+00> : vector<2x8x8xf32>
    %214 = tpu.matmul %211, %212, %cst_39 {dimension_numbers = #tpu.dot_dimension_numbers<[2], [2], [1], [1], [0, 0, 0, 1, 1, 1], [0], [0]>} : vector<2x8x8xbf16>, vector<2x8x8xbf16>, vector<2x8x8xf32> -> vector<2x8x8xf32>
    "tpu.trace_stop"() : () -> ()
    %cst_40 = arith.constant 0.353553385 : f32
    %215 = vector.broadcast %cst_40 : f32 to vector<2x8x8xf32>
    %216 = arith.mulf %214, %215 : vector<2x8x8xf32>
    %217 = vector.broadcast %190 : vector<2x1x8xf32> to vector<2x8x8xf32>
    %218 = arith.addf %216, %217 : vector<2x8x8xf32>
    %cst_41 = arith.constant dense<0xFF800000> : vector<2x8xf32>
    %219 = vector.multi_reduction <maximumf>, %218, %cst_41 [2] : vector<2x8x8xf32> to vector<2x8xf32>
    %220 = vector.shape_cast %219 : vector<2x8xf32> to vector<2x8x1xf32>
    %221 = vector.broadcast %220 : vector<2x8x1xf32> to vector<2x8x8xf32>
    %222 = arith.subf %218, %221 : vector<2x8x8xf32>
    %223 = math.exp %222 : vector<2x8x8xf32>
    %cst_42 = arith.constant dense<0.000000e+00> : vector<2x8xf32>
    %224 = vector.multi_reduction <add>, %223, %cst_42 [2] : vector<2x8x8xf32> to vector<2x8xf32>
    %225 = vector.shape_cast %224 : vector<2x8xf32> to vector<2x8x1xf32>
    %226 = tpu.reciprocal %225 {approx = true} : vector<2x8x1xf32> -> vector<2x8x1xf32>
    %227 = vector.broadcast %226 : vector<2x8x1xf32> to vector<2x8x8xf32>
    %228 = arith.mulf %223, %227 : vector<2x8x8xf32>
    %229 = arith.truncf %228 : vector<2x8x8xf32> to vector<2x8x8xbf16>
    "tpu.trace_start"() <{level = 10 : i32, message = "bqk,bkd->bqd"}> : () -> ()
    %cst_43 = arith.constant dense<0.000000e+00> : vector<2x8x8xf32>
    %230 = tpu.matmul %229, %213, %cst_43 {dimension_numbers = #tpu.dot_dimension_numbers<[2], [1], [1], [2], [0, 0, 0, 1, 1, 2], [0], [0]>} : vector<2x8x8xbf16>, vector<2x8x8xbf16>, vector<2x8x8xf32> -> vector<2x8x8xf32>
    "tpu.trace_stop"() : () -> ()
    %231 = vector.extract_strided_slice %189 {offsets = [0, 0, 16], sizes = [2, 8, 8], strides = [1, 1, 1]} : vector<2x8x96xbf16> to vector<2x8x8xbf16>
    %232 = vector.extract_strided_slice %189 {offsets = [0, 0, 48], sizes = [2, 8, 8], strides = [1, 1, 1]} : vector<2x8x96xbf16> to vector<2x8x8xbf16>
    %233 = vector.extract_strided_slice %189 {offsets = [0, 0, 80], sizes = [2, 8, 8], strides = [1, 1, 1]} : vector<2x8x96xbf16> to vector<2x8x8xbf16>
    "tpu.trace_start"() <{level = 10 : i32, message = "bqd,bkd->bqk"}> : () -> ()
    %cst_44 = arith.constant dense<0.000000e+00> : vector<2x8x8xf32>
    %234 = tpu.matmul %231, %232, %cst_44 {dimension_numbers = #tpu.dot_dimension_numbers<[2], [2], [1], [1], [0, 0, 0, 1, 1, 1], [0], [0]>} : vector<2x8x8xbf16>, vector<2x8x8xbf16>, vector<2x8x8xf32> -> vector<2x8x8xf32>
    "tpu.trace_stop"() : () -> ()
    %cst_45 = arith.constant 0.353553385 : f32
    %235 = vector.broadcast %cst_45 : f32 to vector<2x8x8xf32>
    %236 = arith.mulf %234, %235 : vector<2x8x8xf32>
    %237 = vector.broadcast %190 : vector<2x1x8xf32> to vector<2x8x8xf32>
    %238 = arith.addf %236, %237 : vector<2x8x8xf32>
    %cst_46 = arith.constant dense<0xFF800000> : vector<2x8xf32>
    %239 = vector.multi_reduction <maximumf>, %238, %cst_46 [2] : vector<2x8x8xf32> to vector<2x8xf32>
    %240 = vector.shape_cast %239 : vector<2x8xf32> to vector<2x8x1xf32>
    %241 = vector.broadcast %240 : vector<2x8x1xf32> to vector<2x8x8xf32>
    %242 = arith.subf %238, %241 : vector<2x8x8xf32>
    %243 = math.exp %242 : vector<2x8x8xf32>
    %cst_47 = arith.constant dense<0.000000e+00> : vector<2x8xf32>
    %244 = vector.multi_reduction <add>, %243, %cst_47 [2] : vector<2x8x8xf32> to vector<2x8xf32>
    %245 = vector.shape_cast %244 : vector<2x8xf32> to vector<2x8x1xf32>
    %246 = tpu.reciprocal %245 {approx = true} : vector<2x8x1xf32> -> vector<2x8x1xf32>
    %247 = vector.broadcast %246 : vector<2x8x1xf32> to vector<2x8x8xf32>
    %248 = arith.mulf %243, %247 : vector<2x8x8xf32>
    %249 = arith.truncf %248 : vector<2x8x8xf32> to vector<2x8x8xbf16>
    "tpu.trace_start"() <{level = 10 : i32, message = "bqk,bkd->bqd"}> : () -> ()
    %cst_48 = arith.constant dense<0.000000e+00> : vector<2x8x8xf32>
    %250 = tpu.matmul %249, %233, %cst_48 {dimension_numbers = #tpu.dot_dimension_numbers<[2], [1], [1], [2], [0, 0, 0, 1, 1, 2], [0], [0]>} : vector<2x8x8xbf16>, vector<2x8x8xbf16>, vector<2x8x8xf32> -> vector<2x8x8xf32>
    "tpu.trace_stop"() : () -> ()
    %251 = vector.extract_strided_slice %189 {offsets = [0, 0, 24], sizes = [2, 8, 8], strides = [1, 1, 1]} : vector<2x8x96xbf16> to vector<2x8x8xbf16>
    %252 = vector.extract_strided_slice %189 {offsets = [0, 0, 56], sizes = [2, 8, 8], strides = [1, 1, 1]} : vector<2x8x96xbf16> to vector<2x8x8xbf16>
    %253 = vector.extract_strided_slice %189 {offsets = [0, 0, 88], sizes = [2, 8, 8], strides = [1, 1, 1]} : vector<2x8x96xbf16> to vector<2x8x8xbf16>
    "tpu.trace_start"() <{level = 10 : i32, message = "bqd,bkd->bqk"}> : () -> ()
    %cst_49 = arith.constant dense<0.000000e+00> : vector<2x8x8xf32>
    %254 = tpu.matmul %251, %252, %cst_49 {dimension_numbers = #tpu.dot_dimension_numbers<[2], [2], [1], [1], [0, 0, 0, 1, 1, 1], [0], [0]>} : vector<2x8x8xbf16>, vector<2x8x8xbf16>, vector<2x8x8xf32> -> vector<2x8x8xf32>
    "tpu.trace_stop"() : () -> ()
    %cst_50 = arith.constant 0.353553385 : f32
    %255 = vector.broadcast %cst_50 : f32 to vector<2x8x8xf32>
    %256 = arith.mulf %254, %255 : vector<2x8x8xf32>
    %257 = vector.broadcast %190 : vector<2x1x8xf32> to vector<2x8x8xf32>
    %258 = arith.addf %256, %257 : vector<2x8x8xf32>
    %cst_51 = arith.constant dense<0xFF800000> : vector<2x8xf32>
    %259 = vector.multi_reduction <maximumf>, %258, %cst_51 [2] : vector<2x8x8xf32> to vector<2x8xf32>
    %260 = vector.shape_cast %259 : vector<2x8xf32> to vector<2x8x1xf32>
    %261 = vector.broadcast %260 : vector<2x8x1xf32> to vector<2x8x8xf32>
    %262 = arith.subf %258, %261 : vector<2x8x8xf32>
    %263 = math.exp %262 : vector<2x8x8xf32>
    %cst_52 = arith.constant dense<0.000000e+00> : vector<2x8xf32>
    %264 = vector.multi_reduction <add>, %263, %cst_52 [2] : vector<2x8x8xf32> to vector<2x8xf32>
    %265 = vector.shape_cast %264 : vector<2x8xf32> to vector<2x8x1xf32>
    %266 = tpu.reciprocal %265 {approx = true} : vector<2x8x1xf32> -> vector<2x8x1xf32>
    %267 = vector.broadcast %266 : vector<2x8x1xf32> to vector<2x8x8xf32>
    %268 = arith.mulf %263, %267 : vector<2x8x8xf32>
    %269 = arith.truncf %268 : vector<2x8x8xf32> to vector<2x8x8xbf16>
    "tpu.trace_start"() <{level = 10 : i32, message = "bqk,bkd->bqd"}> : () -> ()
    %cst_53 = arith.constant dense<0.000000e+00> : vector<2x8x8xf32>
    %270 = tpu.matmul %269, %253, %cst_53 {dimension_numbers = #tpu.dot_dimension_numbers<[2], [1], [1], [2], [0, 0, 0, 1, 1, 2], [0], [0]>} : vector<2x8x8xbf16>, vector<2x8x8xbf16>, vector<2x8x8xf32> -> vector<2x8x8xf32>
    "tpu.trace_stop"() : () -> ()
    %271 = tpu.concatenate %210, %230, %250, %270 in 2 : vector<2x8x8xf32>, vector<2x8x8xf32>, vector<2x8x8xf32>, vector<2x8x8xf32> -> vector<2x8x32xf32>
    %cst_54 = arith.constant dense<0.000000e+00> : vector<2x32xf32>
    %272 = vector.multi_reduction <add>, %271, %cst_54 [1] : vector<2x8x32xf32> to vector<2x32xf32>
    %c0_55 = arith.constant 0 : index
    %c0_56 = arith.constant 0 : index
    %c0_57 = arith.constant 0 : index
    %273 = vector.load %arg2[%c0_55, %c0_56, %c0_57] : memref<4x8x8xbf16, #tpu.memory_space<vmem>>, vector<4x8x8xbf16>
    %c0_58 = arith.constant 0 : index
    %c0_59 = arith.constant 0 : index
    %274 = vector.load %arg14[%c0_58, %c0_59] : memref<32x32xbf16, #tpu.memory_space<vmem>>, vector<32x32xbf16>
    %cst_60 = arith.constant dense<0.000000e+00> : vector<16x32xf32>
    %275 = tpu.matmul %2, %274, %cst_60 {dimension_numbers = #tpu.dot_dimension_numbers<[1], [0], [0], [1], [0, 0, 1, 1], [], []>} : vector<16x32xbf16>, vector<32x32xbf16>, vector<16x32xf32> -> vector<16x32xf32>
    %276 = vector.extract_strided_slice %275 {offsets = [0, 0], sizes = [16, 16], strides = [1, 1]} : vector<16x32xf32> to vector<16x16xf32>
    %277 = vector.extract_strided_slice %275 {offsets = [0, 16], sizes = [16, 16], strides = [1, 1]} : vector<16x32xf32> to vector<16x16xf32>
    %278 = tpu.concatenate %276, %277 in 0 : vector<16x16xf32>, vector<16x16xf32> -> vector<32x16xf32>
    %279 = vector.shape_cast %278 : vector<32x16xf32> to vector<4x8x16xf32>
    %280 = arith.truncf %279 : vector<4x8x16xf32> to vector<4x8x16xbf16>
    "tpu.trace_start"() <{level = 10 : i32, message = "zij,zjg->zig"}> : () -> ()
    %cst_61 = arith.constant dense<0.000000e+00> : vector<4x8x16xf32>
    %281 = tpu.matmul %273, %280, %cst_61 {dimension_numbers = #tpu.dot_dimension_numbers<[2], [1], [1], [2], [0, 0, 0, 1, 1, 2], [0], [0]>} : vector<4x8x8xbf16>, vector<4x8x16xbf16>, vector<4x8x16xf32> -> vector<4x8x16xf32>
    "tpu.trace_stop"() : () -> ()
    %c0_62 = arith.constant 0 : index
    %c0_63 = arith.constant 0 : index
    %c0_64 = arith.constant 0 : index
    %282 = vector.load %arg15[%c0_62, %c0_63, %c0_64] : memref<4x1x16xf32, #tpu.memory_space<vmem>>, vector<4x1x16xf32>
    %283 = vector.broadcast %282 : vector<4x1x16xf32> to vector<4x8x16xf32>
    %284 = arith.addf %281, %283 : vector<4x8x16xf32>
    %cst_65 = arith.constant 0.000000e+00 : f32
    %285 = vector.broadcast %cst_65 : f32 to vector<4x8x16xf32>
    %286 = arith.maximumf %284, %285 : vector<4x8x16xf32>
    %287 = vector.shape_cast %286 : vector<4x8x16xf32> to vector<32x16xf32>
    %288 = arith.truncf %287 : vector<32x16xf32> to vector<32x16xbf16>
    %289 = vector.extract_strided_slice %288 {offsets = [0, 0], sizes = [16, 16], strides = [1, 1]} : vector<32x16xbf16> to vector<16x16xbf16>
    %c0_66 = arith.constant 0 : index
    %c0_67 = arith.constant 0 : index
    %290 = vector.load %arg16[%c0_66, %c0_67] : memref<16x16xbf16, #tpu.memory_space<vmem>>, vector<16x16xbf16>
    %cst_68 = arith.constant dense<0.000000e+00> : vector<16x16xf32>
    %291 = tpu.matmul %289, %290, %cst_68 {dimension_numbers = #tpu.dot_dimension_numbers<[1], [0], [0], [1], [0, 0, 1, 1], [], []>} : vector<16x16xbf16>, vector<16x16xbf16>, vector<16x16xf32> -> vector<16x16xf32>
    %292 = vector.extract_strided_slice %288 {offsets = [16, 0], sizes = [16, 16], strides = [1, 1]} : vector<32x16xbf16> to vector<16x16xbf16>
    %c0_69 = arith.constant 0 : index
    %c0_70 = arith.constant 0 : index
    %293 = vector.load %arg17[%c0_69, %c0_70] : memref<16x16xbf16, #tpu.memory_space<vmem>>, vector<16x16xbf16>
    %cst_71 = arith.constant dense<0.000000e+00> : vector<16x16xf32>
    %294 = tpu.matmul %292, %293, %cst_71 {dimension_numbers = #tpu.dot_dimension_numbers<[1], [0], [0], [1], [0, 0, 1, 1], [], []>} : vector<16x16xbf16>, vector<16x16xbf16>, vector<16x16xf32> -> vector<16x16xf32>
    %295 = tpu.concatenate %291, %294 in 0 : vector<16x16xf32>, vector<16x16xf32> -> vector<32x16xf32>
    %296 = vector.shape_cast %295 : vector<32x16xf32> to vector<4x8x16xf32>
    %297 = arith.truncf %296 : vector<4x8x16xf32> to vector<4x8x16xbf16>
    "tpu.trace_start"() <{level = 10 : i32, message = "zij,zjg->zig"}> : () -> ()
    %cst_72 = arith.constant dense<0.000000e+00> : vector<4x8x16xf32>
    %298 = tpu.matmul %273, %297, %cst_72 {dimension_numbers = #tpu.dot_dimension_numbers<[2], [1], [1], [2], [0, 0, 0, 1, 1, 2], [0], [0]>} : vector<4x8x8xbf16>, vector<4x8x16xbf16>, vector<4x8x16xf32> -> vector<4x8x16xf32>
    "tpu.trace_stop"() : () -> ()
    %c0_73 = arith.constant 0 : index
    %c0_74 = arith.constant 0 : index
    %c0_75 = arith.constant 0 : index
    %299 = vector.load %arg18[%c0_73, %c0_74, %c0_75] : memref<4x1x16xf32, #tpu.memory_space<vmem>>, vector<4x1x16xf32>
    %300 = vector.broadcast %299 : vector<4x1x16xf32> to vector<4x8x16xf32>
    %301 = arith.addf %298, %300 : vector<4x8x16xf32>
    %cst_76 = arith.constant 0.000000e+00 : f32
    %302 = vector.broadcast %cst_76 : f32 to vector<4x8x16xf32>
    %303 = arith.maximumf %301, %302 : vector<4x8x16xf32>
    %304 = arith.truncf %272 : vector<2x32xf32> to vector<2x32xbf16>
    %c0_77 = arith.constant 0 : index
    %c0_78 = arith.constant 0 : index
    %305 = vector.load %arg8[%c0_77, %c0_78] : memref<32x16xbf16, #tpu.memory_space<vmem>>, vector<32x16xbf16>
    %cst_79 = arith.constant dense<0.000000e+00> : vector<2x16xf32>
    %306 = tpu.matmul %304, %305, %cst_79 {dimension_numbers = #tpu.dot_dimension_numbers<[1], [0], [0], [1], [0, 0, 1, 1], [], []>} : vector<2x32xbf16>, vector<32x16xbf16>, vector<2x16xf32> -> vector<2x16xf32>
    %c0_80 = arith.constant 0 : index
    %c0_81 = arith.constant 0 : index
    %307 = vector.load %arg9[%c0_80, %c0_81] : memref<1x16xf32, #tpu.memory_space<vmem>>, vector<1x16xf32>
    %308 = vector.broadcast %307 : vector<1x16xf32> to vector<2x16xf32>
    %309 = arith.addf %306, %308 : vector<2x16xf32>
    %310 = tpu.concatenate %309, %309 in 0 : vector<2x16xf32>, vector<2x16xf32> -> vector<4x16xf32>
    %311 = vector.shape_cast %310 : vector<4x16xf32> to vector<4x1x16xf32>
    %312 = vector.shape_cast %303 : vector<4x8x16xf32> to vector<32x16xf32>
    %313 = arith.truncf %312 : vector<32x16xf32> to vector<32x16xbf16>
    %c0_82 = arith.constant 0 : index
    %c0_83 = arith.constant 0 : index
    %314 = vector.load %arg10[%c0_82, %c0_83] : memref<16x16xbf16, #tpu.memory_space<vmem>>, vector<16x16xbf16>
    %cst_84 = arith.constant dense<0.000000e+00> : vector<32x16xf32>
    %315 = tpu.matmul %313, %314, %cst_84 {dimension_numbers = #tpu.dot_dimension_numbers<[1], [0], [0], [1], [0, 0, 1, 1], [], []>} : vector<32x16xbf16>, vector<16x16xbf16>, vector<32x16xf32> -> vector<32x16xf32>
    %c0_85 = arith.constant 0 : index
    %c0_86 = arith.constant 0 : index
    %316 = vector.load %arg11[%c0_85, %c0_86] : memref<1x16xf32, #tpu.memory_space<vmem>>, vector<1x16xf32>
    %317 = vector.broadcast %316 : vector<1x16xf32> to vector<32x16xf32>
    %318 = arith.addf %315, %317 : vector<32x16xf32>
    %319 = vector.shape_cast %318 : vector<32x16xf32> to vector<4x8x16xf32>
    %320 = vector.broadcast %311 : vector<4x1x16xf32> to vector<4x8x16xf32>
    %321 = arith.addf %320, %319 : vector<4x8x16xf32>
    %322 = math.tanh %321 : vector<4x8x16xf32>
    %323 = vector.shape_cast %322 : vector<4x8x16xf32> to vector<32x16xf32>
    %324 = arith.truncf %323 : vector<32x16xf32> to vector<32x16xbf16>
    %c0_87 = arith.constant 0 : index
    %c0_88 = arith.constant 0 : index
    %325 = vector.load %arg12[%c0_87, %c0_88] : memref<16x1xbf16, #tpu.memory_space<vmem>>, vector<16x1xbf16>
    %cst_89 = arith.constant dense<0.000000e+00> : vector<32x1xf32>
    %326 = tpu.matmul %324, %325, %cst_89 {dimension_numbers = #tpu.dot_dimension_numbers<[1], [0], [0], [1], [0, 0, 1, 1], [], []>} : vector<32x16xbf16>, vector<16x1xbf16>, vector<32x1xf32> -> vector<32x1xf32>
    %c0_90 = arith.constant 0 : index
    %c0_91 = arith.constant 0 : index
    %327 = vector.load %arg13[%c0_90, %c0_91] : memref<1x1xf32, #tpu.memory_space<vmem>>, vector<1x1xf32>
    %328 = vector.broadcast %327 : vector<1x1xf32> to vector<32x1xf32>
    %329 = arith.addf %326, %328 : vector<32x1xf32>
    %330 = vector.shape_cast %329 : vector<32x1xf32> to vector<4x8x1xf32>
    %cst_92 = arith.constant dense<0xFF800000> : vector<4x1xf32>
    %331 = vector.multi_reduction <maximumf>, %330, %cst_92 [1] : vector<4x8x1xf32> to vector<4x1xf32>
    %332 = vector.shape_cast %331 : vector<4x1xf32> to vector<4x1x1xf32>
    %333 = vector.broadcast %332 : vector<4x1x1xf32> to vector<4x8x1xf32>
    %334 = arith.subf %330, %333 : vector<4x8x1xf32>
    %335 = math.exp %334 : vector<4x8x1xf32>
    %cst_93 = arith.constant dense<0.000000e+00> : vector<4x1xf32>
    %336 = vector.multi_reduction <add>, %335, %cst_93 [1] : vector<4x8x1xf32> to vector<4x1xf32>
    %337 = vector.shape_cast %336 : vector<4x1xf32> to vector<4x1x1xf32>
    %338 = tpu.reciprocal %337 {approx = true} : vector<4x1x1xf32> -> vector<4x1x1xf32>
    %339 = vector.broadcast %338 : vector<4x1x1xf32> to vector<4x8x1xf32>
    %340 = arith.mulf %335, %339 : vector<4x8x1xf32>
    %341 = vector.broadcast %340 : vector<4x8x1xf32> to vector<4x8x16xf32>
    %342 = arith.mulf %341, %303 : vector<4x8x16xf32>
    %343 = vector.extract_strided_slice %342 {offsets = [0, 0, 0], sizes = [2, 8, 16], strides = [1, 1, 1]} : vector<4x8x16xf32> to vector<2x8x16xf32>
    %344 = vector.extract_strided_slice %342 {offsets = [2, 0, 0], sizes = [2, 8, 16], strides = [1, 1, 1]} : vector<4x8x16xf32> to vector<2x8x16xf32>
    %345 = tpu.concatenate %271, %343, %344 in 2 : vector<2x8x32xf32>, vector<2x8x16xf32>, vector<2x8x16xf32> -> vector<2x8x64xf32>
    %346 = vector.shape_cast %345 : vector<2x8x64xf32> to vector<16x64xf32>
    %347 = arith.truncf %346 : vector<16x64xf32> to vector<16x64xbf16>
    %c0_94 = arith.constant 0 : index
    %c0_95 = arith.constant 0 : index
    %348 = vector.load %arg19[%c0_94, %c0_95] : memref<64x128xbf16, #tpu.memory_space<vmem>>, vector<64x128xbf16>
    %cst_96 = arith.constant dense<0.000000e+00> : vector<16x128xf32>
    %349 = tpu.matmul %347, %348, %cst_96 {dimension_numbers = #tpu.dot_dimension_numbers<[1], [0], [0], [1], [0, 0, 1, 1], [], []>} : vector<16x64xbf16>, vector<64x128xbf16>, vector<16x128xf32> -> vector<16x128xf32>
    %c0_97 = arith.constant 0 : index
    %c0_98 = arith.constant 0 : index
    %350 = vector.load %arg21[%c0_97, %c0_98] : memref<1x128xf32, #tpu.memory_space<vmem>>, vector<1x128xf32>
    %351 = vector.broadcast %350 : vector<1x128xf32> to vector<16x128xf32>
    %352 = arith.addf %349, %351 : vector<16x128xf32>
    %353 = vector.shape_cast %352 : vector<16x128xf32> to vector<2x8x128xf32>
    %c0_99 = arith.constant 0 : index
    %c0_100 = arith.constant 0 : index
    %354 = vector.load %arg20[%c0_99, %c0_100] : memref<32x128xbf16, #tpu.memory_space<vmem>>, vector<32x128xbf16>
    %cst_101 = arith.constant 0.000000e+00 : f32
    %355 = vector.broadcast %cst_101 : f32 to vector<2x32xf32>
    %cst_102 = arith.constant 0.000000e+00 : f32
    %356 = vector.broadcast %cst_102 : f32 to vector<2x32xf32>
    %cst_103 = arith.constant 0xFF800000 : f32
    %357 = vector.broadcast %cst_103 : f32 to vector<2x32xf32>
    %358 = vector.extract_strided_slice %353 {offsets = [0, 0, 0], sizes = [2, 1, 128], strides = [1, 1, 1]} : vector<2x8x128xf32> to vector<2x1x128xf32>
    %359 = vector.shape_cast %358 : vector<2x1x128xf32> to vector<2x128xf32>
    %360 = arith.truncf %355 : vector<2x32xf32> to vector<2x32xbf16>
    %cst_104 = arith.constant dense<0.000000e+00> : vector<2x128xf32>
    %361 = tpu.matmul %360, %354, %cst_104 {dimension_numbers = #tpu.dot_dimension_numbers<[1], [0], [0], [1], [0, 0, 1, 1], [], []>} : vector<2x32xbf16>, vector<32x128xbf16>, vector<2x128xf32> -> vector<2x128xf32>
    %362 = arith.addf %359, %361 : vector<2x128xf32>
    %363 = arith.negf %362 : vector<2x128xf32>
    %364 = math.exp %363 : vector<2x128xf32>
    %cst_105 = arith.constant 1.000000e+00 : f32
    %365 = vector.broadcast %cst_105 : f32 to vector<2x128xf32>
    %366 = arith.addf %365, %364 : vector<2x128xf32>
    %367 = arith.divf %365, %366 : vector<2x128xf32>
    %368 = math.tanh %362 : vector<2x128xf32>
    %369 = vector.extract_strided_slice %367 {offsets = [0, 0], sizes = [2, 32], strides = [1, 1]} : vector<2x128xf32> to vector<2x32xf32>
    %370 = vector.extract_strided_slice %367 {offsets = [0, 32], sizes = [2, 32], strides = [1, 1]} : vector<2x128xf32> to vector<2x32xf32>
    %371 = vector.extract_strided_slice %367 {offsets = [0, 96], sizes = [2, 32], strides = [1, 1]} : vector<2x128xf32> to vector<2x32xf32>
    %372 = vector.extract_strided_slice %368 {offsets = [0, 64], sizes = [2, 32], strides = [1, 1]} : vector<2x128xf32> to vector<2x32xf32>
    %373 = arith.mulf %370, %356 : vector<2x32xf32>
    %374 = arith.mulf %369, %372 : vector<2x32xf32>
    %375 = arith.addf %373, %374 : vector<2x32xf32>
    %376 = math.tanh %375 : vector<2x32xf32>
    %377 = arith.mulf %371, %376 : vector<2x32xf32>
    %378 = arith.maximumf %357, %377 : vector<2x32xf32>
    %379 = vector.extract_strided_slice %353 {offsets = [0, 1, 0], sizes = [2, 1, 128], strides = [1, 1, 1]} : vector<2x8x128xf32> to vector<2x1x128xf32>
    %380 = vector.shape_cast %379 : vector<2x1x128xf32> to vector<2x128xf32>
    %381 = arith.truncf %377 : vector<2x32xf32> to vector<2x32xbf16>
    %cst_106 = arith.constant dense<0.000000e+00> : vector<2x128xf32>
    %382 = tpu.matmul %381, %354, %cst_106 {dimension_numbers = #tpu.dot_dimension_numbers<[1], [0], [0], [1], [0, 0, 1, 1], [], []>} : vector<2x32xbf16>, vector<32x128xbf16>, vector<2x128xf32> -> vector<2x128xf32>
    %383 = arith.addf %380, %382 : vector<2x128xf32>
    %384 = arith.negf %383 : vector<2x128xf32>
    %385 = math.exp %384 : vector<2x128xf32>
    %cst_107 = arith.constant 1.000000e+00 : f32
    %386 = vector.broadcast %cst_107 : f32 to vector<2x128xf32>
    %387 = arith.addf %386, %385 : vector<2x128xf32>
    %388 = arith.divf %386, %387 : vector<2x128xf32>
    %389 = math.tanh %383 : vector<2x128xf32>
    %390 = vector.extract_strided_slice %388 {offsets = [0, 0], sizes = [2, 32], strides = [1, 1]} : vector<2x128xf32> to vector<2x32xf32>
    %391 = vector.extract_strided_slice %388 {offsets = [0, 32], sizes = [2, 32], strides = [1, 1]} : vector<2x128xf32> to vector<2x32xf32>
    %392 = vector.extract_strided_slice %388 {offsets = [0, 96], sizes = [2, 32], strides = [1, 1]} : vector<2x128xf32> to vector<2x32xf32>
    %393 = vector.extract_strided_slice %389 {offsets = [0, 64], sizes = [2, 32], strides = [1, 1]} : vector<2x128xf32> to vector<2x32xf32>
    %394 = arith.mulf %391, %375 : vector<2x32xf32>
    %395 = arith.mulf %390, %393 : vector<2x32xf32>
    %396 = arith.addf %394, %395 : vector<2x32xf32>
    %397 = math.tanh %396 : vector<2x32xf32>
    %398 = arith.mulf %392, %397 : vector<2x32xf32>
    %399 = arith.maximumf %378, %398 : vector<2x32xf32>
    %400 = vector.extract_strided_slice %353 {offsets = [0, 2, 0], sizes = [2, 1, 128], strides = [1, 1, 1]} : vector<2x8x128xf32> to vector<2x1x128xf32>
    %401 = vector.shape_cast %400 : vector<2x1x128xf32> to vector<2x128xf32>
    %402 = arith.truncf %398 : vector<2x32xf32> to vector<2x32xbf16>
    %cst_108 = arith.constant dense<0.000000e+00> : vector<2x128xf32>
    %403 = tpu.matmul %402, %354, %cst_108 {dimension_numbers = #tpu.dot_dimension_numbers<[1], [0], [0], [1], [0, 0, 1, 1], [], []>} : vector<2x32xbf16>, vector<32x128xbf16>, vector<2x128xf32> -> vector<2x128xf32>
    %404 = arith.addf %401, %403 : vector<2x128xf32>
    %405 = arith.negf %404 : vector<2x128xf32>
    %406 = math.exp %405 : vector<2x128xf32>
    %cst_109 = arith.constant 1.000000e+00 : f32
    %407 = vector.broadcast %cst_109 : f32 to vector<2x128xf32>
    %408 = arith.addf %407, %406 : vector<2x128xf32>
    %409 = arith.divf %407, %408 : vector<2x128xf32>
    %410 = math.tanh %404 : vector<2x128xf32>
    %411 = vector.extract_strided_slice %409 {offsets = [0, 0], sizes = [2, 32], strides = [1, 1]} : vector<2x128xf32> to vector<2x32xf32>
    %412 = vector.extract_strided_slice %409 {offsets = [0, 32], sizes = [2, 32], strides = [1, 1]} : vector<2x128xf32> to vector<2x32xf32>
    %413 = vector.extract_strided_slice %409 {offsets = [0, 96], sizes = [2, 32], strides = [1, 1]} : vector<2x128xf32> to vector<2x32xf32>
    %414 = vector.extract_strided_slice %410 {offsets = [0, 64], sizes = [2, 32], strides = [1, 1]} : vector<2x128xf32> to vector<2x32xf32>
    %415 = arith.mulf %412, %396 : vector<2x32xf32>
    %416 = arith.mulf %411, %414 : vector<2x32xf32>
    %417 = arith.addf %415, %416 : vector<2x32xf32>
    %418 = math.tanh %417 : vector<2x32xf32>
    %419 = arith.mulf %413, %418 : vector<2x32xf32>
    %420 = arith.maximumf %399, %419 : vector<2x32xf32>
    %421 = vector.extract_strided_slice %353 {offsets = [0, 3, 0], sizes = [2, 1, 128], strides = [1, 1, 1]} : vector<2x8x128xf32> to vector<2x1x128xf32>
    %422 = vector.shape_cast %421 : vector<2x1x128xf32> to vector<2x128xf32>
    %423 = arith.truncf %419 : vector<2x32xf32> to vector<2x32xbf16>
    %cst_110 = arith.constant dense<0.000000e+00> : vector<2x128xf32>
    %424 = tpu.matmul %423, %354, %cst_110 {dimension_numbers = #tpu.dot_dimension_numbers<[1], [0], [0], [1], [0, 0, 1, 1], [], []>} : vector<2x32xbf16>, vector<32x128xbf16>, vector<2x128xf32> -> vector<2x128xf32>
    %425 = arith.addf %422, %424 : vector<2x128xf32>
    %426 = arith.negf %425 : vector<2x128xf32>
    %427 = math.exp %426 : vector<2x128xf32>
    %cst_111 = arith.constant 1.000000e+00 : f32
    %428 = vector.broadcast %cst_111 : f32 to vector<2x128xf32>
    %429 = arith.addf %428, %427 : vector<2x128xf32>
    %430 = arith.divf %428, %429 : vector<2x128xf32>
    %431 = math.tanh %425 : vector<2x128xf32>
    %432 = vector.extract_strided_slice %430 {offsets = [0, 0], sizes = [2, 32], strides = [1, 1]} : vector<2x128xf32> to vector<2x32xf32>
    %433 = vector.extract_strided_slice %430 {offsets = [0, 32], sizes = [2, 32], strides = [1, 1]} : vector<2x128xf32> to vector<2x32xf32>
    %434 = vector.extract_strided_slice %430 {offsets = [0, 96], sizes = [2, 32], strides = [1, 1]} : vector<2x128xf32> to vector<2x32xf32>
    %435 = vector.extract_strided_slice %431 {offsets = [0, 64], sizes = [2, 32], strides = [1, 1]} : vector<2x128xf32> to vector<2x32xf32>
    %436 = arith.mulf %433, %417 : vector<2x32xf32>
    %437 = arith.mulf %432, %435 : vector<2x32xf32>
    %438 = arith.addf %436, %437 : vector<2x32xf32>
    %439 = math.tanh %438 : vector<2x32xf32>
    %440 = arith.mulf %434, %439 : vector<2x32xf32>
    %441 = arith.maximumf %420, %440 : vector<2x32xf32>
    %442 = vector.extract_strided_slice %353 {offsets = [0, 4, 0], sizes = [2, 1, 128], strides = [1, 1, 1]} : vector<2x8x128xf32> to vector<2x1x128xf32>
    %443 = vector.shape_cast %442 : vector<2x1x128xf32> to vector<2x128xf32>
    %444 = arith.truncf %440 : vector<2x32xf32> to vector<2x32xbf16>
    %cst_112 = arith.constant dense<0.000000e+00> : vector<2x128xf32>
    %445 = tpu.matmul %444, %354, %cst_112 {dimension_numbers = #tpu.dot_dimension_numbers<[1], [0], [0], [1], [0, 0, 1, 1], [], []>} : vector<2x32xbf16>, vector<32x128xbf16>, vector<2x128xf32> -> vector<2x128xf32>
    %446 = arith.addf %443, %445 : vector<2x128xf32>
    %447 = arith.negf %446 : vector<2x128xf32>
    %448 = math.exp %447 : vector<2x128xf32>
    %cst_113 = arith.constant 1.000000e+00 : f32
    %449 = vector.broadcast %cst_113 : f32 to vector<2x128xf32>
    %450 = arith.addf %449, %448 : vector<2x128xf32>
    %451 = arith.divf %449, %450 : vector<2x128xf32>
    %452 = math.tanh %446 : vector<2x128xf32>
    %453 = vector.extract_strided_slice %451 {offsets = [0, 0], sizes = [2, 32], strides = [1, 1]} : vector<2x128xf32> to vector<2x32xf32>
    %454 = vector.extract_strided_slice %451 {offsets = [0, 32], sizes = [2, 32], strides = [1, 1]} : vector<2x128xf32> to vector<2x32xf32>
    %455 = vector.extract_strided_slice %451 {offsets = [0, 96], sizes = [2, 32], strides = [1, 1]} : vector<2x128xf32> to vector<2x32xf32>
    %456 = vector.extract_strided_slice %452 {offsets = [0, 64], sizes = [2, 32], strides = [1, 1]} : vector<2x128xf32> to vector<2x32xf32>
    %457 = arith.mulf %454, %438 : vector<2x32xf32>
    %458 = arith.mulf %453, %456 : vector<2x32xf32>
    %459 = arith.addf %457, %458 : vector<2x32xf32>
    %460 = math.tanh %459 : vector<2x32xf32>
    %461 = arith.mulf %455, %460 : vector<2x32xf32>
    %462 = arith.maximumf %441, %461 : vector<2x32xf32>
    %463 = vector.extract_strided_slice %353 {offsets = [0, 5, 0], sizes = [2, 1, 128], strides = [1, 1, 1]} : vector<2x8x128xf32> to vector<2x1x128xf32>
    %464 = vector.shape_cast %463 : vector<2x1x128xf32> to vector<2x128xf32>
    %465 = arith.truncf %461 : vector<2x32xf32> to vector<2x32xbf16>
    %cst_114 = arith.constant dense<0.000000e+00> : vector<2x128xf32>
    %466 = tpu.matmul %465, %354, %cst_114 {dimension_numbers = #tpu.dot_dimension_numbers<[1], [0], [0], [1], [0, 0, 1, 1], [], []>} : vector<2x32xbf16>, vector<32x128xbf16>, vector<2x128xf32> -> vector<2x128xf32>
    %467 = arith.addf %464, %466 : vector<2x128xf32>
    %468 = arith.negf %467 : vector<2x128xf32>
    %469 = math.exp %468 : vector<2x128xf32>
    %cst_115 = arith.constant 1.000000e+00 : f32
    %470 = vector.broadcast %cst_115 : f32 to vector<2x128xf32>
    %471 = arith.addf %470, %469 : vector<2x128xf32>
    %472 = arith.divf %470, %471 : vector<2x128xf32>
    %473 = math.tanh %467 : vector<2x128xf32>
    %474 = vector.extract_strided_slice %472 {offsets = [0, 0], sizes = [2, 32], strides = [1, 1]} : vector<2x128xf32> to vector<2x32xf32>
    %475 = vector.extract_strided_slice %472 {offsets = [0, 32], sizes = [2, 32], strides = [1, 1]} : vector<2x128xf32> to vector<2x32xf32>
    %476 = vector.extract_strided_slice %472 {offsets = [0, 96], sizes = [2, 32], strides = [1, 1]} : vector<2x128xf32> to vector<2x32xf32>
    %477 = vector.extract_strided_slice %473 {offsets = [0, 64], sizes = [2, 32], strides = [1, 1]} : vector<2x128xf32> to vector<2x32xf32>
    %478 = arith.mulf %475, %459 : vector<2x32xf32>
    %479 = arith.mulf %474, %477 : vector<2x32xf32>
    %480 = arith.addf %478, %479 : vector<2x32xf32>
    %481 = math.tanh %480 : vector<2x32xf32>
    %482 = arith.mulf %476, %481 : vector<2x32xf32>
    %483 = arith.maximumf %462, %482 : vector<2x32xf32>
    %484 = vector.extract_strided_slice %353 {offsets = [0, 6, 0], sizes = [2, 1, 128], strides = [1, 1, 1]} : vector<2x8x128xf32> to vector<2x1x128xf32>
    %485 = vector.shape_cast %484 : vector<2x1x128xf32> to vector<2x128xf32>
    %486 = arith.truncf %482 : vector<2x32xf32> to vector<2x32xbf16>
    %cst_116 = arith.constant dense<0.000000e+00> : vector<2x128xf32>
    %487 = tpu.matmul %486, %354, %cst_116 {dimension_numbers = #tpu.dot_dimension_numbers<[1], [0], [0], [1], [0, 0, 1, 1], [], []>} : vector<2x32xbf16>, vector<32x128xbf16>, vector<2x128xf32> -> vector<2x128xf32>
    %488 = arith.addf %485, %487 : vector<2x128xf32>
    %489 = arith.negf %488 : vector<2x128xf32>
    %490 = math.exp %489 : vector<2x128xf32>
    %cst_117 = arith.constant 1.000000e+00 : f32
    %491 = vector.broadcast %cst_117 : f32 to vector<2x128xf32>
    %492 = arith.addf %491, %490 : vector<2x128xf32>
    %493 = arith.divf %491, %492 : vector<2x128xf32>
    %494 = math.tanh %488 : vector<2x128xf32>
    %495 = vector.extract_strided_slice %493 {offsets = [0, 0], sizes = [2, 32], strides = [1, 1]} : vector<2x128xf32> to vector<2x32xf32>
    %496 = vector.extract_strided_slice %493 {offsets = [0, 32], sizes = [2, 32], strides = [1, 1]} : vector<2x128xf32> to vector<2x32xf32>
    %497 = vector.extract_strided_slice %493 {offsets = [0, 96], sizes = [2, 32], strides = [1, 1]} : vector<2x128xf32> to vector<2x32xf32>
    %498 = vector.extract_strided_slice %494 {offsets = [0, 64], sizes = [2, 32], strides = [1, 1]} : vector<2x128xf32> to vector<2x32xf32>
    %499 = arith.mulf %496, %480 : vector<2x32xf32>
    %500 = arith.mulf %495, %498 : vector<2x32xf32>
    %501 = arith.addf %499, %500 : vector<2x32xf32>
    %502 = math.tanh %501 : vector<2x32xf32>
    %503 = arith.mulf %497, %502 : vector<2x32xf32>
    %504 = arith.maximumf %483, %503 : vector<2x32xf32>
    %505 = vector.extract_strided_slice %353 {offsets = [0, 7, 0], sizes = [2, 1, 128], strides = [1, 1, 1]} : vector<2x8x128xf32> to vector<2x1x128xf32>
    %506 = vector.shape_cast %505 : vector<2x1x128xf32> to vector<2x128xf32>
    %507 = arith.truncf %503 : vector<2x32xf32> to vector<2x32xbf16>
    %cst_118 = arith.constant dense<0.000000e+00> : vector<2x128xf32>
    %508 = tpu.matmul %507, %354, %cst_118 {dimension_numbers = #tpu.dot_dimension_numbers<[1], [0], [0], [1], [0, 0, 1, 1], [], []>} : vector<2x32xbf16>, vector<32x128xbf16>, vector<2x128xf32> -> vector<2x128xf32>
    %509 = arith.addf %506, %508 : vector<2x128xf32>
    %510 = arith.negf %509 : vector<2x128xf32>
    %511 = math.exp %510 : vector<2x128xf32>
    %cst_119 = arith.constant 1.000000e+00 : f32
    %512 = vector.broadcast %cst_119 : f32 to vector<2x128xf32>
    %513 = arith.addf %512, %511 : vector<2x128xf32>
    %514 = arith.divf %512, %513 : vector<2x128xf32>
    %515 = math.tanh %509 : vector<2x128xf32>
    %516 = vector.extract_strided_slice %514 {offsets = [0, 0], sizes = [2, 32], strides = [1, 1]} : vector<2x128xf32> to vector<2x32xf32>
    %517 = vector.extract_strided_slice %514 {offsets = [0, 32], sizes = [2, 32], strides = [1, 1]} : vector<2x128xf32> to vector<2x32xf32>
    %518 = vector.extract_strided_slice %514 {offsets = [0, 96], sizes = [2, 32], strides = [1, 1]} : vector<2x128xf32> to vector<2x32xf32>
    %519 = vector.extract_strided_slice %515 {offsets = [0, 64], sizes = [2, 32], strides = [1, 1]} : vector<2x128xf32> to vector<2x32xf32>
    %520 = arith.mulf %517, %501 : vector<2x32xf32>
    %521 = arith.mulf %516, %519 : vector<2x32xf32>
    %522 = arith.addf %520, %521 : vector<2x32xf32>
    %523 = math.tanh %522 : vector<2x32xf32>
    %524 = arith.mulf %518, %523 : vector<2x32xf32>
    %525 = arith.maximumf %504, %524 : vector<2x32xf32>
    %526 = arith.truncf %525 : vector<2x32xf32> to vector<2x32xbf16>
    %c0_120 = arith.constant 0 : index
    %c0_121 = arith.constant 0 : index
    %527 = vector.load %arg22[%c0_120, %c0_121] : memref<32x1xbf16, #tpu.memory_space<vmem>>, vector<32x1xbf16>
    %cst_122 = arith.constant dense<0.000000e+00> : vector<2x1xf32>
    %528 = tpu.matmul %526, %527, %cst_122 {dimension_numbers = #tpu.dot_dimension_numbers<[1], [0], [0], [1], [0, 0, 1, 1], [], []>} : vector<2x32xbf16>, vector<32x1xbf16>, vector<2x1xf32> -> vector<2x1xf32>
    %c0_123 = arith.constant 0 : index
    %c0_124 = arith.constant 0 : index
    %529 = vector.load %arg23[%c0_123, %c0_124] : memref<1x1xf32, #tpu.memory_space<vmem>>, vector<1x1xf32>
    %530 = vector.broadcast %529 : vector<1x1xf32> to vector<2x1xf32>
    %531 = arith.addf %528, %530 : vector<2x1xf32>
    %532 = arith.negf %531 : vector<2x1xf32>
    %533 = math.exp %532 : vector<2x1xf32>
    %cst_125 = arith.constant 1.000000e+00 : f32
    %534 = vector.broadcast %cst_125 : f32 to vector<2x1xf32>
    %535 = arith.addf %534, %533 : vector<2x1xf32>
    %536 = arith.divf %534, %535 : vector<2x1xf32>
    %c0_126 = arith.constant 0 : index
    %c0_127 = arith.constant 0 : index
    %537 = vector.load %arg24[%c0_126, %c0_127] : memref<2x1xf32, #tpu.memory_space<vmem>>, vector<2x1xf32>
    tpu.vector_store %arg24[%c0_126, %c0_127], %536 {strides = array<i32>} : memref<2x1xf32, #tpu.memory_space<vmem>>, vector<2x1xf32>,
    return
  }
}

</mosaic_0001>

<llo_original>
// kernel: tpu_custom_call.1
$region0: #{tpu_custom_call.1}
  #allocation0 [shape = 'u32[]', space=smem, size = 0x4, offset = 0x4, fixed_abs, tag = 'smem constant byte address 0x4 - core index']
  #allocation1 [shape = 'u32[144,128]{1,0:T(1,128)}', space=vmem, size = 0x12000, scoped, tag = 'internal scratch']
  #allocation2 [shape = 'f32[1,1]{1,0:T(1,128)S(1)}', space=vmem, size = 0x200, scoped, tag = 'scoped memory for tpu_custom_call.1']
  #allocation3 [shape = 'f32[1,1]{1,0:T(1,128)S(1)}', space=vmem, size = 0x200, scoped, tag = 'scoped memory for tpu_custom_call.1']
  %s0 = inlined_call_operand.vmem [shape: f32[2,8,32], index: 0, kind: input, shape index: {}]
  %s1 = inlined_call_operand.hbm [shape: f32[2,1,8], index: 1, kind: input, shape index: {}]
  %s2 = inlined_call_operand.vmem [shape: bf16[4,8,8], index: 2, kind: input, shape index: {}]
  %s3 = inlined_call_operand.hbm [shape: bf16[32,128], index: 3, kind: input, shape index: {}]
  %s4 = inlined_call_operand.hbm [shape: bf16[32,128], index: 4, kind: input, shape index: {}]
  %s5 = inlined_call_operand.hbm [shape: f32[1,128], index: 5, kind: input, shape index: {}]
  %s6 = inlined_call_operand.vmem [shape: bf16[32,96], index: 6, kind: input, shape index: {}]
  %s7 = inlined_call_operand.vmem [shape: f32[1,96], index: 7, kind: input, shape index: {}]
  %s8 = inlined_call_operand.vmem [shape: bf16[32,16], index: 8, kind: input, shape index: {}]
  %s9 = inlined_call_operand.vmem [shape: f32[1,16], index: 9, kind: input, shape index: {}]
  %s10 = inlined_call_operand.hbm [shape: bf16[16,16], index: 10, kind: input, shape index: {}]
  %s11 = inlined_call_operand.hbm [shape: f32[1,16], index: 11, kind: input, shape index: {}]
  %s12 = inlined_call_operand.vmem [shape: bf16[16,1], index: 12, kind: input, shape index: {}]
  %s13 = inlined_call_operand.<no memory space> [shape: f32[1,1], index: 13, kind: input, shape index: {}]
  %s14 = inlined_call_operand.vmem [shape: bf16[32,32], index: 14, kind: input, shape index: {}]
  %s15 = inlined_call_operand.hbm [shape: f32[4,1,16], index: 15, kind: input, shape index: {}]
  %s16 = inlined_call_operand.hbm [shape: bf16[16,16], index: 16, kind: input, shape index: {}]
  %s17 = inlined_call_operand.hbm [shape: bf16[16,16], index: 17, kind: input, shape index: {}]
  %s18 = inlined_call_operand.vmem [shape: f32[4,1,16], index: 18, kind: input, shape index: {}]
  %s19 = inlined_call_operand.vmem [shape: bf16[64,128], index: 19, kind: input, shape index: {}]
  %s20 = inlined_call_operand.vmem [shape: bf16[32,128], index: 20, kind: input, shape index: {}]
  %s21 = inlined_call_operand.vmem [shape: f32[1,128], index: 21, kind: input, shape index: {}]
  %s22 = inlined_call_operand.vmem [shape: bf16[32,1], index: 22, kind: input, shape index: {}]
  %s23 = inlined_call_operand.<no memory space> [shape: f32[1,1], index: 23, kind: input, shape index: {}]
  %s24 = inlined_call_operand.vmem [shape: f32[2,1], index: 24, kind: output, shape index: {}]
  %s25 = sld [smem:[#allocation0]]
  $region142: #{tpu_custom_call.1} parent=0
    _
  %s27 = ssub.s32 1, %s25
  %s28 = scalar_select 0, %s27, %s25
  %v29 = vstv %s13
  %30 = vst [vmem:[#allocation2] sm:$0x1] %v29
  %v31 = vstv %s23
  %32 = vst [vmem:[#allocation3] sm:$0x1] %v31
  $region1: #{tpu_custom_call.1} parent=0
    #allocation4 [shape = 'u8[1024]{0}', space=vmem, size = 0x400, scoped, tag = 'input window, operand 1, single buffered']
    #allocation5 [shape = 's32[1]{0}', space=sflag, size = 0x4, scoped, tag = 'scoped memory for tpu_custom_call.1']
    #allocation6 [shape = 'u8[8192]{0}', space=vmem, size = 0x2000, scoped, tag = 'input window, operand 3, single buffered']
    #allocation7 [shape = 's32[1]{0}', space=sflag, size = 0x4, scoped, tag = 'scoped memory for tpu_custom_call.1']
    #allocation8 [shape = 'u8[8192]{0}', space=vmem, size = 0x2000, scoped, tag = 'input window, operand 4, single buffered']
    #allocation9 [shape = 'u8[512]{0}', space=vmem, size = 0x400, scoped, tag = 'input window, operand 5, single buffered']
    #allocation10 [shape = 's32[1]{0}', space=sflag, size = 0x4, scoped, tag = 'scoped memory for tpu_custom_call.1']
    #allocation11 [shape = 'u8[4096]{0}', space=vmem, size = 0x1000, scoped, tag = 'input window, operand 10, single buffered']
    #allocation12 [shape = 'u8[512]{0}', space=vmem, size = 0x400, scoped, tag = 'input window, operand 11, single buffered']
    #allocation13 [shape = 's32[1]{0}', space=sflag, size = 0x4, scoped, tag = 'scoped memory for tpu_custom_call.1']
    #allocation14 [shape = 'u8[2048]{0}', space=vmem, size = 0x800, scoped, tag = 'input window, operand 15, single buffered']
    #allocation15 [shape = 'u8[4096]{0}', space=vmem, size = 0x1000, scoped, tag = 'input window, operand 16, single buffered']
    #allocation16 [shape = 's32[1]{0}', space=sflag, size = 0x4, scoped, tag = 'scoped memory for tpu_custom_call.1']
    #allocation17 [shape = 'u8[4096]{0}', space=vmem, size = 0x1000, scoped, tag = 'input window, operand 17, single buffered']
    %33 = vsyncpa [#allocation5], 0
    %34 = vsyncpa [#allocation7], 0
    %35 = vsyncpa [#allocation10], 0
    %36 = vsyncpa [#allocation13], 0
    %37 = vsyncpa [#allocation16], 0
    // Predicated region
    $region2: #{tpu_custom_call.1} parent=1 // pred_check
      _
    $region3: #{tpu_custom_call.1} parent=1 // pred_check_branch
      %39 = sbr.rel (0) target = $region5
    $region4: #{tpu_custom_call.1} parent=1 // pred_region
      _
    $region5: #{tpu_custom_call.1} parent=1 // pred_fallthru
      _
    // Predicated region
    $region6: #{tpu_custom_call.1} parent=1 // pred_check
      _
    $region7: #{tpu_custom_call.1} parent=1 // pred_check_branch
      %41 = sbr.rel (0) target = $region9
    $region8: #{tpu_custom_call.1} parent=1 // pred_region
      %s43 = ssub.s32 32, 32
      %44 = vsyncadd [#allocation5], %s43
      %s45 = sshll.u32 [#allocation4], 4
      %s46 = int_to_ptr.vmem [resolvable:$true] %s45
      %51 = dma.hbm_to_vmem [thread:$0]  %s1, 32, %s46, [#allocation5], 16, 16, 1
    $region9: #{tpu_custom_call.1} parent=1 // pred_fallthru
      _
    // Predicated region
    $region10: #{tpu_custom_call.1} parent=1 // pred_check
      _
    $region11: #{tpu_custom_call.1} parent=1 // pred_check_branch
      %53 = sbr.rel (0) target = $region13
    $region12: #{tpu_custom_call.1} parent=1 // pred_region
      _
    $region13: #{tpu_custom_call.1} parent=1 // pred_fallthru
      _
    // Predicated region
    $region14: #{tpu_custom_call.1} parent=1 // pred_check
      _
    $region15: #{tpu_custom_call.1} parent=1 // pred_check_branch
      %55 = sbr.rel (0) target = $region17
    $region16: #{tpu_custom_call.1} parent=1 // pred_region
      %s57 = ssub.s32 256, 256
      %58 = vsyncadd [#allocation7], %s57
      %s59 = sshll.u32 [#allocation6], 4
      %s60 = int_to_ptr.vmem [resolvable:$true] %s59
      %65 = dma.hbm_to_vmem [thread:$0]  %s3, 256, %s60, [#allocation7], 64, 64, 4
    $region17: #{tpu_custom_call.1} parent=1 // pred_fallthru
      _
    // Predicated region
    $region18: #{tpu_custom_call.1} parent=1 // pred_check
      _
    $region19: #{tpu_custom_call.1} parent=1 // pred_check_branch
      %67 = sbr.rel (0) target = $region21
    $region20: #{tpu_custom_call.1} parent=1 // pred_region
      %s69 = ssub.s32 256, 256
      %70 = vsyncadd [#allocation7], %s69
      %s71 = sshll.u32 [#allocation8], 4
      %s72 = int_to_ptr.vmem [resolvable:$true] %s71
      %77 = dma.hbm_to_vmem [thread:$0]  %s4, 256, %s72, [#allocation7], 64, 64, 4
    $region21: #{tpu_custom_call.1} parent=1 // pred_fallthru
      _
    // Predicated region
    $region22: #{tpu_custom_call.1} parent=1 // pred_check
      _
    $region23: #{tpu_custom_call.1} parent=1 // pred_check_branch
      %79 = sbr.rel (0) target = $region25
    $region24: #{tpu_custom_call.1} parent=1 // pred_region
      %s81 = ssub.s32 16, 16
      %82 = vsyncadd [#allocation10], %s81
      %s84 = sshll.u32 [#allocation9], 4
      %s85 = int_to_ptr.vmem [resolvable:$true] %s84
      %87 = dma.hbm_to_vmem [thread:$0]  %s5, 16, %s85, [#allocation10]
    $region25: #{tpu_custom_call.1} parent=1 // pred_fallthru
      _
    // Predicated region
    $region26: #{tpu_custom_call.1} parent=1 // pred_check
      _
    $region27: #{tpu_custom_call.1} parent=1 // pred_check_branch
      %89 = sbr.rel (0) target = $region29
    $region28: #{tpu_custom_call.1} parent=1 // pred_region
      _
    $region29: #{tpu_custom_call.1} parent=1 // pred_fallthru
      _
    // Predicated region
    $region30: #{tpu_custom_call.1} parent=1 // pred_check
      _
    $region31: #{tpu_custom_call.1} parent=1 // pred_check_branch
      %91 = sbr.rel (0) target = $region33
    $region32: #{tpu_custom_call.1} parent=1 // pred_region
      _
    $region33: #{tpu_custom_call.1} parent=1 // pred_fallthru
      _
    // Predicated region
    $region34: #{tpu_custom_call.1} parent=1 // pred_check
      _
    $region35: #{tpu_custom_call.1} parent=1 // pred_check_branch
      %93 = sbr.rel (0) target = $region37
    $region36: #{tpu_custom_call.1} parent=1 // pred_region
      _
    $region37: #{tpu_custom_call.1} parent=1 // pred_fallthru
      _
    // Predicated region
    $region38: #{tpu_custom_call.1} parent=1 // pred_check
      _
    $region39: #{tpu_custom_call.1} parent=1 // pred_check_branch
      %95 = sbr.rel (0) target = $region41
    $region40: #{tpu_custom_call.1} parent=1 // pred_region
      _
    $region41: #{tpu_custom_call.1} parent=1 // pred_fallthru
      _
    // Predicated region
    $region42: #{tpu_custom_call.1} parent=1 // pred_check
      _
    $region43: #{tpu_custom_call.1} parent=1 // pred_check_branch
      %97 = sbr.rel (0) target = $region45
    $region44: #{tpu_custom_call.1} parent=1 // pred_region
      %s99 = ssub.s32 128, 128
      %100 = vsyncadd [#allocation10], %s99
      %s101 = sshll.u32 [#allocation11], 4
      %s102 = int_to_ptr.vmem [resolvable:$true] %s101
      %107 = dma.hbm_to_vmem [thread:$0]  %s10, 128, %s102, [#allocation10], 64, 64, 4
    $region45: #{tpu_custom_call.1} parent=1 // pred_fallthru
      _
    // Predicated region
    $region46: #{tpu_custom_call.1} parent=1 // pred_check
      _
    $region47: #{tpu_custom_call.1} parent=1 // pred_check_branch
      %109 = sbr.rel (0) target = $region49
    $region48: #{tpu_custom_call.1} parent=1 // pred_region
      %s111 = ssub.s32 16, 16
      %112 = vsyncadd [#allocation13], %s111
      %s114 = sshll.u32 [#allocation12], 4
      %s115 = int_to_ptr.vmem [resolvable:$true] %s114
      %117 = dma.hbm_to_vmem [thread:$0]  %s11, 16, %s115, [#allocation13]
    $region49: #{tpu_custom_call.1} parent=1 // pred_fallthru
      _
    // Predicated region
    $region50: #{tpu_custom_call.1} parent=1 // pred_check
      _
    $region51: #{tpu_custom_call.1} parent=1 // pred_check_branch
      %119 = sbr.rel (0) target = $region53
    $region52: #{tpu_custom_call.1} parent=1 // pred_region
      _
    $region53: #{tpu_custom_call.1} parent=1 // pred_fallthru
      _
    // Predicated region
    $region54: #{tpu_custom_call.1} parent=1 // pred_check
      _
    $region55: #{tpu_custom_call.1} parent=1 // pred_check_branch
      %121 = sbr.rel (0) target = $region57
    $region56: #{tpu_custom_call.1} parent=1 // pred_region
      _
    $region57: #{tpu_custom_call.1} parent=1 // pred_fallthru
      _
    // Predicated region
    $region58: #{tpu_custom_call.1} parent=1 // pred_check
      _
    $region59: #{tpu_custom_call.1} parent=1 // pred_check_branch
      %123 = sbr.rel (0) target = $region61
    $region60: #{tpu_custom_call.1} parent=1 // pred_region
      _
    $region61: #{tpu_custom_call.1} parent=1 // pred_fallthru
      _
    // Predicated region
    $region62: #{tpu_custom_call.1} parent=1 // pred_check
      _
    $region63: #{tpu_custom_call.1} parent=1 // pred_check_branch
      %125 = sbr.rel (0) target = $region65
    $region64: #{tpu_custom_call.1} parent=1 // pred_region
      %s127 = ssub.s32 64, 64
      %128 = vsyncadd [#allocation13], %s127
      %s129 = sshll.u32 [#allocation14], 4
      %s130 = int_to_ptr.vmem [resolvable:$true] %s129
      %135 = dma.hbm_to_vmem [thread:$0]  %s15, 64, %s130, [#allocation13], 16, 16, 1
    $region65: #{tpu_custom_call.1} parent=1 // pred_fallthru
      _
    // Predicated region
    $region66: #{tpu_custom_call.1} parent=1 // pred_check
      _
    $region67: #{tpu_custom_call.1} parent=1 // pred_check_branch
      %137 = sbr.rel (0) target = $region69
    $region68: #{tpu_custom_call.1} parent=1 // pred_region
      %s139 = ssub.s32 128, 128
      %140 = vsyncadd [#allocation16], %s139
      %s141 = sshll.u32 [#allocation15], 4
      %s142 = int_to_ptr.vmem [resolvable:$true] %s141
      %147 = dma.hbm_to_vmem [thread:$0]  %s16, 128, %s142, [#allocation16], 64, 64, 4
    $region69: #{tpu_custom_call.1} parent=1 // pred_fallthru
      _
    // Predicated region
    $region70: #{tpu_custom_call.1} parent=1 // pred_check
      _
    $region71: #{tpu_custom_call.1} parent=1 // pred_check_branch
      %149 = sbr.rel (0) target = $region73
    $region72: #{tpu_custom_call.1} parent=1 // pred_region
      %s151 = ssub.s32 128, 128
      %152 = vsyncadd [#allocation16], %s151
      %s153 = sshll.u32 [#allocation17], 4
      %s154 = int_to_ptr.vmem [resolvable:$true] %s153
      %159 = dma.hbm_to_vmem [thread:$0]  %s17, 128, %s154, [#allocation16], 64, 64, 4
    $region73: #{tpu_custom_call.1} parent=1 // pred_fallthru
      _
    // Predicated region
    $region74: #{tpu_custom_call.1} parent=1 // pred_check
      _
    $region75: #{tpu_custom_call.1} parent=1 // pred_check_branch
      %161 = sbr.rel (0) target = $region77
    $region76: #{tpu_custom_call.1} parent=1 // pred_region
      _
    $region77: #{tpu_custom_call.1} parent=1 // pred_fallthru
      _
    // Predicated region
    $region78: #{tpu_custom_call.1} parent=1 // pred_check
      _
    $region79: #{tpu_custom_call.1} parent=1 // pred_check_branch
      %163 = sbr.rel (0) target = $region81
    $region80: #{tpu_custom_call.1} parent=1 // pred_region
      _
    $region81: #{tpu_custom_call.1} parent=1 // pred_fallthru
      _
    // Predicated region
    $region82: #{tpu_custom_call.1} parent=1 // pred_check
      _
    $region83: #{tpu_custom_call.1} parent=1 // pred_check_branch
      %165 = sbr.rel (0) target = $region85
    $region84: #{tpu_custom_call.1} parent=1 // pred_region
      _
    $region85: #{tpu_custom_call.1} parent=1 // pred_fallthru
      _
    // Predicated region
    $region86: #{tpu_custom_call.1} parent=1 // pred_check
      _
    $region87: #{tpu_custom_call.1} parent=1 // pred_check_branch
      %167 = sbr.rel (0) target = $region89
    $region88: #{tpu_custom_call.1} parent=1 // pred_region
      _
    $region89: #{tpu_custom_call.1} parent=1 // pred_fallthru
      _
    // Predicated region
    $region90: #{tpu_custom_call.1} parent=1 // pred_check
      _
    $region91: #{tpu_custom_call.1} parent=1 // pred_check_branch
      %169 = sbr.rel (0) target = $region93
    $region92: #{tpu_custom_call.1} parent=1 // pred_region
      _
    $region93: #{tpu_custom_call.1} parent=1 // pred_fallthru
      _
    // Predicated region
    $region94: #{tpu_custom_call.1} parent=1 // pred_check
      _
    $region95: #{tpu_custom_call.1} parent=1 // pred_check_branch
      %171 = sbr.rel (0) target = $region97
    $region96: #{tpu_custom_call.1} parent=1 // pred_region
      _
    $region97: #{tpu_custom_call.1} parent=1 // pred_fallthru
      _
    // Predicated region
    $region98: #{tpu_custom_call.1} parent=1 // pred_check
      _
    $region99: #{tpu_custom_call.1} parent=1 // pred_check_branch
      %173 = sbr.rel (0) target = $region101
    $region100: #{tpu_custom_call.1} parent=1 // pred_region
      %174 = dma.done [#allocation5], 32
    $region101: #{tpu_custom_call.1} parent=1 // pred_fallthru
      _
    // Predicated region
    $region102: #{tpu_custom_call.1} parent=1 // pred_check
      _
    $region103: #{tpu_custom_call.1} parent=1 // pred_check_branch
      %176 = sbr.rel (0) target = $region105
    $region104: #{tpu_custom_call.1} parent=1 // pred_region
      %177 = dma.done [#allocation7], 256
    $region105: #{tpu_custom_call.1} parent=1 // pred_fallthru
      _
    // Predicated region
    $region106: #{tpu_custom_call.1} parent=1 // pred_check
      _
    $region107: #{tpu_custom_call.1} parent=1 // pred_check_branch
      %179 = sbr.rel (0) target = $region109
    $region108: #{tpu_custom_call.1} parent=1 // pred_region
      %180 = dma.done [#allocation7], 256
    $region109: #{tpu_custom_call.1} parent=1 // pred_fallthru
      _
    // Predicated region
    $region110: #{tpu_custom_call.1} parent=1 // pred_check
      _
    $region111: #{tpu_custom_call.1} parent=1 // pred_check_branch
      %182 = sbr.rel (0) target = $region113
    $region112: #{tpu_custom_call.1} parent=1 // pred_region
      %183 = dma.done [#allocation10], 16
    $region113: #{tpu_custom_call.1} parent=1 // pred_fallthru
      _
    // Predicated region
    $region114: #{tpu_custom_call.1} parent=1 // pred_check
      _
    $region115: #{tpu_custom_call.1} parent=1 // pred_check_branch
      %185 = sbr.rel (0) target = $region117
    $region116: #{tpu_custom_call.1} parent=1 // pred_region
      %186 = dma.done [#allocation10], 128
    $region117: #{tpu_custom_call.1} parent=1 // pred_fallthru
      _
    // Predicated region
    $region118: #{tpu_custom_call.1} parent=1 // pred_check
      _
    $region119: #{tpu_custom_call.1} parent=1 // pred_check_branch
      %188 = sbr.rel (0) target = $region121
    $region120: #{tpu_custom_call.1} parent=1 // pred_region
      %189 = dma.done [#allocation13], 16
    $region121: #{tpu_custom_call.1} parent=1 // pred_fallthru
      _
    // Predicated region
    $region122: #{tpu_custom_call.1} parent=1 // pred_check
      _
    $region123: #{tpu_custom_call.1} parent=1 // pred_check_branch
      %191 = sbr.rel (0) target = $region125
    $region124: #{tpu_custom_call.1} parent=1 // pred_region
      %192 = dma.done [#allocation13], 64
    $region125: #{tpu_custom_call.1} parent=1 // pred_fallthru
      _
    // Predicated region
    $region126: #{tpu_custom_call.1} parent=1 // pred_check
      _
    $region127: #{tpu_custom_call.1} parent=1 // pred_check_branch
      %194 = sbr.rel (0) target = $region129
    $region128: #{tpu_custom_call.1} parent=1 // pred_region
      %195 = dma.done [#allocation16], 128
    $region129: #{tpu_custom_call.1} parent=1 // pred_fallthru
      _
    // Predicated region
    $region130: #{tpu_custom_call.1} parent=1 // pred_check
      _
    $region131: #{tpu_custom_call.1} parent=1 // pred_check_branch
      %197 = sbr.rel (0) target = $region133
    $region132: #{tpu_custom_call.1} parent=1 // pred_region
      %198 = dma.done [#allocation16], 128
    $region133: #{tpu_custom_call.1} parent=1 // pred_fallthru
      _
    %v200 = vld [vmem:[%s0] sm:$0xff]
    %v201 = vld [vmem:[%s0 + $0x8] sm:$0xff]
    %v202 = vpack.c.bf16 %v201, %v200
    %v203 = vld [vmem:[#allocation6] sm:$0xf]
    %v204 = vld [vmem:[#allocation6 + $0x4] sm:$0xf]
    %v205 = vld [vmem:[#allocation6 + $0x8] sm:$0xf]
    %v206 = vld [vmem:[#allocation6 + $0xc] sm:$0xf]
    %v207 = vld [vmem:[#allocation9] sm:$0x1]
    %v209 = vlaneseq
    %v210 = vshrl.u32 %v209, 7
    %v211 = vsub.s32 0, %v210
    %v212 = vrot.slane %v207, %v211
    %v218 = vunpack.c.l.b16 %v203
    %v219 = vunpack.c.l.b16 %v204
    %v220 = vunpack.c.l.b16 %v205
    %v221 = vunpack.c.l.b16 %v206
    %v222 = vpack.c.b16 %v219, %v218
    %v223 = vpack.c.b16 %v221, %v220
    %vm226 = vcmask 261120
    %v228 = vsel %vm226, %v202, 0
    %230 = vmatprep.subr.bf16.mxu0 0
    %231 = vmatpush1.bf16.msra.mxu0 %v222
    %232 = vmatprep.subr.bf16.mxu0 0
    %233 = vmatpush1.bf16.msra.mxu0 %v223
    %234 = vmatprep.subr.bf16.mxu0 0
    %235 = vmatpush1.bf16.msra.mxu0 0
    %236 = vmatprep.subr.bf16.mxu0 0
    %237 = vmatpush1.bf16.msra.mxu0 0
    %238 = vmatprep.subr.bf16.mxu0 0
    %239 = vmatpush1.bf16.msra.mxu0 0
    %240 = vmatprep.subr.bf16.mxu0 0
    %241 = vmatpush1.bf16.msra.mxu0 0
    %242 = vmatprep.subr.bf16.mxu0 0
    %243 = vmatpush1.bf16.msra.mxu0 0
    %244 = vmatprep.subr.bf16.mxu0 0
    %245 = vmatpush1.bf16.msra.mxu0 0
    %246 = vmatprep.subr.bf16.mxu0 0
    %247 = vmatpush1.bf16.msra.mxu0 0
    %248 = vmatprep.subr.bf16.mxu0 0
    %249 = vmatpush1.bf16.msra.mxu0 0
    %250 = vmatprep.subr.bf16.mxu0 0
    %251 = vmatpush1.bf16.msra.mxu0 0
    %252 = vmatprep.subr.bf16.mxu0 0
    %253 = vmatpush1.bf16.msra.mxu0 0
    %254 = vmatprep.subr.bf16.mxu0 0
    %255 = vmatpush1.bf16.msra.mxu0 0
    %256 = vmatprep.subr.bf16.mxu0 0
    %257 = vmatpush1.bf16.msra.mxu0 0
    %258 = vmatprep.subr.bf16.mxu0 0
    %259 = vmatpush1.bf16.msra.mxu0 0
    %260 = vmatprep.subr.bf16.mxu0 0
    %261 = vmatpush1.bf16.msra.mxu0 0
    %262 = vmatprep.mubr.bf16.mxu0 0
    %263 = vmatmul.mubr.bf16.gmra.mrb[0].mxu0 %v228
    %v264 = vpop.f32.mrb[0].mxu0
    %v265 = vadd.f32 %v212, %v264
    %v266 = vpop.f32.mrb[0].mxu0
    %v267 = vpop.f32.mrb[0].mxu0
    %v268 = vadd.f32 %v212, %v267
    %v269 = vpop.f32.mrb[0].mxu0
    %270 = vdwg.mxu0
    %v271 = vld [vmem:[#allocation8] sm:$0xf]
    %v272 = vld [vmem:[#allocation8 + $0x4] sm:$0xf]
    %v273 = vld [vmem:[#allocation8 + $0x8] sm:$0xf]
    %v274 = vld [vmem:[#allocation8 + $0xc] sm:$0xf]
    %v279 = vunpack.c.l.b16 %v271
    %v280 = vunpack.c.l.b16 %v272
    %v281 = vunpack.c.l.b16 %v273
    %v282 = vunpack.c.l.b16 %v274
    %v283 = vpack.c.b16 %v280, %v279
    %v284 = vpack.c.b16 %v282, %v281
    %v288 = vsel %vm226, 0, 0
    %290 = vmatprep.subr.bf16.mxu0 0
    %291 = vmatpush1.bf16.msra.mxu0 %v283
    %292 = vmatprep.subr.bf16.mxu0 0
    %293 = vmatpush1.bf16.msra.mxu0 %v284
    %294 = vmatprep.subr.bf16.mxu0 0
    %295 = vmatpush1.bf16.msra.mxu0 0
    %296 = vmatprep.subr.bf16.mxu0 0
    %297 = vmatpush1.bf16.msra.mxu0 0
    %298 = vmatprep.subr.bf16.mxu0 0
    %299 = vmatpush1.bf16.msra.mxu0 0
    %300 = vmatprep.subr.bf16.mxu0 0
    %301 = vmatpush1.bf16.msra.mxu0 0
    %302 = vmatprep.subr.bf16.mxu0 0
    %303 = vmatpush1.bf16.msra.mxu0 0
    %304 = vmatprep.subr.bf16.mxu0 0
    %305 = vmatpush1.bf16.msra.mxu0 0
    %306 = vmatprep.subr.bf16.mxu0 0
    %307 = vmatpush1.bf16.msra.mxu0 0
    %308 = vmatprep.subr.bf16.mxu0 0
    %309 = vmatpush1.bf16.msra.mxu0 0
    %310 = vmatprep.subr.bf16.mxu0 0
    %311 = vmatpush1.bf16.msra.mxu0 0
    %312 = vmatprep.subr.bf16.mxu0 0
    %313 = vmatpush1.bf16.msra.mxu0 0
    %314 = vmatprep.subr.bf16.mxu0 0
    %315 = vmatpush1.bf16.msra.mxu0 0
    %316 = vmatprep.subr.bf16.mxu0 0
    %317 = vmatpush1.bf16.msra.mxu0 0
    %318 = vmatprep.subr.bf16.mxu0 0
    %319 = vmatpush1.bf16.msra.mxu0 0
    %320 = vmatprep.subr.bf16.mxu0 0
    %321 = vmatpush1.bf16.msra.mxu0 0
    %322 = vmatprep.mubr.bf16.mxu0 0
    %323 = vmatmul.mubr.bf16.gmra.mrb[0].mxu0 %v288
    %v324 = vpop.f32.mrb[0].mxu0
    %v325 = vadd.f32 0.0, %v324
    %v326 = vpop.f32.mrb[0].mxu0
    %v327 = vpop.f32.mrb[0].mxu0
    %v328 = vpop.f32.mrb[0].mxu0
    %329 = vdwg.mxu0
    %v331 = vrot.slane %v325, 1
    %v334 = vadd.f32 %v265, %v325
    %v335 = vadd.f32 %v268, %v331
    %v336 = vxor.u32 %v334, 2147483648
    %v337 = vxor.u32 %v335, 2147483648
    %v338 = vmul.f32 %v336, 1.442695
    %v339 = vpow.pop %v338
    %v340 = vmul.f32 %v337, 1.442695
    %v341 = vpow.pop %v340
    %v342 = vadd.f32 %v339, 1.0
    %v343 = vadd.f32 %v341, 1.0
    %v344 = vrcp.pop %v342
    %v345 = vmul.f32 1.0, %v344
    %v346 = vrcp.pop %v343
    %v347 = vmul.f32 1.0, %v346
    %v348 = vtanh.pop %v334
    %v349 = vtanh.pop %v335
    %v350 = vmul.f32 %v345, 0.0
    %v351 = vmul.f32 %v347, 0.0
    %354 = vrot.lane.b32.xlu0 %v348, 64
    %v355 = vpop.permute.xlu0 %354
    %356 = vrot.lane.b32.xlu0 %v349, 64
    %v357 = vpop.permute.xlu0 %356
    %v360 = vmul.f32 %v345, %v355
    %v361 = vmul.f32 %v347, %v357
    %364 = vrot.lane.b32.xlu0 %v360, 32
    %v365 = vpop.permute.xlu0 %364
    %366 = vrot.lane.b32.xlu0 %v361, 32
    %v367 = vpop.permute.xlu0 %366
    %v370 = vadd.f32 %v350, %v365
    %v371 = vadd.f32 %v351, %v367
    %v372 = vtanh.pop %v370
    %v373 = vtanh.pop %v371
    %376 = vrot.lane.b32.xlu0 %v372, 64
    %v377 = vpop.permute.xlu0 %376
    %378 = vrot.lane.b32.xlu0 %v373, 64
    %v379 = vpop.permute.xlu0 %378
    %v382 = vmul.f32 %v345, %v377
    %v383 = vmul.f32 %v347, %v379
    %v384 = vpack.c.bf16 %v382, %v382
    %v385 = vpack.c.bf16 %v383, %v383
    %v388 = vunpack.c.l.b16 %v384
    %v389 = vunpack.c.l.b16 %v385
    %v390 = vrot.slane %v389, 7
    %vm391 = vcmask 1041409
    %v392 = vsel %vm391, %v390, %v388
    %v393 = vpack.c.b16 %v392, %v392
    %394 = vrot.lane.b32.xlu0 %v393, 32
    %v395 = vpop.permute.xlu0 %394
    %v397 = vsel %vm226, %v395, 0
    %399 = vmatprep.subr.bf16.mxu0 0
    %400 = vmatpush1.bf16.msra.mxu0 %v283
    %401 = vmatprep.subr.bf16.mxu0 0
    %402 = vmatpush1.bf16.msra.mxu0 %v284
    %403 = vmatprep.subr.bf16.mxu0 0
    %404 = vmatpush1.bf16.msra.mxu0 0
    %405 = vmatprep.subr.bf16.mxu0 0
    %406 = vmatpush1.bf16.msra.mxu0 0
    %407 = vmatprep.subr.bf16.mxu0 0
    %408 = vmatpush1.bf16.msra.mxu0 0
    %409 = vmatprep.subr.bf16.mxu0 0
    %410 = vmatpush1.bf16.msra.mxu0 0
    %411 = vmatprep.subr.bf16.mxu0 0
    %412 = vmatpush1.bf16.msra.mxu0 0
    %413 = vmatprep.subr.bf16.mxu0 0
    %414 = vmatpush1.bf16.msra.mxu0 0
    %415 = vmatprep.subr.bf16.mxu0 0
    %416 = vmatpush1.bf16.msra.mxu0 0
    %417 = vmatprep.subr.bf16.mxu0 0
    %418 = vmatpush1.bf16.msra.mxu0 0
    %419 = vmatprep.subr.bf16.mxu0 0
    %420 = vmatpush1.bf16.msra.mxu0 0
    %421 = vmatprep.subr.bf16.mxu0 0
    %422 = vmatpush1.bf16.msra.mxu0 0
    %423 = vmatprep.subr.bf16.mxu0 0
    %424 = vmatpush1.bf16.msra.mxu0 0
    %425 = vmatprep.subr.bf16.mxu0 0
    %426 = vmatpush1.bf16.msra.mxu0 0
    %427 = vmatprep.subr.bf16.mxu0 0
    %428 = vmatpush1.bf16.msra.mxu0 0
    %429 = vmatprep.subr.bf16.mxu0 0
    %430 = vmatpush1.bf16.msra.mxu0 0
    %431 = vmatprep.mubr.bf16.mxu0 0
    %432 = vmatmul.mubr.bf16.gmra.mrb[0].mxu0 %v397
    %v433 = vpop.f32.mrb[0].mxu0
    %v434 = vadd.f32 0.0, %v433
    %v435 = vpop.f32.mrb[0].mxu0
    %v436 = vpop.f32.mrb[0].mxu0
    %v437 = vpop.f32.mrb[0].mxu0
    %438 = vdwg.mxu0
    %v440 = vrot.slane %v434, 7
    %v443 = vadd.f32 %v265, %v440
    %v444 = vadd.f32 %v268, %v434
    %v445 = vxor.u32 %v443, 2147483648
    %v446 = vxor.u32 %v444, 2147483648
    %v447 = vmul.f32 %v445, 1.442695
    %v448 = vpow.pop %v447
    %v449 = vmul.f32 %v446, 1.442695
    %v450 = vpow.pop %v449
    %v451 = vadd.f32 %v448, 1.0
    %v452 = vadd.f32 %v450, 1.0
    %v453 = vrcp.pop %v451
    %v454 = vmul.f32 1.0, %v453
    %v455 = vrcp.pop %v452
    %v456 = vmul.f32 1.0, %v455
    %v457 = vtanh.pop %v443
    %v458 = vtanh.pop %v444
    %v461 = vrot.slane %v370, 7
    %v462 = vrot.slane %v371, 7
    %v465 = vmul.f32 %v454, %v461
    %v466 = vmul.f32 %v456, %v462
    %469 = vrot.lane.b32.xlu0 %v457, 64
    %v470 = vpop.permute.xlu0 %469
    %471 = vrot.lane.b32.xlu0 %v458, 64
    %v472 = vpop.permute.xlu0 %471
    %v475 = vmul.f32 %v454, %v470
    %v476 = vmul.f32 %v456, %v472
    %479 = vrot.lane.b32.xlu0 %v475, 32
    %v480 = vpop.permute.xlu0 %479
    %481 = vrot.lane.b32.xlu0 %v476, 32
    %v482 = vpop.permute.xlu0 %481
    %v485 = vadd.f32 %v465, %v480
    %v486 = vadd.f32 %v466, %v482
    %v487 = vtanh.pop %v485
    %v488 = vtanh.pop %v486
    %491 = vrot.lane.b32.xlu0 %v487, 64
    %v492 = vpop.permute.xlu0 %491
    %493 = vrot.lane.b32.xlu0 %v488, 64
    %v494 = vpop.permute.xlu0 %493
    %v497 = vmul.f32 %v454, %v492
    %v498 = vmul.f32 %v456, %v494
    %v499 = vpack.c.bf16 %v497, %v497
    %v500 = vpack.c.bf16 %v498, %v498
    %v503 = vunpack.c.l.b16 %v499
    %v504 = vunpack.c.l.b16 %v500
    %v505 = vrot.slane %v503, 1
    %v506 = vsel %vm391, %v504, %v505
    %v507 = vpack.c.b16 %v506, %v506
    %508 = vrot.lane.b32.xlu0 %v507, 32
    %v509 = vpop.permute.xlu0 %508
    %v511 = vsel %vm226, %v509, 0
    %513 = vmatprep.subr.bf16.mxu0 0
    %514 = vmatpush1.bf16.msra.mxu0 %v283
    %515 = vmatprep.subr.bf16.mxu0 0
    %516 = vmatpush1.bf16.msra.mxu0 %v284
    %517 = vmatprep.subr.bf16.mxu0 0
    %518 = vmatpush1.bf16.msra.mxu0 0
    %519 = vmatprep.subr.bf16.mxu0 0
    %520 = vmatpush1.bf16.msra.mxu0 0
    %521 = vmatprep.subr.bf16.mxu0 0
    %522 = vmatpush1.bf16.msra.mxu0 0
    %523 = vmatprep.subr.bf16.mxu0 0
    %524 = vmatpush1.bf16.msra.mxu0 0
    %525 = vmatprep.subr.bf16.mxu0 0
    %526 = vmatpush1.bf16.msra.mxu0 0
    %527 = vmatprep.subr.bf16.mxu0 0
    %528 = vmatpush1.bf16.msra.mxu0 0
    %529 = vmatprep.subr.bf16.mxu0 0
    %530 = vmatpush1.bf16.msra.mxu0 0
    %531 = vmatprep.subr.bf16.mxu0 0
    %532 = vmatpush1.bf16.msra.mxu0 0
    %533 = vmatprep.subr.bf16.mxu0 0
    %534 = vmatpush1.bf16.msra.mxu0 0
    %535 = vmatprep.subr.bf16.mxu0 0
    %536 = vmatpush1.bf16.msra.mxu0 0
    %537 = vmatprep.subr.bf16.mxu0 0
    %538 = vmatpush1.bf16.msra.mxu0 0
    %539 = vmatprep.subr.bf16.mxu0 0
    %540 = vmatpush1.bf16.msra.mxu0 0
    %541 = vmatprep.subr.bf16.mxu0 0
    %542 = vmatpush1.bf16.msra.mxu0 0
    %543 = vmatprep.subr.bf16.mxu0 0
    %544 = vmatpush1.bf16.msra.mxu0 0
    %545 = vmatprep.mubr.bf16.mxu0 0
    %546 = vmatmul.mubr.bf16.gmra.mrb[0].mxu0 %v511
    %v547 = vpop.f32.mrb[0].mxu0
    %v548 = vadd.f32 0.0, %v547
    %v549 = vpop.f32.mrb[0].mxu0
    %v550 = vpop.f32.mrb[0].mxu0
    %v551 = vpop.f32.mrb[0].mxu0
    %552 = vdwg.mxu0
    %v554 = vrot.slane %v548, 6
    %v555 = vrot.slane %v548, 7
    %v558 = vadd.f32 %v265, %v554
    %v559 = vadd.f32 %v268, %v555
    %v560 = vxor.u32 %v558, 2147483648
    %v561 = vxor.u32 %v559, 2147483648
    %v562 = vmul.f32 %v560, 1.442695
    %v563 = vpow.pop %v562
    %v564 = vmul.f32 %v561, 1.442695
    %v565 = vpow.pop %v564
    %v566 = vadd.f32 %v563, 1.0
    %v567 = vadd.f32 %v565, 1.0
    %v568 = vrcp.pop %v566
    %v569 = vmul.f32 1.0, %v568
    %v570 = vrcp.pop %v567
    %v571 = vmul.f32 1.0, %v570
    %v572 = vtanh.pop %v558
    %v573 = vtanh.pop %v559
    %v576 = vrot.slane %v485, 7
    %v577 = vrot.slane %v486, 7
    %v580 = vmul.f32 %v569, %v576
    %v581 = vmul.f32 %v571, %v577
    %584 = vrot.lane.b32.xlu0 %v572, 64
    %v585 = vpop.permute.xlu0 %584
    %586 = vrot.lane.b32.xlu0 %v573, 64
    %v587 = vpop.permute.xlu0 %586
    %v590 = vmul.f32 %v569, %v585
    %v591 = vmul.f32 %v571, %v587
    %594 = vrot.lane.b32.xlu0 %v590, 32
    %v595 = vpop.permute.xlu0 %594
    %596 = vrot.lane.b32.xlu0 %v591, 32
    %v597 = vpop.permute.xlu0 %596
    %v600 = vadd.f32 %v580, %v595
    %v601 = vadd.f32 %v581, %v597
    %v602 = vtanh.pop %v600
    %v603 = vtanh.pop %v601
    %606 = vrot.lane.b32.xlu0 %v602, 64
    %v607 = vpop.permute.xlu0 %606
    %608 = vrot.lane.b32.xlu0 %v603, 64
    %v609 = vpop.permute.xlu0 %608
    %v612 = vmul.f32 %v569, %v607
    %v613 = vmul.f32 %v571, %v609
    %v614 = vpack.c.bf16 %v612, %v612
    %v615 = vpack.c.bf16 %v613, %v613
    %v618 = vunpack.c.l.b16 %v614
    %v619 = vunpack.c.l.b16 %v615
    %v620 = vrot.slane %v618, 2
    %v621 = vrot.slane %v619, 1
    %v622 = vsel %vm391, %v621, %v620
    %v623 = vpack.c.b16 %v622, %v622
    %624 = vrot.lane.b32.xlu0 %v623, 32
    %v625 = vpop.permute.xlu0 %624
    %v627 = vsel %vm226, %v625, 0
    %629 = vmatprep.subr.bf16.mxu0 0
    %630 = vmatpush1.bf16.msra.mxu0 %v283
    %631 = vmatprep.subr.bf16.mxu0 0
    %632 = vmatpush1.bf16.msra.mxu0 %v284
    %633 = vmatprep.subr.bf16.mxu0 0
    %634 = vmatpush1.bf16.msra.mxu0 0
    %635 = vmatprep.subr.bf16.mxu0 0
    %636 = vmatpush1.bf16.msra.mxu0 0
    %637 = vmatprep.subr.bf16.mxu0 0
    %638 = vmatpush1.bf16.msra.mxu0 0
    %639 = vmatprep.subr.bf16.mxu0 0
    %640 = vmatpush1.bf16.msra.mxu0 0
    %641 = vmatprep.subr.bf16.mxu0 0
    %642 = vmatpush1.bf16.msra.mxu0 0
    %643 = vmatprep.subr.bf16.mxu0 0
    %644 = vmatpush1.bf16.msra.mxu0 0
    %645 = vmatprep.subr.bf16.mxu0 0
    %646 = vmatpush1.bf16.msra.mxu0 0
    %647 = vmatprep.subr.bf16.mxu0 0
    %648 = vmatpush1.bf16.msra.mxu0 0
    %649 = vmatprep.subr.bf16.mxu0 0
    %650 = vmatpush1.bf16.msra.mxu0 0
    %651 = vmatprep.subr.bf16.mxu0 0
    %652 = vmatpush1.bf16.msra.mxu0 0
    %653 = vmatprep.subr.bf16.mxu0 0
    %654 = vmatpush1.bf16.msra.mxu0 0
    %655 = vmatprep.subr.bf16.mxu0 0
    %656 = vmatpush1.bf16.msra.mxu0 0
    %657 = vmatprep.subr.bf16.mxu0 0
    %658 = vmatpush1.bf16.msra.mxu0 0
    %659 = vmatprep.subr.bf16.mxu0 0
    %660 = vmatpush1.bf16.msra.mxu0 0
    %661 = vmatprep.mubr.bf16.mxu0 0
    %662 = vmatmul.mubr.bf16.gmra.mrb[0].mxu0 %v627
    %v663 = vpop.f32.mrb[0].mxu0
    %v664 = vadd.f32 0.0, %v663
    %v665 = vpop.f32.mrb[0].mxu0
    %v666 = vpop.f32.mrb[0].mxu0
    %v667 = vpop.f32.mrb[0].mxu0
    %668 = vdwg.mxu0
    %v670 = vrot.slane %v664, 5
    %v671 = vrot.slane %v664, 6
    %v674 = vadd.f32 %v265, %v670
    %v675 = vadd.f32 %v268, %v671
    %v676 = vxor.u32 %v674, 2147483648
    %v677 = vxor.u32 %v675, 2147483648
    %v678 = vmul.f32 %v676, 1.442695
    %v679 = vpow.pop %v678
    %v680 = vmul.f32 %v677, 1.442695
    %v681 = vpow.pop %v680
    %v682 = vadd.f32 %v679, 1.0
    %v683 = vadd.f32 %v681, 1.0
    %v684 = vrcp.pop %v682
    %v685 = vmul.f32 1.0, %v684
    %v686 = vrcp.pop %v683
    %v687 = vmul.f32 1.0, %v686
    %v688 = vtanh.pop %v674
    %v689 = vtanh.pop %v675
    %v692 = vrot.slane %v600, 7
    %v693 = vrot.slane %v601, 7
    %v696 = vmul.f32 %v685, %v692
    %v697 = vmul.f32 %v687, %v693
    %700 = vrot.lane.b32.xlu0 %v688, 64
    %v701 = vpop.permute.xlu0 %700
    %702 = vrot.lane.b32.xlu0 %v689, 64
    %v703 = vpop.permute.xlu0 %702
    %v706 = vmul.f32 %v685, %v701
    %v707 = vmul.f32 %v687, %v703
    %710 = vrot.lane.b32.xlu0 %v706, 32
    %v711 = vpop.permute.xlu0 %710
    %712 = vrot.lane.b32.xlu0 %v707, 32
    %v713 = vpop.permute.xlu0 %712
    %v716 = vadd.f32 %v696, %v711
    %v717 = vadd.f32 %v697, %v713
    %v718 = vtanh.pop %v716
    %v719 = vtanh.pop %v717
    %722 = vrot.lane.b32.xlu0 %v718, 64
    %v723 = vpop.permute.xlu0 %722
    %724 = vrot.lane.b32.xlu0 %v719, 64
    %v725 = vpop.permute.xlu0 %724
    %v728 = vmul.f32 %v685, %v723
    %v729 = vmul.f32 %v687, %v725
    %v730 = vpack.c.bf16 %v728, %v728
    %v731 = vpack.c.bf16 %v729, %v729
    %v734 = vunpack.c.l.b16 %v730
    %v735 = vunpack.c.l.b16 %v731
    %v736 = vrot.slane %v734, 3
    %v737 = vrot.slane %v735, 2
    %v738 = vsel %vm391, %v737, %v736
    %v739 = vpack.c.b16 %v738, %v738
    %740 = vrot.lane.b32.xlu0 %v739, 32
    %v741 = vpop.permute.xlu0 %740
    %v743 = vsel %vm226, %v741, 0
    %745 = vmatprep.subr.bf16.mxu0 0
    %746 = vmatpush1.bf16.msra.mxu0 %v283
    %747 = vmatprep.subr.bf16.mxu0 0
    %748 = vmatpush1.bf16.msra.mxu0 %v284
    %749 = vmatprep.subr.bf16.mxu0 0
    %750 = vmatpush1.bf16.msra.mxu0 0
    %751 = vmatprep.subr.bf16.mxu0 0
    %752 = vmatpush1.bf16.msra.mxu0 0
    %753 = vmatprep.subr.bf16.mxu0 0
    %754 = vmatpush1.bf16.msra.mxu0 0
    %755 = vmatprep.subr.bf16.mxu0 0
    %756 = vmatpush1.bf16.msra.mxu0 0
    %757 = vmatprep.subr.bf16.mxu0 0
    %758 = vmatpush1.bf16.msra.mxu0 0
    %759 = vmatprep.subr.bf16.mxu0 0
    %760 = vmatpush1.bf16.msra.mxu0 0
    %761 = vmatprep.subr.bf16.mxu0 0
    %762 = vmatpush1.bf16.msra.mxu0 0
    %763 = vmatprep.subr.bf16.mxu0 0
    %764 = vmatpush1.bf16.msra.mxu0 0
    %765 = vmatprep.subr.bf16.mxu0 0
    %766 = vmatpush1.bf16.msra.mxu0 0
    %767 = vmatprep.subr.bf16.mxu0 0
    %768 = vmatpush1.bf16.msra.mxu0 0
    %769 = vmatprep.subr.bf16.mxu0 0
    %770 = vmatpush1.bf16.msra.mxu0 0
    %771 = vmatprep.subr.bf16.mxu0 0
    %772 = vmatpush1.bf16.msra.mxu0 0
    %773 = vmatprep.subr.bf16.mxu0 0
    %774 = vmatpush1.bf16.msra.mxu0 0
    %775 = vmatprep.subr.bf16.mxu0 0
    %776 = vmatpush1.bf16.msra.mxu0 0
    %777 = vmatprep.mubr.bf16.mxu0 0
    %778 = vmatmul.mubr.bf16.gmra.mrb[0].mxu0 %v743
    %v779 = vpop.f32.mrb[0].mxu0
    %v780 = vadd.f32 0.0, %v779
    %v781 = vpop.f32.mrb[0].mxu0
    %v782 = vpop.f32.mrb[0].mxu0
    %v783 = vpop.f32.mrb[0].mxu0
    %784 = vdwg.mxu0
    %v786 = vrot.slane %v780, 4
    %v787 = vrot.slane %v780, 5
    %v790 = vadd.f32 %v265, %v786
    %v791 = vadd.f32 %v268, %v787
    %v792 = vxor.u32 %v790, 2147483648
    %v793 = vxor.u32 %v791, 2147483648
    %v794 = vmul.f32 %v792, 1.442695
    %v795 = vpow.pop %v794
    %v796 = vmul.f32 %v793, 1.442695
    %v797 = vpow.pop %v796
    %v798 = vadd.f32 %v795, 1.0
    %v799 = vadd.f32 %v797, 1.0
    %v800 = vrcp.pop %v798
    %v801 = vmul.f32 1.0, %v800
    %v802 = vrcp.pop %v799
    %v803 = vmul.f32 1.0, %v802
    %v804 = vtanh.pop %v790
    %v805 = vtanh.pop %v791
    %v808 = vrot.slane %v716, 7
    %v809 = vrot.slane %v717, 7
    %v812 = vmul.f32 %v801, %v808
    %v813 = vmul.f32 %v803, %v809
    %816 = vrot.lane.b32.xlu0 %v804, 64
    %v817 = vpop.permute.xlu0 %816
    %818 = vrot.lane.b32.xlu0 %v805, 64
    %v819 = vpop.permute.xlu0 %818
    %v822 = vmul.f32 %v801, %v817
    %v823 = vmul.f32 %v803, %v819
    %826 = vrot.lane.b32.xlu0 %v822, 32
    %v827 = vpop.permute.xlu0 %826
    %828 = vrot.lane.b32.xlu0 %v823, 32
    %v829 = vpop.permute.xlu0 %828
    %v832 = vadd.f32 %v812, %v827
    %v833 = vadd.f32 %v813, %v829
    %v834 = vtanh.pop %v832
    %v835 = vtanh.pop %v833
    %838 = vrot.lane.b32.xlu0 %v834, 64
    %v839 = vpop.permute.xlu0 %838
    %840 = vrot.lane.b32.xlu0 %v835, 64
    %v841 = vpop.permute.xlu0 %840
    %v844 = vmul.f32 %v801, %v839
    %v845 = vmul.f32 %v803, %v841
    %v846 = vpack.c.bf16 %v844, %v844
    %v847 = vpack.c.bf16 %v845, %v845
    %v850 = vunpack.c.l.b16 %v846
    %v851 = vunpack.c.l.b16 %v847
    %v852 = vrot.slane %v850, 4
    %v853 = vrot.slane %v851, 3
    %v854 = vsel %vm391, %v853, %v852
    %v855 = vpack.c.b16 %v854, %v854
    %856 = vrot.lane.b32.xlu0 %v855, 32
    %v857 = vpop.permute.xlu0 %856
    %v859 = vsel %vm226, %v857, 0
    %861 = vmatprep.subr.bf16.mxu0 0
    %862 = vmatpush1.bf16.msra.mxu0 %v283
    %863 = vmatprep.subr.bf16.mxu0 0
    %864 = vmatpush1.bf16.msra.mxu0 %v284
    %865 = vmatprep.subr.bf16.mxu0 0
    %866 = vmatpush1.bf16.msra.mxu0 0
    %867 = vmatprep.subr.bf16.mxu0 0
    %868 = vmatpush1.bf16.msra.mxu0 0
    %869 = vmatprep.subr.bf16.mxu0 0
    %870 = vmatpush1.bf16.msra.mxu0 0
    %871 = vmatprep.subr.bf16.mxu0 0
    %872 = vmatpush1.bf16.msra.mxu0 0
    %873 = vmatprep.subr.bf16.mxu0 0
    %874 = vmatpush1.bf16.msra.mxu0 0
    %875 = vmatprep.subr.bf16.mxu0 0
    %876 = vmatpush1.bf16.msra.mxu0 0
    %877 = vmatprep.subr.bf16.mxu0 0
    %878 = vmatpush1.bf16.msra.mxu0 0
    %879 = vmatprep.subr.bf16.mxu0 0
    %880 = vmatpush1.bf16.msra.mxu0 0
    %881 = vmatprep.subr.bf16.mxu0 0
    %882 = vmatpush1.bf16.msra.mxu0 0
    %883 = vmatprep.subr.bf16.mxu0 0
    %884 = vmatpush1.bf16.msra.mxu0 0
    %885 = vmatprep.subr.bf16.mxu0 0
    %886 = vmatpush1.bf16.msra.mxu0 0
    %887 = vmatprep.subr.bf16.mxu0 0
    %888 = vmatpush1.bf16.msra.mxu0 0
    %889 = vmatprep.subr.bf16.mxu0 0
    %890 = vmatpush1.bf16.msra.mxu0 0
    %891 = vmatprep.subr.bf16.mxu0 0
    %892 = vmatpush1.bf16.msra.mxu0 0
    %893 = vmatprep.mubr.bf16.mxu0 0
    %894 = vmatmul.mubr.bf16.gmra.mrb[0].mxu0 %v859
    %v895 = vpop.f32.mrb[0].mxu0
    %v896 = vadd.f32 0.0, %v895
    %v897 = vpop.f32.mrb[0].mxu0
    %v898 = vpop.f32.mrb[0].mxu0
    %v899 = vpop.f32.mrb[0].mxu0
    %900 = vdwg.mxu0
    %v902 = vrot.slane %v896, 3
    %v903 = vrot.slane %v896, 4
    %v906 = vadd.f32 %v265, %v902
    %v907 = vadd.f32 %v268, %v903
    %v908 = vxor.u32 %v906, 2147483648
    %v909 = vxor.u32 %v907, 2147483648
    %v910 = vmul.f32 %v908, 1.442695
    %v911 = vpow.pop %v910
    %v912 = vmul.f32 %v909, 1.442695
    %v913 = vpow.pop %v912
    %v914 = vadd.f32 %v911, 1.0
    %v915 = vadd.f32 %v913, 1.0
    %v916 = vrcp.pop %v914
    %v917 = vmul.f32 1.0, %v916
    %v918 = vrcp.pop %v915
    %v919 = vmul.f32 1.0, %v918
    %v920 = vtanh.pop %v906
    %v921 = vtanh.pop %v907
    %v924 = vrot.slane %v832, 7
    %v925 = vrot.slane %v833, 7
    %v928 = vmul.f32 %v917, %v924
    %v929 = vmul.f32 %v919, %v925
    %932 = vrot.lane.b32.xlu0 %v920, 64
    %v933 = vpop.permute.xlu0 %932
    %934 = vrot.lane.b32.xlu0 %v921, 64
    %v935 = vpop.permute.xlu0 %934
    %v938 = vmul.f32 %v917, %v933
    %v939 = vmul.f32 %v919, %v935
    %942 = vrot.lane.b32.xlu0 %v938, 32
    %v943 = vpop.permute.xlu0 %942
    %944 = vrot.lane.b32.xlu0 %v939, 32
    %v945 = vpop.permute.xlu0 %944
    %v948 = vadd.f32 %v928, %v943
    %v949 = vadd.f32 %v929, %v945
    %v950 = vtanh.pop %v948
    %v951 = vtanh.pop %v949
    %954 = vrot.lane.b32.xlu0 %v950, 64
    %v955 = vpop.permute.xlu0 %954
    %956 = vrot.lane.b32.xlu0 %v951, 64
    %v957 = vpop.permute.xlu0 %956
    %v960 = vmul.f32 %v917, %v955
    %v961 = vmul.f32 %v919, %v957
    %v962 = vpack.c.bf16 %v960, %v960
    %v963 = vpack.c.bf16 %v961, %v961
    %v966 = vunpack.c.l.b16 %v962
    %v967 = vunpack.c.l.b16 %v963
    %v968 = vrot.slane %v966, 5
    %v969 = vrot.slane %v967, 4
    %v970 = vsel %vm391, %v969, %v968
    %v971 = vpack.c.b16 %v970, %v970
    %972 = vrot.lane.b32.xlu0 %v971, 32
    %v973 = vpop.permute.xlu0 %972
    %v975 = vsel %vm226, %v973, 0
    %977 = vmatprep.subr.bf16.mxu0 0
    %978 = vmatpush1.bf16.msra.mxu0 %v283
    %979 = vmatprep.subr.bf16.mxu0 0
    %980 = vmatpush1.bf16.msra.mxu0 %v284
    %981 = vmatprep.subr.bf16.mxu0 0
    %982 = vmatpush1.bf16.msra.mxu0 0
    %983 = vmatprep.subr.bf16.mxu0 0
    %984 = vmatpush1.bf16.msra.mxu0 0
    %985 = vmatprep.subr.bf16.mxu0 0
    %986 = vmatpush1.bf16.msra.mxu0 0
    %987 = vmatprep.subr.bf16.mxu0 0
    %988 = vmatpush1.bf16.msra.mxu0 0
    %989 = vmatprep.subr.bf16.mxu0 0
    %990 = vmatpush1.bf16.msra.mxu0 0
    %991 = vmatprep.subr.bf16.mxu0 0
    %992 = vmatpush1.bf16.msra.mxu0 0
    %993 = vmatprep.subr.bf16.mxu0 0
    %994 = vmatpush1.bf16.msra.mxu0 0
    %995 = vmatprep.subr.bf16.mxu0 0
    %996 = vmatpush1.bf16.msra.mxu0 0
    %997 = vmatprep.subr.bf16.mxu0 0
    %998 = vmatpush1.bf16.msra.mxu0 0
    %999 = vmatprep.subr.bf16.mxu0 0
    %1000 = vmatpush1.bf16.msra.mxu0 0
    %1001 = vmatprep.subr.bf16.mxu0 0
    %1002 = vmatpush1.bf16.msra.mxu0 0
    %1003 = vmatprep.subr.bf16.mxu0 0
    %1004 = vmatpush1.bf16.msra.mxu0 0
    %1005 = vmatprep.subr.bf16.mxu0 0
    %1006 = vmatpush1.bf16.msra.mxu0 0
    %1007 = vmatprep.subr.bf16.mxu0 0
    %1008 = vmatpush1.bf16.msra.mxu0 0
    %1009 = vmatprep.mubr.bf16.mxu0 0
    %1010 = vmatmul.mubr.bf16.gmra.mrb[0].mxu0 %v975
    %v1011 = vpop.f32.mrb[0].mxu0
    %v1012 = vadd.f32 0.0, %v1011
    %v1013 = vpop.f32.mrb[0].mxu0
    %v1014 = vpop.f32.mrb[0].mxu0
    %v1015 = vpop.f32.mrb[0].mxu0
    %1016 = vdwg.mxu0
    %v1018 = vrot.slane %v1012, 2
    %v1019 = vrot.slane %v1012, 3
    %v1022 = vadd.f32 %v265, %v1018
    %v1023 = vadd.f32 %v268, %v1019
    %v1024 = vxor.u32 %v1022, 2147483648
    %v1025 = vxor.u32 %v1023, 2147483648
    %v1026 = vmul.f32 %v1024, 1.442695
    %v1027 = vpow.pop %v1026
    %v1028 = vmul.f32 %v1025, 1.442695
    %v1029 = vpow.pop %v1028
    %v1030 = vadd.f32 %v1027, 1.0
    %v1031 = vadd.f32 %v1029, 1.0
    %v1032 = vrcp.pop %v1030
    %v1033 = vmul.f32 1.0, %v1032
    %v1034 = vrcp.pop %v1031
    %v1035 = vmul.f32 1.0, %v1034
    %v1036 = vtanh.pop %v1022
    %v1037 = vtanh.pop %v1023
    %v1040 = vrot.slane %v948, 7
    %v1041 = vrot.slane %v949, 7
    %v1044 = vmul.f32 %v1033, %v1040
    %v1045 = vmul.f32 %v1035, %v1041
    %1048 = vrot.lane.b32.xlu0 %v1036, 64
    %v1049 = vpop.permute.xlu0 %1048
    %1050 = vrot.lane.b32.xlu0 %v1037, 64
    %v1051 = vpop.permute.xlu0 %1050
    %v1054 = vmul.f32 %v1033, %v1049
    %v1055 = vmul.f32 %v1035, %v1051
    %1058 = vrot.lane.b32.xlu0 %v1054, 32
    %v1059 = vpop.permute.xlu0 %1058
    %1060 = vrot.lane.b32.xlu0 %v1055, 32
    %v1061 = vpop.permute.xlu0 %1060
    %v1064 = vadd.f32 %v1044, %v1059
    %v1065 = vadd.f32 %v1045, %v1061
    %v1066 = vtanh.pop %v1064
    %v1067 = vtanh.pop %v1065
    %1070 = vrot.lane.b32.xlu0 %v1066, 64
    %v1071 = vpop.permute.xlu0 %1070
    %1072 = vrot.lane.b32.xlu0 %v1067, 64
    %v1073 = vpop.permute.xlu0 %1072
    %v1076 = vmul.f32 %v1033, %v1071
    %v1077 = vmul.f32 %v1035, %v1073
    %v1078 = vpack.c.bf16 %v1076, %v1076
    %v1079 = vpack.c.bf16 %v1077, %v1077
    %v1082 = vunpack.c.l.b16 %v1078
    %v1083 = vunpack.c.l.b16 %v1079
    %v1084 = vrot.slane %v1082, 6
    %v1085 = vrot.slane %v1083, 5
    %v1086 = vsel %vm391, %v1085, %v1084
    %v1087 = vpack.c.b16 %v1086, %v1086
    %1088 = vrot.lane.b32.xlu0 %v1087, 32
    %v1089 = vpop.permute.xlu0 %1088
    %v1091 = vsel %vm226, %v1089, 0
    %1093 = vmatprep.subr.bf16.mxu0 0
    %1094 = vmatpush1.bf16.msra.mxu0 %v283
    %1095 = vmatprep.subr.bf16.mxu0 0
    %1096 = vmatpush1.bf16.msra.mxu0 %v284
    %1097 = vmatprep.subr.bf16.mxu0 0
    %1098 = vmatpush1.bf16.msra.mxu0 0
    %1099 = vmatprep.subr.bf16.mxu0 0
    %1100 = vmatpush1.bf16.msra.mxu0 0
    %1101 = vmatprep.subr.bf16.mxu0 0
    %1102 = vmatpush1.bf16.msra.mxu0 0
    %1103 = vmatprep.subr.bf16.mxu0 0
    %1104 = vmatpush1.bf16.msra.mxu0 0
    %1105 = vmatprep.subr.bf16.mxu0 0
    %1106 = vmatpush1.bf16.msra.mxu0 0
    %1107 = vmatprep.subr.bf16.mxu0 0
    %1108 = vmatpush1.bf16.msra.mxu0 0
    %1109 = vmatprep.subr.bf16.mxu0 0
    %1110 = vmatpush1.bf16.msra.mxu0 0
    %1111 = vmatprep.subr.bf16.mxu0 0
    %1112 = vmatpush1.bf16.msra.mxu0 0
    %1113 = vmatprep.subr.bf16.mxu0 0
    %1114 = vmatpush1.bf16.msra.mxu0 0
    %1115 = vmatprep.subr.bf16.mxu0 0
    %1116 = vmatpush1.bf16.msra.mxu0 0
    %1117 = vmatprep.subr.bf16.mxu0 0
    %1118 = vmatpush1.bf16.msra.mxu0 0
    %1119 = vmatprep.subr.bf16.mxu0 0
    %1120 = vmatpush1.bf16.msra.mxu0 0
    %1121 = vmatprep.subr.bf16.mxu0 0
    %1122 = vmatpush1.bf16.msra.mxu0 0
    %1123 = vmatprep.subr.bf16.mxu0 0
    %1124 = vmatpush1.bf16.msra.mxu0 0
    %1125 = vmatprep.mubr.bf16.mxu0 0
    %1126 = vmatmul.mubr.bf16.gmra.mrb[0].mxu0 %v1091
    %v1127 = vpop.f32.mrb[0].mxu0
    %v1128 = vadd.f32 0.0, %v1127
    %v1129 = vpop.f32.mrb[0].mxu0
    %v1130 = vpop.f32.mrb[0].mxu0
    %v1131 = vpop.f32.mrb[0].mxu0
    %1132 = vdwg.mxu0
    %v1134 = vrot.slane %v1128, 1
    %v1135 = vrot.slane %v1128, 2
    %v1138 = vadd.f32 %v265, %v1134
    %v1139 = vadd.f32 %v268, %v1135
    %v1140 = vxor.u32 %v1138, 2147483648
    %v1141 = vxor.u32 %v1139, 2147483648
    %v1142 = vmul.f32 %v1140, 1.442695
    %v1143 = vpow.pop %v1142
    %v1144 = vmul.f32 %v1141, 1.442695
    %v1145 = vpow.pop %v1144
    %v1146 = vadd.f32 %v1143, 1.0
    %v1147 = vadd.f32 %v1145, 1.0
    %v1148 = vrcp.pop %v1146
    %v1149 = vmul.f32 1.0, %v1148
    %v1150 = vrcp.pop %v1147
    %v1151 = vmul.f32 1.0, %v1150
    %v1152 = vtanh.pop %v1138
    %v1153 = vtanh.pop %v1139
    %v1156 = vrot.slane %v1064, 7
    %v1157 = vrot.slane %v1065, 7
    %v1160 = vmul.f32 %v1149, %v1156
    %v1161 = vmul.f32 %v1151, %v1157
    %1164 = vrot.lane.b32.xlu0 %v1152, 64
    %v1165 = vpop.permute.xlu0 %1164
    %1166 = vrot.lane.b32.xlu0 %v1153, 64
    %v1167 = vpop.permute.xlu0 %1166
    %v1170 = vmul.f32 %v1149, %v1165
    %v1171 = vmul.f32 %v1151, %v1167
    %1174 = vrot.lane.b32.xlu0 %v1170, 32
    %v1175 = vpop.permute.xlu0 %1174
    %1176 = vrot.lane.b32.xlu0 %v1171, 32
    %v1177 = vpop.permute.xlu0 %1176
    %v1180 = vadd.f32 %v1160, %v1175
    %v1181 = vadd.f32 %v1161, %v1177
    %v1182 = vtanh.pop %v1180
    %v1183 = vtanh.pop %v1181
    %1186 = vrot.lane.b32.xlu0 %v1182, 64
    %v1187 = vpop.permute.xlu0 %1186
    %1188 = vrot.lane.b32.xlu0 %v1183, 64
    %v1189 = vpop.permute.xlu0 %1188
    %v1192 = vmul.f32 %v1149, %v1187
    %v1193 = vmul.f32 %v1151, %v1189
    %vm1194 = vcmask 1040384
    %v1195 = vsel %vm1194, %v382, %v497
    %v1196 = vsel %vm1194, %v383, %v498
    %vm1197 = vcmask 1041408
    %v1198 = vsel %vm1197, %v1195, %v612
    %v1199 = vsel %vm1197, %v1196, %v613
    %vm1200 = vcmask 1042432
    %v1201 = vsel %vm1200, %v1198, %v728
    %v1202 = vsel %vm1200, %v1199, %v729
    %vm1203 = vcmask 1043456
    %v1204 = vsel %vm1203, %v1201, %v844
    %v1205 = vsel %vm1203, %v1202, %v845
    %vm1206 = vcmask 1044480
    %v1207 = vsel %vm1206, %v1204, %v960
    %v1208 = vsel %vm1206, %v1205, %v961
    %vm1209 = vcmask 1045504
    %v1210 = vsel %vm1209, %v1207, %v1076
    %v1211 = vsel %vm1209, %v1208, %v1077
    %vm1212 = vcmask 1046528
    %v1213 = vsel %vm1212, %v1210, %v1192
    %v1214 = vsel %vm1212, %v1211, %v1193
    %v1215 = vpack.c.bf16 %v1214, %v1213
    %v1216 = vld [vmem:[%s6] sm:$0xf]
    %v1217 = vld [vmem:[%s6 + $0x4] sm:$0xf]
    %v1218 = vld [vmem:[%s6 + $0x8] sm:$0xf]
    %v1219 = vld [vmem:[%s6 + $0xc] sm:$0xf]
    %v1220 = vld [vmem:[%s7] sm:$0x1]
    %v1222 = vlaneseq
    %v1223 = vshrl.u32 %v1222, 7
    %v1224 = vsub.s32 0, %v1223
    %v1225 = vrot.slane %v1220, %v1224
    %1228 = vrot.lane.b32.xlu0 %v1215, 32
    %v1229 = vpop.permute.xlu0 %1228
    %v1234 = vunpack.c.l.b16 %v1216
    %v1235 = vunpack.c.l.b16 %v1217
    %v1236 = vunpack.c.l.b16 %v1218
    %v1237 = vunpack.c.l.b16 %v1219
    %v1238 = vpack.c.b16 %v1235, %v1234
    %v1239 = vpack.c.b16 %v1237, %v1236
    %v1243 = vsel %vm226, %v1229, 0
    %1245 = vmatprep.subr.bf16.mxu0 0
    %1246 = vmatpush1.bf16.msra.mxu0 %v1238
    %1247 = vmatprep.subr.bf16.mxu0 0
    %1248 = vmatpush1.bf16.msra.mxu0 %v1239
    %1249 = vmatprep.subr.bf16.mxu0 0
    %1250 = vmatpush1.bf16.msra.mxu0 0
    %1251 = vmatprep.subr.bf16.mxu0 0
    %1252 = vmatpush1.bf16.msra.mxu0 0
    %1253 = vmatprep.subr.bf16.mxu0 0
    %1254 = vmatpush1.bf16.msra.mxu0 0
    %1255 = vmatprep.subr.bf16.mxu0 0
    %1256 = vmatpush1.bf16.msra.mxu0 0
    %1257 = vmatprep.subr.bf16.mxu0 0
    %1258 = vmatpush1.bf16.msra.mxu0 0
    %1259 = vmatprep.subr.bf16.mxu0 0
    %1260 = vmatpush1.bf16.msra.mxu0 0
    %1261 = vmatprep.subr.bf16.mxu0 0
    %1262 = vmatpush1.bf16.msra.mxu0 0
    %1263 = vmatprep.subr.bf16.mxu0 0
    %1264 = vmatpush1.bf16.msra.mxu0 0
    %1265 = vmatprep.subr.bf16.mxu0 0
    %1266 = vmatpush1.bf16.msra.mxu0 0
    %1267 = vmatprep.subr.bf16.mxu0 0
    %1268 = vmatpush1.bf16.msra.mxu0 0
    %1269 = vmatprep.subr.bf16.mxu0 0
    %1270 = vmatpush1.bf16.msra.mxu0 0
    %1271 = vmatprep.subr.bf16.mxu0 0
    %1272 = vmatpush1.bf16.msra.mxu0 0
    %1273 = vmatprep.subr.bf16.mxu0 0
    %1274 = vmatpush1.bf16.msra.mxu0 0
    %1275 = vmatprep.subr.bf16.mxu0 0
    %1276 = vmatpush1.bf16.msra.mxu0 0
    %1277 = vmatprep.mubr.bf16.mxu0 0
    %1278 = vmatmul.mubr.bf16.gmra.mrb[0].mxu0 %v1243
    %v1279 = vpop.f32.mrb[0].mxu0
    %v1280 = vadd.f32 %v1225, %v1279
    %v1281 = vpop.f32.mrb[0].mxu0
    %v1282 = vpop.f32.mrb[0].mxu0
    %v1283 = vadd.f32 %v1225, %v1282
    %v1284 = vpop.f32.mrb[0].mxu0
    %1285 = vdwg.mxu0
    %v1286 = vpack.c.bf16 %v1280, %v1280
    %v1287 = vpack.c.bf16 %v1283, %v1283
    %v1288 = vld [vmem:[#allocation4] sm:$0x1]
    %v1289 = vld [vmem:[#allocation4 + $0x1] sm:$0x1]
    %1291 = vrot.lane.b32.xlu0 %v1286, 96
    %v1292 = vpop.permute.xlu0 %1291
    %vm1293 = vcmask 64512
    %v1295 = vsel %vm1293, %v1286, 0
    %v1298 = vsel %vm1293, %v1292, 0
    %1300 = vmatprep.subr.bf16.mxu0 0
    %1301 = vmatpush1.bf16.xpose.msra.mxu0 %v1298
    %1302 = vmatprep.subr.bf16.mxu0 0
    %1303 = vmatpush1.bf16.xpose.msra.mxu0 0
    %1304 = vmatprep.subr.bf16.mxu0 0
    %1305 = vmatpush1.bf16.xpose.msra.mxu0 0
    %1306 = vmatprep.subr.bf16.mxu0 0
    %1307 = vmatpush1.bf16.xpose.msra.mxu0 0
    %1308 = vmatprep.subr.bf16.mxu0 0
    %1309 = vmatpush1.bf16.xpose.msra.mxu0 0
    %1310 = vmatprep.subr.bf16.mxu0 0
    %1311 = vmatpush1.bf16.xpose.msra.mxu0 0
    %1312 = vmatprep.subr.bf16.mxu0 0
    %1313 = vmatpush1.bf16.xpose.msra.mxu0 0
    %1314 = vmatprep.subr.bf16.mxu0 0
    %1315 = vmatpush1.bf16.xpose.msra.mxu0 0
    %1316 = vmatprep.subr.bf16.mxu0 0
    %1317 = vmatpush1.bf16.xpose.msra.mxu0 0
    %1318 = vmatprep.subr.bf16.mxu0 0
    %1319 = vmatpush1.bf16.xpose.msra.mxu0 0
    %1320 = vmatprep.subr.bf16.mxu0 0
    %1321 = vmatpush1.bf16.xpose.msra.mxu0 0
    %1322 = vmatprep.subr.bf16.mxu0 0
    %1323 = vmatpush1.bf16.xpose.msra.mxu0 0
    %1324 = vmatprep.subr.bf16.mxu0 0
    %1325 = vmatpush1.bf16.xpose.msra.mxu0 0
    %1326 = vmatprep.subr.bf16.mxu0 0
    %1327 = vmatpush1.bf16.xpose.msra.mxu0 0
    %1328 = vmatprep.subr.bf16.mxu0 0
    %1329 = vmatpush1.bf16.xpose.msra.mxu0 0
    %1330 = vmatprep.subr.bf16.mxu0 0
    %1331 = vmatpush1.bf16.xpose.msra.mxu0 0
    %1332 = vmatprep.mubr.bf16.mxu0 0
    %1333 = vmatmul.mubr.bf16.gmra.mrb[0].mxu0 %v1295
    %v1334 = vpop.f32.mrb[0].mxu0
    %v1335 = vadd.f32 0.0, %v1334
    %v1336 = vpop.f32.mrb[0].mxu0
    %v1337 = vpop.f32.mrb[0].mxu0
    %v1338 = vpop.f32.mrb[0].mxu0
    %1339 = vdwg.mxu0
    %1341 = vrot.lane.b32.xlu0 %v1287, 96
    %v1342 = vpop.permute.xlu0 %1341
    %v1344 = vsel %vm1293, %v1287, 0
    %v1347 = vsel %vm1293, %v1342, 0
    %1349 = vmatprep.subr.bf16.mxu0 0
    %1350 = vmatpush1.bf16.xpose.msra.mxu0 %v1347
    %1351 = vmatprep.subr.bf16.mxu0 0
    %1352 = vmatpush1.bf16.xpose.msra.mxu0 0
    %1353 = vmatprep.subr.bf16.mxu0 0
    %1354 = vmatpush1.bf16.xpose.msra.mxu0 0
    %1355 = vmatprep.subr.bf16.mxu0 0
    %1356 = vmatpush1.bf16.xpose.msra.mxu0 0
    %1357 = vmatprep.subr.bf16.mxu0 0
    %1358 = vmatpush1.bf16.xpose.msra.mxu0 0
    %1359 = vmatprep.subr.bf16.mxu0 0
    %1360 = vmatpush1.bf16.xpose.msra.mxu0 0
    %1361 = vmatprep.subr.bf16.mxu0 0
    %1362 = vmatpush1.bf16.xpose.msra.mxu0 0
    %1363 = vmatprep.subr.bf16.mxu0 0
    %1364 = vmatpush1.bf16.xpose.msra.mxu0 0
    %1365 = vmatprep.subr.bf16.mxu0 0
    %1366 = vmatpush1.bf16.xpose.msra.mxu0 0
    %1367 = vmatprep.subr.bf16.mxu0 0
    %1368 = vmatpush1.bf16.xpose.msra.mxu0 0
    %1369 = vmatprep.subr.bf16.mxu0 0
    %1370 = vmatpush1.bf16.xpose.msra.mxu0 0
    %1371 = vmatprep.subr.bf16.mxu0 0
    %1372 = vmatpush1.bf16.xpose.msra.mxu0 0
    %1373 = vmatprep.subr.bf16.mxu0 0
    %1374 = vmatpush1.bf16.xpose.msra.mxu0 0
    %1375 = vmatprep.subr.bf16.mxu0 0
    %1376 = vmatpush1.bf16.xpose.msra.mxu0 0
    %1377 = vmatprep.subr.bf16.mxu0 0
    %1378 = vmatpush1.bf16.xpose.msra.mxu0 0
    %1379 = vmatprep.subr.bf16.mxu0 0
    %1380 = vmatpush1.bf16.xpose.msra.mxu0 0
    %1381 = vmatprep.mubr.bf16.mxu0 0
    %1382 = vmatmul.mubr.bf16.gmra.mrb[0].mxu0 %v1344
    %v1383 = vpop.f32.mrb[0].mxu0
    %v1384 = vadd.f32 0.0, %v1383
    %v1385 = vpop.f32.mrb[0].mxu0
    %v1386 = vpop.f32.mrb[0].mxu0
    %v1387 = vpop.f32.mrb[0].mxu0
    %1388 = vdwg.mxu0
    %v1389 = vmul.f32 %v1335, 0.35355338
    %v1390 = vmul.f32 %v1384, 0.35355338
    %v1393 = vlaneseq
    %v1394 = vshrl.u32 %v1393, 7
    %v1395 = vsub.s32 0, %v1394
    %v1396 = vrot.slane %v1288, %v1395
    %v1397 = vlaneseq
    %v1398 = vshrl.u32 %v1397, 7
    %v1399 = vsub.s32 0, %v1398
    %v1400 = vrot.slane %v1289, %v1399
    %v1403 = vadd.f32 %v1389, %v1396
    %v1404 = vadd.f32 %v1390, %v1400
    %v1405 = vsel %vm1293, %v1403, -inf
    %1406 = vmax.xlane.f32.xlu0 %v1405
    %v1407 = vpop.xlane.xlu0 %1406
    %v1408 = vsel %vm1293, %v1404, -inf
    %1409 = vmax.xlane.f32.xlu0 %v1408
    %v1410 = vpop.xlane.xlu0 %1409
    %v1411 = vsub.f32 %v1403, %v1407
    %v1412 = vsub.f32 %v1404, %v1410
    %v1413 = vmul.f32 %v1411, 1.442695
    %v1414 = vpow.pop %v1413
    %v1415 = vmul.f32 %v1412, 1.442695
    %v1416 = vpow.pop %v1415
    %v1417 = vsel %vm1293, %v1414, 0.0
    %1418 = vadd.xlane.f32.xlu0 %v1417
    %v1419 = vpop.xlane.xlu0 %1418
    %v1420 = vsel %vm1293, %v1416, 0.0
    %1421 = vadd.xlane.f32.xlu0 %v1420
    %v1422 = vpop.xlane.xlu0 %1421
    %v1423 = vrcp.pop %v1419
    %v1424 = vrcp.pop %v1422
    %v1425 = vmul.f32 %v1414, %v1423
    %v1426 = vmul.f32 %v1416, %v1424
    %v1427 = vpack.c.bf16 %v1425, %v1425
    %v1428 = vpack.c.bf16 %v1426, %v1426
    %1429 = vrot.lane.b32.xlu0 %v1286, 64
    %v1430 = vpop.permute.xlu0 %1429
    %v1432 = vsel %vm1293, %v1427, 0
    %v1435 = vsel %vm1203, %v1430, 0
    %1437 = vmatprep.subr.bf16.mxu0 0
    %1438 = vmatpush1.bf16.msra.mxu0 %v1435
    %1439 = vmatprep.subr.bf16.mxu0 0
    %1440 = vmatpush1.bf16.msra.mxu0 0
    %1441 = vmatprep.subr.bf16.mxu0 0
    %1442 = vmatpush1.bf16.msra.mxu0 0
    %1443 = vmatprep.subr.bf16.mxu0 0
    %1444 = vmatpush1.bf16.msra.mxu0 0
    %1445 = vmatprep.subr.bf16.mxu0 0
    %1446 = vmatpush1.bf16.msra.mxu0 0
    %1447 = vmatprep.subr.bf16.mxu0 0
    %1448 = vmatpush1.bf16.msra.mxu0 0
    %1449 = vmatprep.subr.bf16.mxu0 0
    %1450 = vmatpush1.bf16.msra.mxu0 0
    %1451 = vmatprep.subr.bf16.mxu0 0
    %1452 = vmatpush1.bf16.msra.mxu0 0
    %1453 = vmatprep.subr.bf16.mxu0 0
    %1454 = vmatpush1.bf16.msra.mxu0 0
    %1455 = vmatprep.subr.bf16.mxu0 0
    %1456 = vmatpush1.bf16.msra.mxu0 0
    %1457 = vmatprep.subr.bf16.mxu0 0
    %1458 = vmatpush1.bf16.msra.mxu0 0
    %1459 = vmatprep.subr.bf16.mxu0 0
    %1460 = vmatpush1.bf16.msra.mxu0 0
    %1461 = vmatprep.subr.bf16.mxu0 0
    %1462 = vmatpush1.bf16.msra.mxu0 0
    %1463 = vmatprep.subr.bf16.mxu0 0
    %1464 = vmatpush1.bf16.msra.mxu0 0
    %1465 = vmatprep.subr.bf16.mxu0 0
    %1466 = vmatpush1.bf16.msra.mxu0 0
    %1467 = vmatprep.subr.bf16.mxu0 0
    %1468 = vmatpush1.bf16.msra.mxu0 0
    %1469 = vmatprep.mubr.bf16.mxu0 0
    %1470 = vmatmul.mubr.bf16.gmra.mrb[0].mxu0 %v1432
    %v1471 = vpop.f32.mrb[0].mxu0
    %v1472 = vadd.f32 0.0, %v1471
    %v1473 = vpop.f32.mrb[0].mxu0
    %v1474 = vpop.f32.mrb[0].mxu0
    %v1475 = vpop.f32.mrb[0].mxu0
    %1476 = vdwg.mxu0
    %1477 = vrot.lane.b32.xlu0 %v1287, 64
    %v1478 = vpop.permute.xlu0 %1477
    %v1480 = vsel %vm1293, %v1428, 0
    %v1483 = vsel %vm1203, %v1478, 0
    %1485 = vmatprep.subr.bf16.mxu0 0
    %1486 = vmatpush1.bf16.msra.mxu0 %v1483
    %1487 = vmatprep.subr.bf16.mxu0 0
    %1488 = vmatpush1.bf16.msra.mxu0 0
    %1489 = vmatprep.subr.bf16.mxu0 0
    %1490 = vmatpush1.bf16.msra.mxu0 0
    %1491 = vmatprep.subr.bf16.mxu0 0
    %1492 = vmatpush1.bf16.msra.mxu0 0
    %1493 = vmatprep.subr.bf16.mxu0 0
    %1494 = vmatpush1.bf16.msra.mxu0 0
    %1495 = vmatprep.subr.bf16.mxu0 0
    %1496 = vmatpush1.bf16.msra.mxu0 0
    %1497 = vmatprep.subr.bf16.mxu0 0
    %1498 = vmatpush1.bf16.msra.mxu0 0
    %1499 = vmatprep.subr.bf16.mxu0 0
    %1500 = vmatpush1.bf16.msra.mxu0 0
    %1501 = vmatprep.subr.bf16.mxu0 0
    %1502 = vmatpush1.bf16.msra.mxu0 0
    %1503 = vmatprep.subr.bf16.mxu0 0
    %1504 = vmatpush1.bf16.msra.mxu0 0
    %1505 = vmatprep.subr.bf16.mxu0 0
    %1506 = vmatpush1.bf16.msra.mxu0 0
    %1507 = vmatprep.subr.bf16.mxu0 0
    %1508 = vmatpush1.bf16.msra.mxu0 0
    %1509 = vmatprep.subr.bf16.mxu0 0
    %1510 = vmatpush1.bf16.msra.mxu0 0
    %1511 = vmatprep.subr.bf16.mxu0 0
    %1512 = vmatpush1.bf16.msra.mxu0 0
    %1513 = vmatprep.subr.bf16.mxu0 0
    %1514 = vmatpush1.bf16.msra.mxu0 0
    %1515 = vmatprep.subr.bf16.mxu0 0
    %1516 = vmatpush1.bf16.msra.mxu0 0
    %1517 = vmatprep.mubr.bf16.mxu0 0
    %1518 = vmatmul.mubr.bf16.gmra.mrb[0].mxu0 %v1480
    %v1519 = vpop.f32.mrb[0].mxu0
    %v1520 = vadd.f32 0.0, %v1519
    %v1521 = vpop.f32.mrb[0].mxu0
    %v1522 = vpop.f32.mrb[0].mxu0
    %v1523 = vpop.f32.mrb[0].mxu0
    %1524 = vdwg.mxu0
    %1525 = vrot.lane.b32.xlu0 %v1286, 120
    %v1526 = vpop.permute.xlu0 %1525
    %1527 = vrot.lane.b32.xlu0 %v1286, 88
    %v1528 = vpop.permute.xlu0 %1527
    %v1530 = vsel %vm1293, %v1526, 0
    %v1533 = vsel %vm1293, %v1528, 0
    %1535 = vmatprep.subr.bf16.mxu0 0
    %1536 = vmatpush1.bf16.xpose.msra.mxu0 %v1533
    %1537 = vmatprep.subr.bf16.mxu0 0
    %1538 = vmatpush1.bf16.xpose.msra.mxu0 0
    %1539 = vmatprep.subr.bf16.mxu0 0
    %1540 = vmatpush1.bf16.xpose.msra.mxu0 0
    %1541 = vmatprep.subr.bf16.mxu0 0
    %1542 = vmatpush1.bf16.xpose.msra.mxu0 0
    %1543 = vmatprep.subr.bf16.mxu0 0
    %1544 = vmatpush1.bf16.xpose.msra.mxu0 0
    %1545 = vmatprep.subr.bf16.mxu0 0
    %1546 = vmatpush1.bf16.xpose.msra.mxu0 0
    %1547 = vmatprep.subr.bf16.mxu0 0
    %1548 = vmatpush1.bf16.xpose.msra.mxu0 0
    %1549 = vmatprep.subr.bf16.mxu0 0
    %1550 = vmatpush1.bf16.xpose.msra.mxu0 0
    %1551 = vmatprep.subr.bf16.mxu0 0
    %1552 = vmatpush1.bf16.xpose.msra.mxu0 0
    %1553 = vmatprep.subr.bf16.mxu0 0
    %1554 = vmatpush1.bf16.xpose.msra.mxu0 0
    %1555 = vmatprep.subr.bf16.mxu0 0
    %1556 = vmatpush1.bf16.xpose.msra.mxu0 0
    %1557 = vmatprep.subr.bf16.mxu0 0
    %1558 = vmatpush1.bf16.xpose.msra.mxu0 0
    %1559 = vmatprep.subr.bf16.mxu0 0
    %1560 = vmatpush1.bf16.xpose.msra.mxu0 0
    %1561 = vmatprep.subr.bf16.mxu0 0
    %1562 = vmatpush1.bf16.xpose.msra.mxu0 0
    %1563 = vmatprep.subr.bf16.mxu0 0
    %1564 = vmatpush1.bf16.xpose.msra.mxu0 0
    %1565 = vmatprep.subr.bf16.mxu0 0
    %1566 = vmatpush1.bf16.xpose.msra.mxu0 0
    %1567 = vmatprep.mubr.bf16.mxu0 0
    %1568 = vmatmul.mubr.bf16.gmra.mrb[0].mxu0 %v1530
    %v1569 = vpop.f32.mrb[0].mxu0
    %v1570 = vadd.f32 0.0, %v1569
    %v1571 = vpop.f32.mrb[0].mxu0
    %v1572 = vpop.f32.mrb[0].mxu0
    %v1573 = vpop.f32.mrb[0].mxu0
    %1574 = vdwg.mxu0
    %1575 = vrot.lane.b32.xlu0 %v1287, 120
    %v1576 = vpop.permute.xlu0 %1575
    %1577 = vrot.lane.b32.xlu0 %v1287, 88
    %v1578 = vpop.permute.xlu0 %1577
    %v1580 = vsel %vm1293, %v1576, 0
    %v1583 = vsel %vm1293, %v1578, 0
    %1585 = vmatprep.subr.bf16.mxu0 0
    %1586 = vmatpush1.bf16.xpose.msra.mxu0 %v1583
    %1587 = vmatprep.subr.bf16.mxu0 0
    %1588 = vmatpush1.bf16.xpose.msra.mxu0 0
    %1589 = vmatprep.subr.bf16.mxu0 0
    %1590 = vmatpush1.bf16.xpose.msra.mxu0 0
    %1591 = vmatprep.subr.bf16.mxu0 0
    %1592 = vmatpush1.bf16.xpose.msra.mxu0 0
    %1593 = vmatprep.subr.bf16.mxu0 0
    %1594 = vmatpush1.bf16.xpose.msra.mxu0 0
    %1595 = vmatprep.subr.bf16.mxu0 0
    %1596 = vmatpush1.bf16.xpose.msra.mxu0 0
    %1597 = vmatprep.subr.bf16.mxu0 0
    %1598 = vmatpush1.bf16.xpose.msra.mxu0 0
    %1599 = vmatprep.subr.bf16.mxu0 0
    %1600 = vmatpush1.bf16.xpose.msra.mxu0 0
    %1601 = vmatprep.subr.bf16.mxu0 0
    %1602 = vmatpush1.bf16.xpose.msra.mxu0 0
    %1603 = vmatprep.subr.bf16.mxu0 0
    %1604 = vmatpush1.bf16.xpose.msra.mxu0 0
    %1605 = vmatprep.subr.bf16.mxu0 0
    %1606 = vmatpush1.bf16.xpose.msra.mxu0 0
    %1607 = vmatprep.subr.bf16.mxu0 0
    %1608 = vmatpush1.bf16.xpose.msra.mxu0 0
    %1609 = vmatprep.subr.bf16.mxu0 0
    %1610 = vmatpush1.bf16.xpose.msra.mxu0 0
    %1611 = vmatprep.subr.bf16.mxu0 0
    %1612 = vmatpush1.bf16.xpose.msra.mxu0 0
    %1613 = vmatprep.subr.bf16.mxu0 0
    %1614 = vmatpush1.bf16.xpose.msra.mxu0 0
    %1615 = vmatprep.subr.bf16.mxu0 0
    %1616 = vmatpush1.bf16.xpose.msra.mxu0 0
    %1617 = vmatprep.mubr.bf16.mxu0 0
    %1618 = vmatmul.mubr.bf16.gmra.mrb[0].mxu0 %v1580
    %v1619 = vpop.f32.mrb[0].mxu0
    %v1620 = vadd.f32 0.0, %v1619
    %v1621 = vpop.f32.mrb[0].mxu0
    %v1622 = vpop.f32.mrb[0].mxu0
    %v1623 = vpop.f32.mrb[0].mxu0
    %1624 = vdwg.mxu0
    %v1625 = vmul.f32 %v1570, 0.35355338
    %v1626 = vmul.f32 %v1620, 0.35355338
    %v1627 = vadd.f32 %v1625, %v1396
    %v1628 = vadd.f32 %v1626, %v1400
    %v1629 = vsel %vm1293, %v1627, -inf
    %1630 = vmax.xlane.f32.xlu0 %v1629
    %v1631 = vpop.xlane.xlu0 %1630
    %v1632 = vsel %vm1293, %v1628, -inf
    %1633 = vmax.xlane.f32.xlu0 %v1632
    %v1634 = vpop.xlane.xlu0 %1633
    %v1635 = vsub.f32 %v1627, %v1631
    %v1636 = vsub.f32 %v1628, %v1634
    %v1637 = vmul.f32 %v1635, 1.442695
    %v1638 = vpow.pop %v1637
    %v1639 = vmul.f32 %v1636, 1.442695
    %v1640 = vpow.pop %v1639
    %v1641 = vsel %vm1293, %v1638, 0.0
    %1642 = vadd.xlane.f32.xlu0 %v1641
    %v1643 = vpop.xlane.xlu0 %1642
    %v1644 = vsel %vm1293, %v1640, 0.0
    %1645 = vadd.xlane.f32.xlu0 %v1644
    %v1646 = vpop.xlane.xlu0 %1645
    %v1647 = vrcp.pop %v1643
    %v1648 = vrcp.pop %v1646
    %v1649 = vmul.f32 %v1638, %v1647
    %v1650 = vmul.f32 %v1640, %v1648
    %v1651 = vpack.c.bf16 %v1649, %v1649
    %v1652 = vpack.c.bf16 %v1650, %v1650
    %1653 = vrot.lane.b32.xlu0 %v1286, 56
    %v1654 = vpop.permute.xlu0 %1653
    %v1656 = vsel %vm1293, %v1651, 0
    %v1659 = vsel %vm1203, %v1654, 0
    %1661 = vmatprep.subr.bf16.mxu0 0
    %1662 = vmatpush1.bf16.msra.mxu0 %v1659
    %1663 = vmatprep.subr.bf16.mxu0 0
    %1664 = vmatpush1.bf16.msra.mxu0 0
    %1665 = vmatprep.subr.bf16.mxu0 0
    %1666 = vmatpush1.bf16.msra.mxu0 0
    %1667 = vmatprep.subr.bf16.mxu0 0
    %1668 = vmatpush1.bf16.msra.mxu0 0
    %1669 = vmatprep.subr.bf16.mxu0 0
    %1670 = vmatpush1.bf16.msra.mxu0 0
    %1671 = vmatprep.subr.bf16.mxu0 0
    %1672 = vmatpush1.bf16.msra.mxu0 0
    %1673 = vmatprep.subr.bf16.mxu0 0
    %1674 = vmatpush1.bf16.msra.mxu0 0
    %1675 = vmatprep.subr.bf16.mxu0 0
    %1676 = vmatpush1.bf16.msra.mxu0 0
    %1677 = vmatprep.subr.bf16.mxu0 0
    %1678 = vmatpush1.bf16.msra.mxu0 0
    %1679 = vmatprep.subr.bf16.mxu0 0
    %1680 = vmatpush1.bf16.msra.mxu0 0
    %1681 = vmatprep.subr.bf16.mxu0 0
    %1682 = vmatpush1.bf16.msra.mxu0 0
    %1683 = vmatprep.subr.bf16.mxu0 0
    %1684 = vmatpush1.bf16.msra.mxu0 0
    %1685 = vmatprep.subr.bf16.mxu0 0
    %1686 = vmatpush1.bf16.msra.mxu0 0
    %1687 = vmatprep.subr.bf16.mxu0 0
    %1688 = vmatpush1.bf16.msra.mxu0 0
    %1689 = vmatprep.subr.bf16.mxu0 0
    %1690 = vmatpush1.bf16.msra.mxu0 0
    %1691 = vmatprep.subr.bf16.mxu0 0
    %1692 = vmatpush1.bf16.msra.mxu0 0
    %1693 = vmatprep.mubr.bf16.mxu0 0
    %1694 = vmatmul.mubr.bf16.gmra.mrb[0].mxu0 %v1656
    %v1695 = vpop.f32.mrb[0].mxu0
    %v1696 = vadd.f32 0.0, %v1695
    %v1697 = vpop.f32.mrb[0].mxu0
    %v1698 = vpop.f32.mrb[0].mxu0
    %v1699 = vpop.f32.mrb[0].mxu0
    %1700 = vdwg.mxu0
    %1701 = vrot.lane.b32.xlu0 %v1287, 56
    %v1702 = vpop.permute.xlu0 %1701
    %v1704 = vsel %vm1293, %v1652, 0
    %v1707 = vsel %vm1203, %v1702, 0
    %1709 = vmatprep.subr.bf16.mxu0 0
    %1710 = vmatpush1.bf16.msra.mxu0 %v1707
    %1711 = vmatprep.subr.bf16.mxu0 0
    %1712 = vmatpush1.bf16.msra.mxu0 0
    %1713 = vmatprep.subr.bf16.mxu0 0
    %1714 = vmatpush1.bf16.msra.mxu0 0
    %1715 = vmatprep.subr.bf16.mxu0 0
    %1716 = vmatpush1.bf16.msra.mxu0 0
    %1717 = vmatprep.subr.bf16.mxu0 0
    %1718 = vmatpush1.bf16.msra.mxu0 0
    %1719 = vmatprep.subr.bf16.mxu0 0
    %1720 = vmatpush1.bf16.msra.mxu0 0
    %1721 = vmatprep.subr.bf16.mxu0 0
    %1722 = vmatpush1.bf16.msra.mxu0 0
    %1723 = vmatprep.subr.bf16.mxu0 0
    %1724 = vmatpush1.bf16.msra.mxu0 0
    %1725 = vmatprep.subr.bf16.mxu0 0
    %1726 = vmatpush1.bf16.msra.mxu0 0
    %1727 = vmatprep.subr.bf16.mxu0 0
    %1728 = vmatpush1.bf16.msra.mxu0 0
    %1729 = vmatprep.subr.bf16.mxu0 0
    %1730 = vmatpush1.bf16.msra.mxu0 0
    %1731 = vmatprep.subr.bf16.mxu0 0
    %1732 = vmatpush1.bf16.msra.mxu0 0
    %1733 = vmatprep.subr.bf16.mxu0 0
    %1734 = vmatpush1.bf16.msra.mxu0 0
    %1735 = vmatprep.subr.bf16.mxu0 0
    %1736 = vmatpush1.bf16.msra.mxu0 0
    %1737 = vmatprep.subr.bf16.mxu0 0
    %1738 = vmatpush1.bf16.msra.mxu0 0
    %1739 = vmatprep.subr.bf16.mxu0 0
    %1740 = vmatpush1.bf16.msra.mxu0 0
    %1741 = vmatprep.mubr.bf16.mxu0 0
    %1742 = vmatmul.mubr.bf16.gmra.mrb[0].mxu0 %v1704
    %v1743 = vpop.f32.mrb[0].mxu0
    %v1744 = vadd.f32 0.0, %v1743
    %v1745 = vpop.f32.mrb[0].mxu0
    %v1746 = vpop.f32.mrb[0].mxu0
    %v1747 = vpop.f32.mrb[0].mxu0
    %1748 = vdwg.mxu0
    %1749 = vrot.lane.b32.xlu0 %v1286, 112
    %v1750 = vpop.permute.xlu0 %1749
    %1751 = vrot.lane.b32.xlu0 %v1286, 80
    %v1752 = vpop.permute.xlu0 %1751
    %v1754 = vsel %vm1293, %v1750, 0
    %v1757 = vsel %vm1293, %v1752, 0
    %1759 = vmatprep.subr.bf16.mxu0 0
    %1760 = vmatpush1.bf16.xpose.msra.mxu0 %v1757
    %1761 = vmatprep.subr.bf16.mxu0 0
    %1762 = vmatpush1.bf16.xpose.msra.mxu0 0
    %1763 = vmatprep.subr.bf16.mxu0 0
    %1764 = vmatpush1.bf16.xpose.msra.mxu0 0
    %1765 = vmatprep.subr.bf16.mxu0 0
    %1766 = vmatpush1.bf16.xpose.msra.mxu0 0
    %1767 = vmatprep.subr.bf16.mxu0 0
    %1768 = vmatpush1.bf16.xpose.msra.mxu0 0
    %1769 = vmatprep.subr.bf16.mxu0 0
    %1770 = vmatpush1.bf16.xpose.msra.mxu0 0
    %1771 = vmatprep.subr.bf16.mxu0 0
    %1772 = vmatpush1.bf16.xpose.msra.mxu0 0
    %1773 = vmatprep.subr.bf16.mxu0 0
    %1774 = vmatpush1.bf16.xpose.msra.mxu0 0
    %1775 = vmatprep.subr.bf16.mxu0 0
    %1776 = vmatpush1.bf16.xpose.msra.mxu0 0
    %1777 = vmatprep.subr.bf16.mxu0 0
    %1778 = vmatpush1.bf16.xpose.msra.mxu0 0
    %1779 = vmatprep.subr.bf16.mxu0 0
    %1780 = vmatpush1.bf16.xpose.msra.mxu0 0
    %1781 = vmatprep.subr.bf16.mxu0 0
    %1782 = vmatpush1.bf16.xpose.msra.mxu0 0
    %1783 = vmatprep.subr.bf16.mxu0 0
    %1784 = vmatpush1.bf16.xpose.msra.mxu0 0
    %1785 = vmatprep.subr.bf16.mxu0 0
    %1786 = vmatpush1.bf16.xpose.msra.mxu0 0
    %1787 = vmatprep.subr.bf16.mxu0 0
    %1788 = vmatpush1.bf16.xpose.msra.mxu0 0
    %1789 = vmatprep.subr.bf16.mxu0 0
    %1790 = vmatpush1.bf16.xpose.msra.mxu0 0
    %1791 = vmatprep.mubr.bf16.mxu0 0
    %1792 = vmatmul.mubr.bf16.gmra.mrb[0].mxu0 %v1754
    %v1793 = vpop.f32.mrb[0].mxu0
    %v1794 = vadd.f32 0.0, %v1793
    %v1795 = vpop.f32.mrb[0].mxu0
    %v1796 = vpop.f32.mrb[0].mxu0
    %v1797 = vpop.f32.mrb[0].mxu0
    %1798 = vdwg.mxu0
    %1799 = vrot.lane.b32.xlu0 %v1287, 112
    %v1800 = vpop.permute.xlu0 %1799
    %1801 = vrot.lane.b32.xlu0 %v1287, 80
    %v1802 = vpop.permute.xlu0 %1801
    %v1804 = vsel %vm1293, %v1800, 0
    %v1807 = vsel %vm1293, %v1802, 0
    %1809 = vmatprep.subr.bf16.mxu0 0
    %1810 = vmatpush1.bf16.xpose.msra.mxu0 %v1807
    %1811 = vmatprep.subr.bf16.mxu0 0
    %1812 = vmatpush1.bf16.xpose.msra.mxu0 0
    %1813 = vmatprep.subr.bf16.mxu0 0
    %1814 = vmatpush1.bf16.xpose.msra.mxu0 0
    %1815 = vmatprep.subr.bf16.mxu0 0
    %1816 = vmatpush1.bf16.xpose.msra.mxu0 0
    %1817 = vmatprep.subr.bf16.mxu0 0
    %1818 = vmatpush1.bf16.xpose.msra.mxu0 0
    %1819 = vmatprep.subr.bf16.mxu0 0
    %1820 = vmatpush1.bf16.xpose.msra.mxu0 0
    %1821 = vmatprep.subr.bf16.mxu0 0
    %1822 = vmatpush1.bf16.xpose.msra.mxu0 0
    %1823 = vmatprep.subr.bf16.mxu0 0
    %1824 = vmatpush1.bf16.xpose.msra.mxu0 0
    %1825 = vmatprep.subr.bf16.mxu0 0
    %1826 = vmatpush1.bf16.xpose.msra.mxu0 0
    %1827 = vmatprep.subr.bf16.mxu0 0
    %1828 = vmatpush1.bf16.xpose.msra.mxu0 0
    %1829 = vmatprep.subr.bf16.mxu0 0
    %1830 = vmatpush1.bf16.xpose.msra.mxu0 0
    %1831 = vmatprep.subr.bf16.mxu0 0
    %1832 = vmatpush1.bf16.xpose.msra.mxu0 0
    %1833 = vmatprep.subr.bf16.mxu0 0
    %1834 = vmatpush1.bf16.xpose.msra.mxu0 0
    %1835 = vmatprep.subr.bf16.mxu0 0
    %1836 = vmatpush1.bf16.xpose.msra.mxu0 0
    %1837 = vmatprep.subr.bf16.mxu0 0
    %1838 = vmatpush1.bf16.xpose.msra.mxu0 0
    %1839 = vmatprep.subr.bf16.mxu0 0
    %1840 = vmatpush1.bf16.xpose.msra.mxu0 0
    %1841 = vmatprep.mubr.bf16.mxu0 0
    %1842 = vmatmul.mubr.bf16.gmra.mrb[0].mxu0 %v1804
    %v1843 = vpop.f32.mrb[0].mxu0
    %v1844 = vadd.f32 0.0, %v1843
    %v1845 = vpop.f32.mrb[0].mxu0
    %v1846 = vpop.f32.mrb[0].mxu0
    %v1847 = vpop.f32.mrb[0].mxu0
    %1848 = vdwg.mxu0
    %v1849 = vmul.f32 %v1794, 0.35355338
    %v1850 = vmul.f32 %v1844, 0.35355338
    %v1851 = vadd.f32 %v1849, %v1396
    %v1852 = vadd.f32 %v1850, %v1400
    %v1853 = vsel %vm1293, %v1851, -inf
    %1854 = vmax.xlane.f32.xlu0 %v1853
    %v1855 = vpop.xlane.xlu0 %1854
    %v1856 = vsel %vm1293, %v1852, -inf
    %1857 = vmax.xlane.f32.xlu0 %v1856
    %v1858 = vpop.xlane.xlu0 %1857
    %v1859 = vsub.f32 %v1851, %v1855
    %v1860 = vsub.f32 %v1852, %v1858
    %v1861 = vmul.f32 %v1859, 1.442695
    %v1862 = vpow.pop %v1861
    %v1863 = vmul.f32 %v1860, 1.442695
    %v1864 = vpow.pop %v1863
    %v1865 = vsel %vm1293, %v1862, 0.0
    %1866 = vadd.xlane.f32.xlu0 %v1865
    %v1867 = vpop.xlane.xlu0 %1866
    %v1868 = vsel %vm1293, %v1864, 0.0
    %1869 = vadd.xlane.f32.xlu0 %v1868
    %v1870 = vpop.xlane.xlu0 %1869
    %v1871 = vrcp.pop %v1867
    %v1872 = vrcp.pop %v1870
    %v1873 = vmul.f32 %v1862, %v1871
    %v1874 = vmul.f32 %v1864, %v1872
    %v1875 = vpack.c.bf16 %v1873, %v1873
    %v1876 = vpack.c.bf16 %v1874, %v1874
    %1877 = vrot.lane.b32.xlu0 %v1286, 48
    %v1878 = vpop.permute.xlu0 %1877
    %v1880 = vsel %vm1293, %v1875, 0
    %v1883 = vsel %vm1203, %v1878, 0
    %1885 = vmatprep.subr.bf16.mxu0 0
    %1886 = vmatpush1.bf16.msra.mxu0 %v1883
    %1887 = vmatprep.subr.bf16.mxu0 0
    %1888 = vmatpush1.bf16.msra.mxu0 0
    %1889 = vmatprep.subr.bf16.mxu0 0
    %1890 = vmatpush1.bf16.msra.mxu0 0
    %1891 = vmatprep.subr.bf16.mxu0 0
    %1892 = vmatpush1.bf16.msra.mxu0 0
    %1893 = vmatprep.subr.bf16.mxu0 0
    %1894 = vmatpush1.bf16.msra.mxu0 0
    %1895 = vmatprep.subr.bf16.mxu0 0
    %1896 = vmatpush1.bf16.msra.mxu0 0
    %1897 = vmatprep.subr.bf16.mxu0 0
    %1898 = vmatpush1.bf16.msra.mxu0 0
    %1899 = vmatprep.subr.bf16.mxu0 0
    %1900 = vmatpush1.bf16.msra.mxu0 0
    %1901 = vmatprep.subr.bf16.mxu0 0
    %1902 = vmatpush1.bf16.msra.mxu0 0
    %1903 = vmatprep.subr.bf16.mxu0 0
    %1904 = vmatpush1.bf16.msra.mxu0 0
    %1905 = vmatprep.subr.bf16.mxu0 0
    %1906 = vmatpush1.bf16.msra.mxu0 0
    %1907 = vmatprep.subr.bf16.mxu0 0
    %1908 = vmatpush1.bf16.msra.mxu0 0
    %1909 = vmatprep.subr.bf16.mxu0 0
    %1910 = vmatpush1.bf16.msra.mxu0 0
    %1911 = vmatprep.subr.bf16.mxu0 0
    %1912 = vmatpush1.bf16.msra.mxu0 0
    %1913 = vmatprep.subr.bf16.mxu0 0
    %1914 = vmatpush1.bf16.msra.mxu0 0
    %1915 = vmatprep.subr.bf16.mxu0 0
    %1916 = vmatpush1.bf16.msra.mxu0 0
    %1917 = vmatprep.mubr.bf16.mxu0 0
    %1918 = vmatmul.mubr.bf16.gmra.mrb[0].mxu0 %v1880
    %v1919 = vpop.f32.mrb[0].mxu0
    %v1920 = vadd.f32 0.0, %v1919
    %v1921 = vpop.f32.mrb[0].mxu0
    %v1922 = vpop.f32.mrb[0].mxu0
    %v1923 = vpop.f32.mrb[0].mxu0
    %1924 = vdwg.mxu0
    %1925 = vrot.lane.b32.xlu0 %v1287, 48
    %v1926 = vpop.permute.xlu0 %1925
    %v1928 = vsel %vm1293, %v1876, 0
    %v1931 = vsel %vm1203, %v1926, 0
    %1933 = vmatprep.subr.bf16.mxu0 0
    %1934 = vmatpush1.bf16.msra.mxu0 %v1931
    %1935 = vmatprep.subr.bf16.mxu0 0
    %1936 = vmatpush1.bf16.msra.mxu0 0
    %1937 = vmatprep.subr.bf16.mxu0 0
    %1938 = vmatpush1.bf16.msra.mxu0 0
    %1939 = vmatprep.subr.bf16.mxu0 0
    %1940 = vmatpush1.bf16.msra.mxu0 0
    %1941 = vmatprep.subr.bf16.mxu0 0
    %1942 = vmatpush1.bf16.msra.mxu0 0
    %1943 = vmatprep.subr.bf16.mxu0 0
    %1944 = vmatpush1.bf16.msra.mxu0 0
    %1945 = vmatprep.subr.bf16.mxu0 0
    %1946 = vmatpush1.bf16.msra.mxu0 0
    %1947 = vmatprep.subr.bf16.mxu0 0
    %1948 = vmatpush1.bf16.msra.mxu0 0
    %1949 = vmatprep.subr.bf16.mxu0 0
    %1950 = vmatpush1.bf16.msra.mxu0 0
    %1951 = vmatprep.subr.bf16.mxu0 0
    %1952 = vmatpush1.bf16.msra.mxu0 0
    %1953 = vmatprep.subr.bf16.mxu0 0
    %1954 = vmatpush1.bf16.msra.mxu0 0
    %1955 = vmatprep.subr.bf16.mxu0 0
    %1956 = vmatpush1.bf16.msra.mxu0 0
    %1957 = vmatprep.subr.bf16.mxu0 0
    %1958 = vmatpush1.bf16.msra.mxu0 0
    %1959 = vmatprep.subr.bf16.mxu0 0
    %1960 = vmatpush1.bf16.msra.mxu0 0
    %1961 = vmatprep.subr.bf16.mxu0 0
    %1962 = vmatpush1.bf16.msra.mxu0 0
    %1963 = vmatprep.subr.bf16.mxu0 0
    %1964 = vmatpush1.bf16.msra.mxu0 0
    %1965 = vmatprep.mubr.bf16.mxu0 0
    %1966 = vmatmul.mubr.bf16.gmra.mrb[0].mxu0 %v1928
    %v1967 = vpop.f32.mrb[0].mxu0
    %v1968 = vadd.f32 0.0, %v1967
    %v1969 = vpop.f32.mrb[0].mxu0
    %v1970 = vpop.f32.mrb[0].mxu0
    %v1971 = vpop.f32.mrb[0].mxu0
    %1972 = vdwg.mxu0
    %1973 = vrot.lane.b32.xlu0 %v1286, 104
    %v1974 = vpop.permute.xlu0 %1973
    %1975 = vrot.lane.b32.xlu0 %v1286, 72
    %v1976 = vpop.permute.xlu0 %1975
    %v1978 = vsel %vm1293, %v1974, 0
    %v1981 = vsel %vm1293, %v1976, 0
    %1983 = vmatprep.subr.bf16.mxu0 0
    %1984 = vmatpush1.bf16.xpose.msra.mxu0 %v1981
    %1985 = vmatprep.subr.bf16.mxu0 0
    %1986 = vmatpush1.bf16.xpose.msra.mxu0 0
    %1987 = vmatprep.subr.bf16.mxu0 0
    %1988 = vmatpush1.bf16.xpose.msra.mxu0 0
    %1989 = vmatprep.subr.bf16.mxu0 0
    %1990 = vmatpush1.bf16.xpose.msra.mxu0 0
    %1991 = vmatprep.subr.bf16.mxu0 0
    %1992 = vmatpush1.bf16.xpose.msra.mxu0 0
    %1993 = vmatprep.subr.bf16.mxu0 0
    %1994 = vmatpush1.bf16.xpose.msra.mxu0 0
    %1995 = vmatprep.subr.bf16.mxu0 0
    %1996 = vmatpush1.bf16.xpose.msra.mxu0 0
    %1997 = vmatprep.subr.bf16.mxu0 0
    %1998 = vmatpush1.bf16.xpose.msra.mxu0 0
    %1999 = vmatprep.subr.bf16.mxu0 0
    %2000 = vmatpush1.bf16.xpose.msra.mxu0 0
    %2001 = vmatprep.subr.bf16.mxu0 0
    %2002 = vmatpush1.bf16.xpose.msra.mxu0 0
    %2003 = vmatprep.subr.bf16.mxu0 0
    %2004 = vmatpush1.bf16.xpose.msra.mxu0 0
    %2005 = vmatprep.subr.bf16.mxu0 0
    %2006 = vmatpush1.bf16.xpose.msra.mxu0 0
    %2007 = vmatprep.subr.bf16.mxu0 0
    %2008 = vmatpush1.bf16.xpose.msra.mxu0 0
    %2009 = vmatprep.subr.bf16.mxu0 0
    %2010 = vmatpush1.bf16.xpose.msra.mxu0 0
    %2011 = vmatprep.subr.bf16.mxu0 0
    %2012 = vmatpush1.bf16.xpose.msra.mxu0 0
    %2013 = vmatprep.subr.bf16.mxu0 0
    %2014 = vmatpush1.bf16.xpose.msra.mxu0 0
    %2015 = vmatprep.mubr.bf16.mxu0 0
    %2016 = vmatmul.mubr.bf16.gmra.mrb[0].mxu0 %v1978
    %v2017 = vpop.f32.mrb[0].mxu0
    %v2018 = vadd.f32 0.0, %v2017
    %v2019 = vpop.f32.mrb[0].mxu0
    %v2020 = vpop.f32.mrb[0].mxu0
    %v2021 = vpop.f32.mrb[0].mxu0
    %2022 = vdwg.mxu0
    %2023 = vrot.lane.b32.xlu0 %v1287, 104
    %v2024 = vpop.permute.xlu0 %2023
    %2025 = vrot.lane.b32.xlu0 %v1287, 72
    %v2026 = vpop.permute.xlu0 %2025
    %v2028 = vsel %vm1293, %v2024, 0
    %v2031 = vsel %vm1293, %v2026, 0
    %2033 = vmatprep.subr.bf16.mxu0 0
    %2034 = vmatpush1.bf16.xpose.msra.mxu0 %v2031
    %2035 = vmatprep.subr.bf16.mxu0 0
    %2036 = vmatpush1.bf16.xpose.msra.mxu0 0
    %2037 = vmatprep.subr.bf16.mxu0 0
    %2038 = vmatpush1.bf16.xpose.msra.mxu0 0
    %2039 = vmatprep.subr.bf16.mxu0 0
    %2040 = vmatpush1.bf16.xpose.msra.mxu0 0
    %2041 = vmatprep.subr.bf16.mxu0 0
    %2042 = vmatpush1.bf16.xpose.msra.mxu0 0
    %2043 = vmatprep.subr.bf16.mxu0 0
    %2044 = vmatpush1.bf16.xpose.msra.mxu0 0
    %2045 = vmatprep.subr.bf16.mxu0 0
    %2046 = vmatpush1.bf16.xpose.msra.mxu0 0
    %2047 = vmatprep.subr.bf16.mxu0 0
    %2048 = vmatpush1.bf16.xpose.msra.mxu0 0
    %2049 = vmatprep.subr.bf16.mxu0 0
    %2050 = vmatpush1.bf16.xpose.msra.mxu0 0
    %2051 = vmatprep.subr.bf16.mxu0 0
    %2052 = vmatpush1.bf16.xpose.msra.mxu0 0
    %2053 = vmatprep.subr.bf16.mxu0 0
    %2054 = vmatpush1.bf16.xpose.msra.mxu0 0
    %2055 = vmatprep.subr.bf16.mxu0 0
    %2056 = vmatpush1.bf16.xpose.msra.mxu0 0
    %2057 = vmatprep.subr.bf16.mxu0 0
    %2058 = vmatpush1.bf16.xpose.msra.mxu0 0
    %2059 = vmatprep.subr.bf16.mxu0 0
    %2060 = vmatpush1.bf16.xpose.msra.mxu0 0
    %2061 = vmatprep.subr.bf16.mxu0 0
    %2062 = vmatpush1.bf16.xpose.msra.mxu0 0
    %2063 = vmatprep.subr.bf16.mxu0 0
    %2064 = vmatpush1.bf16.xpose.msra.mxu0 0
    %2065 = vmatprep.mubr.bf16.mxu0 0
    %2066 = vmatmul.mubr.bf16.gmra.mrb[0].mxu0 %v2028
    %v2067 = vpop.f32.mrb[0].mxu0
    %v2068 = vadd.f32 0.0, %v2067
    %v2069 = vpop.f32.mrb[0].mxu0
    %v2070 = vpop.f32.mrb[0].mxu0
    %v2071 = vpop.f32.mrb[0].mxu0
    %2072 = vdwg.mxu0
    %v2073 = vmul.f32 %v2018, 0.35355338
    %v2074 = vmul.f32 %v2068, 0.35355338
    %v2075 = vadd.f32 %v2073, %v1396
    %v2076 = vadd.f32 %v2074, %v1400
    %v2077 = vsel %vm1293, %v2075, -inf
    %2078 = vmax.xlane.f32.xlu0 %v2077
    %v2079 = vpop.xlane.xlu0 %2078
    %v2080 = vsel %vm1293, %v2076, -inf
    %2081 = vmax.xlane.f32.xlu0 %v2080
    %v2082 = vpop.xlane.xlu0 %2081
    %v2083 = vsub.f32 %v2075, %v2079
    %v2084 = vsub.f32 %v2076, %v2082
    %v2085 = vmul.f32 %v2083, 1.442695
    %v2086 = vpow.pop %v2085
    %v2087 = vmul.f32 %v2084, 1.442695
    %v2088 = vpow.pop %v2087
    %v2089 = vsel %vm1293, %v2086, 0.0
    %2090 = vadd.xlane.f32.xlu0 %v2089
    %v2091 = vpop.xlane.xlu0 %2090
    %v2092 = vsel %vm1293, %v2088, 0.0
    %2093 = vadd.xlane.f32.xlu0 %v2092
    %v2094 = vpop.xlane.xlu0 %2093
    %v2095 = vrcp.pop %v2091
    %v2096 = vrcp.pop %v2094
    %v2097 = vmul.f32 %v2086, %v2095
    %v2098 = vmul.f32 %v2088, %v2096
    %v2099 = vpack.c.bf16 %v2097, %v2097
    %v2100 = vpack.c.bf16 %v2098, %v2098
    %2101 = vrot.lane.b32.xlu0 %v1286, 40
    %v2102 = vpop.permute.xlu0 %2101
    %v2104 = vsel %vm1293, %v2099, 0
    %v2107 = vsel %vm1203, %v2102, 0
    %2109 = vmatprep.subr.bf16.mxu0 0
    %2110 = vmatpush1.bf16.msra.mxu0 %v2107
    %2111 = vmatprep.subr.bf16.mxu0 0
    %2112 = vmatpush1.bf16.msra.mxu0 0
    %2113 = vmatprep.subr.bf16.mxu0 0
    %2114 = vmatpush1.bf16.msra.mxu0 0
    %2115 = vmatprep.subr.bf16.mxu0 0
    %2116 = vmatpush1.bf16.msra.mxu0 0
    %2117 = vmatprep.subr.bf16.mxu0 0
    %2118 = vmatpush1.bf16.msra.mxu0 0
    %2119 = vmatprep.subr.bf16.mxu0 0
    %2120 = vmatpush1.bf16.msra.mxu0 0
    %2121 = vmatprep.subr.bf16.mxu0 0
    %2122 = vmatpush1.bf16.msra.mxu0 0
    %2123 = vmatprep.subr.bf16.mxu0 0
    %2124 = vmatpush1.bf16.msra.mxu0 0
    %2125 = vmatprep.subr.bf16.mxu0 0
    %2126 = vmatpush1.bf16.msra.mxu0 0
    %2127 = vmatprep.subr.bf16.mxu0 0
    %2128 = vmatpush1.bf16.msra.mxu0 0
    %2129 = vmatprep.subr.bf16.mxu0 0
    %2130 = vmatpush1.bf16.msra.mxu0 0
    %2131 = vmatprep.subr.bf16.mxu0 0
    %2132 = vmatpush1.bf16.msra.mxu0 0
    %2133 = vmatprep.subr.bf16.mxu0 0
    %2134 = vmatpush1.bf16.msra.mxu0 0
    %2135 = vmatprep.subr.bf16.mxu0 0
    %2136 = vmatpush1.bf16.msra.mxu0 0
    %2137 = vmatprep.subr.bf16.mxu0 0
    %2138 = vmatpush1.bf16.msra.mxu0 0
    %2139 = vmatprep.subr.bf16.mxu0 0
    %2140 = vmatpush1.bf16.msra.mxu0 0
    %2141 = vmatprep.mubr.bf16.mxu0 0
    %2142 = vmatmul.mubr.bf16.gmra.mrb[0].mxu0 %v2104
    %v2143 = vpop.f32.mrb[0].mxu0
    %v2144 = vadd.f32 0.0, %v2143
    %v2145 = vpop.f32.mrb[0].mxu0
    %v2146 = vpop.f32.mrb[0].mxu0
    %v2147 = vpop.f32.mrb[0].mxu0
    %2148 = vdwg.mxu0
    %2149 = vrot.lane.b32.xlu0 %v1287, 40
    %v2150 = vpop.permute.xlu0 %2149
    %v2152 = vsel %vm1293, %v2100, 0
    %v2155 = vsel %vm1203, %v2150, 0
    %2157 = vmatprep.subr.bf16.mxu0 0
    %2158 = vmatpush1.bf16.msra.mxu0 %v2155
    %2159 = vmatprep.subr.bf16.mxu0 0
    %2160 = vmatpush1.bf16.msra.mxu0 0
    %2161 = vmatprep.subr.bf16.mxu0 0
    %2162 = vmatpush1.bf16.msra.mxu0 0
    %2163 = vmatprep.subr.bf16.mxu0 0
    %2164 = vmatpush1.bf16.msra.mxu0 0
    %2165 = vmatprep.subr.bf16.mxu0 0
    %2166 = vmatpush1.bf16.msra.mxu0 0
    %2167 = vmatprep.subr.bf16.mxu0 0
    %2168 = vmatpush1.bf16.msra.mxu0 0
    %2169 = vmatprep.subr.bf16.mxu0 0
    %2170 = vmatpush1.bf16.msra.mxu0 0
    %2171 = vmatprep.subr.bf16.mxu0 0
    %2172 = vmatpush1.bf16.msra.mxu0 0
    %2173 = vmatprep.subr.bf16.mxu0 0
    %2174 = vmatpush1.bf16.msra.mxu0 0
    %2175 = vmatprep.subr.bf16.mxu0 0
    %2176 = vmatpush1.bf16.msra.mxu0 0
    %2177 = vmatprep.subr.bf16.mxu0 0
    %2178 = vmatpush1.bf16.msra.mxu0 0
    %2179 = vmatprep.subr.bf16.mxu0 0
    %2180 = vmatpush1.bf16.msra.mxu0 0
    %2181 = vmatprep.subr.bf16.mxu0 0
    %2182 = vmatpush1.bf16.msra.mxu0 0
    %2183 = vmatprep.subr.bf16.mxu0 0
    %2184 = vmatpush1.bf16.msra.mxu0 0
    %2185 = vmatprep.subr.bf16.mxu0 0
    %2186 = vmatpush1.bf16.msra.mxu0 0
    %2187 = vmatprep.subr.bf16.mxu0 0
    %2188 = vmatpush1.bf16.msra.mxu0 0
    %2189 = vmatprep.mubr.bf16.mxu0 0
    %2190 = vmatmul.mubr.bf16.gmra.mrb[0].mxu0 %v2152
    %v2191 = vpop.f32.mrb[0].mxu0
    %v2192 = vadd.f32 0.0, %v2191
    %v2193 = vpop.f32.mrb[0].mxu0
    %v2194 = vpop.f32.mrb[0].mxu0
    %v2195 = vpop.f32.mrb[0].mxu0
    %2196 = vdwg.mxu0
    %2199 = vrot.lane.b32.xlu0 %v1696, 8
    %v2200 = vpop.permute.xlu0 %2199
    %2201 = vrot.lane.b32.xlu0 %v1744, 8
    %v2202 = vpop.permute.xlu0 %2201
    %2207 = vrot.lane.b32.xlu0 %v1920, 16
    %v2208 = vpop.permute.xlu0 %2207
    %2209 = vrot.lane.b32.xlu0 %v1968, 16
    %v2210 = vpop.permute.xlu0 %2209
    %2215 = vrot.lane.b32.xlu0 %v2144, 24
    %v2216 = vpop.permute.xlu0 %2215
    %2217 = vrot.lane.b32.xlu0 %v2192, 24
    %v2218 = vpop.permute.xlu0 %2217
    %v2221 = vsel %vm1293, %v1472, %v2200
    %v2222 = vsel %vm1293, %v1520, %v2202
    %vm2223 = vcmask 130048
    %v2224 = vsel %vm2223, %v2221, %v2208
    %v2225 = vsel %vm2223, %v2222, %v2210
    %vm2226 = vcmask 195584
    %v2227 = vsel %vm2226, %v2224, %v2216
    %v2228 = vsel %vm2226, %v2225, %v2218
    %v2229 = vsel %vm226, %v2227, 0.0
    %v2230 = vrot.slane %v2229, 4
    %v2231 = vadd.f32 %v2229, %v2230
    %v2232 = vrot.slane %v2231, 2
    %v2233 = vadd.f32 %v2231, %v2232
    %v2234 = vrot.slane %v2233, 1
    %v2235 = vadd.f32 %v2233, %v2234
    %v2236 = vsel %vm226, %v2228, 0.0
    %v2237 = vrot.slane %v2236, 4
    %v2238 = vadd.f32 %v2236, %v2237
    %v2239 = vrot.slane %v2238, 2
    %v2240 = vadd.f32 %v2238, %v2239
    %v2241 = vrot.slane %v2240, 1
    %v2242 = vadd.f32 %v2240, %v2241
    %v2243 = vld [vmem:[%s2] sm:$0xf]
    %v2244 = vld [vmem:[%s2 + $0x4] sm:$0xf]
    %v2245 = vld [vmem:[%s2 + $0x8] sm:$0xf]
    %v2246 = vld [vmem:[%s2 + $0xc] sm:$0xf]
    %v2247 = vld [vmem:[%s14] sm:$0xf]
    %v2248 = vld [vmem:[%s14 + $0x4] sm:$0xf]
    %v2249 = vld [vmem:[%s14 + $0x8] sm:$0xf]
    %v2250 = vld [vmem:[%s14 + $0xc] sm:$0xf]
    %v2255 = vunpack.c.l.b16 %v2247
    %v2256 = vunpack.c.l.b16 %v2248
    %v2257 = vunpack.c.l.b16 %v2249
    %v2258 = vunpack.c.l.b16 %v2250
    %v2259 = vpack.c.b16 %v2256, %v2255
    %v2260 = vpack.c.b16 %v2258, %v2257
    %2263 = vmatprep.subr.bf16.mxu0 0
    %2264 = vmatpush1.bf16.msra.mxu0 %v2259
    %2265 = vmatprep.subr.bf16.mxu0 0
    %2266 = vmatpush1.bf16.msra.mxu0 %v2260
    %2267 = vmatprep.subr.bf16.mxu0 0
    %2268 = vmatpush1.bf16.msra.mxu0 0
    %2269 = vmatprep.subr.bf16.mxu0 0
    %2270 = vmatpush1.bf16.msra.mxu0 0
    %2271 = vmatprep.subr.bf16.mxu0 0
    %2272 = vmatpush1.bf16.msra.mxu0 0
    %2273 = vmatprep.subr.bf16.mxu0 0
    %2274 = vmatpush1.bf16.msra.mxu0 0
    %2275 = vmatprep.subr.bf16.mxu0 0
    %2276 = vmatpush1.bf16.msra.mxu0 0
    %2277 = vmatprep.subr.bf16.mxu0 0
    %2278 = vmatpush1.bf16.msra.mxu0 0
    %2279 = vmatprep.subr.bf16.mxu0 0
    %2280 = vmatpush1.bf16.msra.mxu0 0
    %2281 = vmatprep.subr.bf16.mxu0 0
    %2282 = vmatpush1.bf16.msra.mxu0 0
    %2283 = vmatprep.subr.bf16.mxu0 0
    %2284 = vmatpush1.bf16.msra.mxu0 0
    %2285 = vmatprep.subr.bf16.mxu0 0
    %2286 = vmatpush1.bf16.msra.mxu0 0
    %2287 = vmatprep.subr.bf16.mxu0 0
    %2288 = vmatpush1.bf16.msra.mxu0 0
    %2289 = vmatprep.subr.bf16.mxu0 0
    %2290 = vmatpush1.bf16.msra.mxu0 0
    %2291 = vmatprep.subr.bf16.mxu0 0
    %2292 = vmatpush1.bf16.msra.mxu0 0
    %2293 = vmatprep.subr.bf16.mxu0 0
    %2294 = vmatpush1.bf16.msra.mxu0 0
    %2295 = vmatprep.mubr.bf16.mxu0 0
    %2296 = vmatmul.mubr.bf16.gmra.mrb[0].mxu0 %v228
    %v2297 = vpop.f32.mrb[0].mxu0
    %v2298 = vadd.f32 0.0, %v2297
    %v2299 = vpop.f32.mrb[0].mxu0
    %v2300 = vpop.f32.mrb[0].mxu0
    %v2301 = vadd.f32 0.0, %v2300
    %v2302 = vpop.f32.mrb[0].mxu0
    %2303 = vdwg.mxu0
    %2306 = vrot.lane.b32.xlu0 %v2298, 112
    %v2307 = vpop.permute.xlu0 %2306
    %2308 = vrot.lane.b32.xlu0 %v2301, 112
    %v2309 = vpop.permute.xlu0 %2308
    %v2312 = vpack.c.bf16 %v2298, %v2298
    %v2313 = vpack.c.bf16 %v2301, %v2301
    %v2314 = vpack.c.bf16 %v2307, %v2307
    %v2315 = vpack.c.bf16 %v2309, %v2309
    %v2316 = vld [vmem:[#allocation14] sm:$0x1]
    %v2317 = vld [vmem:[#allocation14 + $0x1] sm:$0x1]
    %v2318 = vld [vmem:[#allocation14 + $0x2] sm:$0x1]
    %v2319 = vld [vmem:[#allocation14 + $0x3] sm:$0x1]
    %v2324 = vlaneseq
    %v2325 = vshrl.u32 %v2324, 7
    %v2326 = vsub.s32 0, %v2325
    %v2327 = vrot.slane %v2316, %v2326
    %v2328 = vlaneseq
    %v2329 = vshrl.u32 %v2328, 7
    %v2330 = vsub.s32 0, %v2329
    %v2331 = vrot.slane %v2317, %v2330
    %v2332 = vlaneseq
    %v2333 = vshrl.u32 %v2332, 7
    %v2334 = vsub.s32 0, %v2333
    %v2335 = vrot.slane %v2318, %v2334
    %v2336 = vlaneseq
    %v2337 = vshrl.u32 %v2336, 7
    %v2338 = vsub.s32 0, %v2337
    %v2339 = vrot.slane %v2319, %v2338
    %v2345 = vsel %vm1293, %v2243, 0
    %v2348 = vsel %vm1203, %v2312, 0
    %2350 = vmatprep.subr.bf16.mxu0 0
    %2351 = vmatpush1.bf16.msra.mxu0 %v2348
    %2352 = vmatprep.subr.bf16.mxu0 0
    %2353 = vmatpush1.bf16.msra.mxu0 0
    %2354 = vmatprep.subr.bf16.mxu0 0
    %2355 = vmatpush1.bf16.msra.mxu0 0
    %2356 = vmatprep.subr.bf16.mxu0 0
    %2357 = vmatpush1.bf16.msra.mxu0 0
    %2358 = vmatprep.subr.bf16.mxu0 0
    %2359 = vmatpush1.bf16.msra.mxu0 0
    %2360 = vmatprep.subr.bf16.mxu0 0
    %2361 = vmatpush1.bf16.msra.mxu0 0
    %2362 = vmatprep.subr.bf16.mxu0 0
    %2363 = vmatpush1.bf16.msra.mxu0 0
    %2364 = vmatprep.subr.bf16.mxu0 0
    %2365 = vmatpush1.bf16.msra.mxu0 0
    %2366 = vmatprep.subr.bf16.mxu0 0
    %2367 = vmatpush1.bf16.msra.mxu0 0
    %2368 = vmatprep.subr.bf16.mxu0 0
    %2369 = vmatpush1.bf16.msra.mxu0 0
    %2370 = vmatprep.subr.bf16.mxu0 0
    %2371 = vmatpush1.bf16.msra.mxu0 0
    %2372 = vmatprep.subr.bf16.mxu0 0
    %2373 = vmatpush1.bf16.msra.mxu0 0
    %2374 = vmatprep.subr.bf16.mxu0 0
    %2375 = vmatpush1.bf16.msra.mxu0 0
    %2376 = vmatprep.subr.bf16.mxu0 0
    %2377 = vmatpush1.bf16.msra.mxu0 0
    %2378 = vmatprep.subr.bf16.mxu0 0
    %2379 = vmatpush1.bf16.msra.mxu0 0
    %2380 = vmatprep.subr.bf16.mxu0 0
    %2381 = vmatpush1.bf16.msra.mxu0 0
    %2382 = vmatprep.mubr.bf16.mxu0 0
    %2383 = vmatmul.mubr.bf16.gmra.mrb[0].mxu0 %v2345
    %v2384 = vpop.f32.mrb[0].mxu0
    %v2385 = vadd.f32 %v2327, %v2384
    %v2386 = vpop.f32.mrb[0].mxu0
    %v2387 = vpop.f32.mrb[0].mxu0
    %v2388 = vpop.f32.mrb[0].mxu0
    %2389 = vdwg.mxu0
    %v2391 = vsel %vm1293, %v2244, 0
    %v2394 = vsel %vm1203, %v2313, 0
    %2396 = vmatprep.subr.bf16.mxu0 0
    %2397 = vmatpush1.bf16.msra.mxu0 %v2394
    %2398 = vmatprep.subr.bf16.mxu0 0
    %2399 = vmatpush1.bf16.msra.mxu0 0
    %2400 = vmatprep.subr.bf16.mxu0 0
    %2401 = vmatpush1.bf16.msra.mxu0 0
    %2402 = vmatprep.subr.bf16.mxu0 0
    %2403 = vmatpush1.bf16.msra.mxu0 0
    %2404 = vmatprep.subr.bf16.mxu0 0
    %2405 = vmatpush1.bf16.msra.mxu0 0
    %2406 = vmatprep.subr.bf16.mxu0 0
    %2407 = vmatpush1.bf16.msra.mxu0 0
    %2408 = vmatprep.subr.bf16.mxu0 0
    %2409 = vmatpush1.bf16.msra.mxu0 0
    %2410 = vmatprep.subr.bf16.mxu0 0
    %2411 = vmatpush1.bf16.msra.mxu0 0
    %2412 = vmatprep.subr.bf16.mxu0 0
    %2413 = vmatpush1.bf16.msra.mxu0 0
    %2414 = vmatprep.subr.bf16.mxu0 0
    %2415 = vmatpush1.bf16.msra.mxu0 0
    %2416 = vmatprep.subr.bf16.mxu0 0
    %2417 = vmatpush1.bf16.msra.mxu0 0
    %2418 = vmatprep.subr.bf16.mxu0 0
    %2419 = vmatpush1.bf16.msra.mxu0 0
    %2420 = vmatprep.subr.bf16.mxu0 0
    %2421 = vmatpush1.bf16.msra.mxu0 0
    %2422 = vmatprep.subr.bf16.mxu0 0
    %2423 = vmatpush1.bf16.msra.mxu0 0
    %2424 = vmatprep.subr.bf16.mxu0 0
    %2425 = vmatpush1.bf16.msra.mxu0 0
    %2426 = vmatprep.subr.bf16.mxu0 0
    %2427 = vmatpush1.bf16.msra.mxu0 0
    %2428 = vmatprep.mubr.bf16.mxu0 0
    %2429 = vmatmul.mubr.bf16.gmra.mrb[0].mxu0 %v2391
    %v2430 = vpop.f32.mrb[0].mxu0
    %v2431 = vadd.f32 %v2331, %v2430
    %v2432 = vpop.f32.mrb[0].mxu0
    %v2433 = vpop.f32.mrb[0].mxu0
    %v2434 = vpop.f32.mrb[0].mxu0
    %2435 = vdwg.mxu0
    %v2437 = vsel %vm1293, %v2245, 0
    %v2440 = vsel %vm1203, %v2314, 0
    %2442 = vmatprep.subr.bf16.mxu0 0
    %2443 = vmatpush1.bf16.msra.mxu0 %v2440
    %2444 = vmatprep.subr.bf16.mxu0 0
    %2445 = vmatpush1.bf16.msra.mxu0 0
    %2446 = vmatprep.subr.bf16.mxu0 0
    %2447 = vmatpush1.bf16.msra.mxu0 0
    %2448 = vmatprep.subr.bf16.mxu0 0
    %2449 = vmatpush1.bf16.msra.mxu0 0
    %2450 = vmatprep.subr.bf16.mxu0 0
    %2451 = vmatpush1.bf16.msra.mxu0 0
    %2452 = vmatprep.subr.bf16.mxu0 0
    %2453 = vmatpush1.bf16.msra.mxu0 0
    %2454 = vmatprep.subr.bf16.mxu0 0
    %2455 = vmatpush1.bf16.msra.mxu0 0
    %2456 = vmatprep.subr.bf16.mxu0 0
    %2457 = vmatpush1.bf16.msra.mxu0 0
    %2458 = vmatprep.subr.bf16.mxu0 0
    %2459 = vmatpush1.bf16.msra.mxu0 0
    %2460 = vmatprep.subr.bf16.mxu0 0
    %2461 = vmatpush1.bf16.msra.mxu0 0
    %2462 = vmatprep.subr.bf16.mxu0 0
    %2463 = vmatpush1.bf16.msra.mxu0 0
    %2464 = vmatprep.subr.bf16.mxu0 0
    %2465 = vmatpush1.bf16.msra.mxu0 0
    %2466 = vmatprep.subr.bf16.mxu0 0
    %2467 = vmatpush1.bf16.msra.mxu0 0
    %2468 = vmatprep.subr.bf16.mxu0 0
    %2469 = vmatpush1.bf16.msra.mxu0 0
    %2470 = vmatprep.subr.bf16.mxu0 0
    %2471 = vmatpush1.bf16.msra.mxu0 0
    %2472 = vmatprep.subr.bf16.mxu0 0
    %2473 = vmatpush1.bf16.msra.mxu0 0
    %2474 = vmatprep.mubr.bf16.mxu0 0
    %2475 = vmatmul.mubr.bf16.gmra.mrb[0].mxu0 %v2437
    %v2476 = vpop.f32.mrb[0].mxu0
    %v2477 = vadd.f32 %v2335, %v2476
    %v2478 = vpop.f32.mrb[0].mxu0
    %v2479 = vpop.f32.mrb[0].mxu0
    %v2480 = vpop.f32.mrb[0].mxu0
    %2481 = vdwg.mxu0
    %v2483 = vsel %vm1293, %v2246, 0
    %v2486 = vsel %vm1203, %v2315, 0
    %2488 = vmatprep.subr.bf16.mxu0 0
    %2489 = vmatpush1.bf16.msra.mxu0 %v2486
    %2490 = vmatprep.subr.bf16.mxu0 0
    %2491 = vmatpush1.bf16.msra.mxu0 0
    %2492 = vmatprep.subr.bf16.mxu0 0
    %2493 = vmatpush1.bf16.msra.mxu0 0
    %2494 = vmatprep.subr.bf16.mxu0 0
    %2495 = vmatpush1.bf16.msra.mxu0 0
    %2496 = vmatprep.subr.bf16.mxu0 0
    %2497 = vmatpush1.bf16.msra.mxu0 0
    %2498 = vmatprep.subr.bf16.mxu0 0
    %2499 = vmatpush1.bf16.msra.mxu0 0
    %2500 = vmatprep.subr.bf16.mxu0 0
    %2501 = vmatpush1.bf16.msra.mxu0 0
    %2502 = vmatprep.subr.bf16.mxu0 0
    %2503 = vmatpush1.bf16.msra.mxu0 0
    %2504 = vmatprep.subr.bf16.mxu0 0
    %2505 = vmatpush1.bf16.msra.mxu0 0
    %2506 = vmatprep.subr.bf16.mxu0 0
    %2507 = vmatpush1.bf16.msra.mxu0 0
    %2508 = vmatprep.subr.bf16.mxu0 0
    %2509 = vmatpush1.bf16.msra.mxu0 0
    %2510 = vmatprep.subr.bf16.mxu0 0
    %2511 = vmatpush1.bf16.msra.mxu0 0
    %2512 = vmatprep.subr.bf16.mxu0 0
    %2513 = vmatpush1.bf16.msra.mxu0 0
    %2514 = vmatprep.subr.bf16.mxu0 0
    %2515 = vmatpush1.bf16.msra.mxu0 0
    %2516 = vmatprep.subr.bf16.mxu0 0
    %2517 = vmatpush1.bf16.msra.mxu0 0
    %2518 = vmatprep.subr.bf16.mxu0 0
    %2519 = vmatpush1.bf16.msra.mxu0 0
    %2520 = vmatprep.mubr.bf16.mxu0 0
    %2521 = vmatmul.mubr.bf16.gmra.mrb[0].mxu0 %v2483
    %v2522 = vpop.f32.mrb[0].mxu0
    %v2523 = vadd.f32 %v2339, %v2522
    %v2524 = vpop.f32.mrb[0].mxu0
    %v2525 = vpop.f32.mrb[0].mxu0
    %v2526 = vpop.f32.mrb[0].mxu0
    %2527 = vdwg.mxu0
    %v2528 = vmax.f32 %v2385, 0.0
    %v2529 = vmax.f32 %v2431, 0.0
    %v2530 = vmax.f32 %v2477, 0.0
    %v2531 = vmax.f32 %v2523, 0.0
    %v2532 = vpack.c.bf16 %v2529, %v2528
    %v2533 = vpack.c.bf16 %v2531, %v2530
    %v2534 = vld [vmem:[#allocation15] sm:$0xf]
    %v2535 = vld [vmem:[#allocation15 + $0x4] sm:$0xf]
    %v2538 = vunpack.c.l.b16 %v2534
    %v2539 = vunpack.c.l.b16 %v2535
    %v2540 = vpack.c.b16 %v2539, %v2538
    %v2543 = vsel %vm2223, %v2532, 0
    %2545 = vmatprep.subr.bf16.mxu0 0
    %2546 = vmatpush1.bf16.msra.mxu0 %v2540
    %2547 = vmatprep.subr.bf16.mxu0 0
    %2548 = vmatpush1.bf16.msra.mxu0 0
    %2549 = vmatprep.subr.bf16.mxu0 0
    %2550 = vmatpush1.bf16.msra.mxu0 0
    %2551 = vmatprep.subr.bf16.mxu0 0
    %2552 = vmatpush1.bf16.msra.mxu0 0
    %2553 = vmatprep.subr.bf16.mxu0 0
    %2554 = vmatpush1.bf16.msra.mxu0 0
    %2555 = vmatprep.subr.bf16.mxu0 0
    %2556 = vmatpush1.bf16.msra.mxu0 0
    %2557 = vmatprep.subr.bf16.mxu0 0
    %2558 = vmatpush1.bf16.msra.mxu0 0
    %2559 = vmatprep.subr.bf16.mxu0 0
    %2560 = vmatpush1.bf16.msra.mxu0 0
    %2561 = vmatprep.subr.bf16.mxu0 0
    %2562 = vmatpush1.bf16.msra.mxu0 0
    %2563 = vmatprep.subr.bf16.mxu0 0
    %2564 = vmatpush1.bf16.msra.mxu0 0
    %2565 = vmatprep.subr.bf16.mxu0 0
    %2566 = vmatpush1.bf16.msra.mxu0 0
    %2567 = vmatprep.subr.bf16.mxu0 0
    %2568 = vmatpush1.bf16.msra.mxu0 0
    %2569 = vmatprep.subr.bf16.mxu0 0
    %2570 = vmatpush1.bf16.msra.mxu0 0
    %2571 = vmatprep.subr.bf16.mxu0 0
    %2572 = vmatpush1.bf16.msra.mxu0 0
    %2573 = vmatprep.subr.bf16.mxu0 0
    %2574 = vmatpush1.bf16.msra.mxu0 0
    %2575 = vmatprep.subr.bf16.mxu0 0
    %2576 = vmatpush1.bf16.msra.mxu0 0
    %2577 = vmatprep.mubr.bf16.mxu0 0
    %2578 = vmatmul.mubr.bf16.gmra.mrb[0].mxu0 %v2543
    %v2579 = vpop.f32.mrb[0].mxu0
    %v2580 = vadd.f32 0.0, %v2579
    %v2581 = vpop.f32.mrb[0].mxu0
    %v2582 = vpop.f32.mrb[0].mxu0
    %v2583 = vadd.f32 0.0, %v2582
    %v2584 = vpop.f32.mrb[0].mxu0
    %2585 = vdwg.mxu0
    %v2586 = vld [vmem:[#allocation17] sm:$0xf]
    %v2587 = vld [vmem:[#allocation17 + $0x4] sm:$0xf]
    %v2590 = vunpack.c.l.b16 %v2586
    %v2591 = vunpack.c.l.b16 %v2587
    %v2592 = vpack.c.b16 %v2591, %v2590
    %v2595 = vsel %vm2223, %v2533, 0
    %2597 = vmatprep.subr.bf16.mxu0 0
    %2598 = vmatpush1.bf16.msra.mxu0 %v2592
    %2599 = vmatprep.subr.bf16.mxu0 0
    %2600 = vmatpush1.bf16.msra.mxu0 0
    %2601 = vmatprep.subr.bf16.mxu0 0
    %2602 = vmatpush1.bf16.msra.mxu0 0
    %2603 = vmatprep.subr.bf16.mxu0 0
    %2604 = vmatpush1.bf16.msra.mxu0 0
    %2605 = vmatprep.subr.bf16.mxu0 0
    %2606 = vmatpush1.bf16.msra.mxu0 0
    %2607 = vmatprep.subr.bf16.mxu0 0
    %2608 = vmatpush1.bf16.msra.mxu0 0
    %2609 = vmatprep.subr.bf16.mxu0 0
    %2610 = vmatpush1.bf16.msra.mxu0 0
    %2611 = vmatprep.subr.bf16.mxu0 0
    %2612 = vmatpush1.bf16.msra.mxu0 0
    %2613 = vmatprep.subr.bf16.mxu0 0
    %2614 = vmatpush1.bf16.msra.mxu0 0
    %2615 = vmatprep.subr.bf16.mxu0 0
    %2616 = vmatpush1.bf16.msra.mxu0 0
    %2617 = vmatprep.subr.bf16.mxu0 0
    %2618 = vmatpush1.bf16.msra.mxu0 0
    %2619 = vmatprep.subr.bf16.mxu0 0
    %2620 = vmatpush1.bf16.msra.mxu0 0
    %2621 = vmatprep.subr.bf16.mxu0 0
    %2622 = vmatpush1.bf16.msra.mxu0 0
    %2623 = vmatprep.subr.bf16.mxu0 0
    %2624 = vmatpush1.bf16.msra.mxu0 0
    %2625 = vmatprep.subr.bf16.mxu0 0
    %2626 = vmatpush1.bf16.msra.mxu0 0
    %2627 = vmatprep.subr.bf16.mxu0 0
    %2628 = vmatpush1.bf16.msra.mxu0 0
    %2629 = vmatprep.mubr.bf16.mxu0 0
    %2630 = vmatmul.mubr.bf16.gmra.mrb[0].mxu0 %v2595
    %v2631 = vpop.f32.mrb[0].mxu0
    %v2632 = vadd.f32 0.0, %v2631
    %v2633 = vpop.f32.mrb[0].mxu0
    %v2634 = vpop.f32.mrb[0].mxu0
    %v2635 = vadd.f32 0.0, %v2634
    %v2636 = vpop.f32.mrb[0].mxu0
    %2637 = vdwg.mxu0
    %v2638 = vpack.c.bf16 %v2580, %v2580
    %v2639 = vpack.c.bf16 %v2583, %v2583
    %v2640 = vpack.c.bf16 %v2632, %v2632
    %v2641 = vpack.c.bf16 %v2635, %v2635
    %v2642 = vld [vmem:[%s18] sm:$0x1]
    %v2643 = vld [vmem:[%s18 + $0x1] sm:$0x1]
    %v2644 = vld [vmem:[%s18 + $0x2] sm:$0x1]
    %v2645 = vld [vmem:[%s18 + $0x3] sm:$0x1]
    %v2650 = vlaneseq
    %v2651 = vshrl.u32 %v2650, 7
    %v2652 = vsub.s32 0, %v2651
    %v2653 = vrot.slane %v2642, %v2652
    %v2654 = vlaneseq
    %v2655 = vshrl.u32 %v2654, 7
    %v2656 = vsub.s32 0, %v2655
    %v2657 = vrot.slane %v2643, %v2656
    %v2658 = vlaneseq
    %v2659 = vshrl.u32 %v2658, 7
    %v2660 = vsub.s32 0, %v2659
    %v2661 = vrot.slane %v2644, %v2660
    %v2662 = vlaneseq
    %v2663 = vshrl.u32 %v2662, 7
    %v2664 = vsub.s32 0, %v2663
    %v2665 = vrot.slane %v2645, %v2664
    %v2671 = vsel %vm1203, %v2638, 0
    %2673 = vmatprep.subr.bf16.mxu0 0
    %2674 = vmatpush1.bf16.msra.mxu0 %v2671
    %2675 = vmatprep.subr.bf16.mxu0 0
    %2676 = vmatpush1.bf16.msra.mxu0 0
    %2677 = vmatprep.subr.bf16.mxu0 0
    %2678 = vmatpush1.bf16.msra.mxu0 0
    %2679 = vmatprep.subr.bf16.mxu0 0
    %2680 = vmatpush1.bf16.msra.mxu0 0
    %2681 = vmatprep.subr.bf16.mxu0 0
    %2682 = vmatpush1.bf16.msra.mxu0 0
    %2683 = vmatprep.subr.bf16.mxu0 0
    %2684 = vmatpush1.bf16.msra.mxu0 0
    %2685 = vmatprep.subr.bf16.mxu0 0
    %2686 = vmatpush1.bf16.msra.mxu0 0
    %2687 = vmatprep.subr.bf16.mxu0 0
    %2688 = vmatpush1.bf16.msra.mxu0 0
    %2689 = vmatprep.subr.bf16.mxu0 0
    %2690 = vmatpush1.bf16.msra.mxu0 0
    %2691 = vmatprep.subr.bf16.mxu0 0
    %2692 = vmatpush1.bf16.msra.mxu0 0
    %2693 = vmatprep.subr.bf16.mxu0 0
    %2694 = vmatpush1.bf16.msra.mxu0 0
    %2695 = vmatprep.subr.bf16.mxu0 0
    %2696 = vmatpush1.bf16.msra.mxu0 0
    %2697 = vmatprep.subr.bf16.mxu0 0
    %2698 = vmatpush1.bf16.msra.mxu0 0
    %2699 = vmatprep.subr.bf16.mxu0 0
    %2700 = vmatpush1.bf16.msra.mxu0 0
    %2701 = vmatprep.subr.bf16.mxu0 0
    %2702 = vmatpush1.bf16.msra.mxu0 0
    %2703 = vmatprep.subr.bf16.mxu0 0
    %2704 = vmatpush1.bf16.msra.mxu0 0
    %2705 = vmatprep.mubr.bf16.mxu0 0
    %2706 = vmatmul.mubr.bf16.gmra.mrb[0].mxu0 %v2345
    %v2707 = vpop.f32.mrb[0].mxu0
    %v2708 = vadd.f32 %v2653, %v2707
    %v2709 = vpop.f32.mrb[0].mxu0
    %v2710 = vpop.f32.mrb[0].mxu0
    %v2711 = vpop.f32.mrb[0].mxu0
    %2712 = vdwg.mxu0
    %v2714 = vsel %vm1203, %v2639, 0
    %2716 = vmatprep.subr.bf16.mxu0 0
    %2717 = vmatpush1.bf16.msra.mxu0 %v2714
    %2718 = vmatprep.subr.bf16.mxu0 0
    %2719 = vmatpush1.bf16.msra.mxu0 0
    %2720 = vmatprep.subr.bf16.mxu0 0
    %2721 = vmatpush1.bf16.msra.mxu0 0
    %2722 = vmatprep.subr.bf16.mxu0 0
    %2723 = vmatpush1.bf16.msra.mxu0 0
    %2724 = vmatprep.subr.bf16.mxu0 0
    %2725 = vmatpush1.bf16.msra.mxu0 0
    %2726 = vmatprep.subr.bf16.mxu0 0
    %2727 = vmatpush1.bf16.msra.mxu0 0
    %2728 = vmatprep.subr.bf16.mxu0 0
    %2729 = vmatpush1.bf16.msra.mxu0 0
    %2730 = vmatprep.subr.bf16.mxu0 0
    %2731 = vmatpush1.bf16.msra.mxu0 0
    %2732 = vmatprep.subr.bf16.mxu0 0
    %2733 = vmatpush1.bf16.msra.mxu0 0
    %2734 = vmatprep.subr.bf16.mxu0 0
    %2735 = vmatpush1.bf16.msra.mxu0 0
    %2736 = vmatprep.subr.bf16.mxu0 0
    %2737 = vmatpush1.bf16.msra.mxu0 0
    %2738 = vmatprep.subr.bf16.mxu0 0
    %2739 = vmatpush1.bf16.msra.mxu0 0
    %2740 = vmatprep.subr.bf16.mxu0 0
    %2741 = vmatpush1.bf16.msra.mxu0 0
    %2742 = vmatprep.subr.bf16.mxu0 0
    %2743 = vmatpush1.bf16.msra.mxu0 0
    %2744 = vmatprep.subr.bf16.mxu0 0
    %2745 = vmatpush1.bf16.msra.mxu0 0
    %2746 = vmatprep.subr.bf16.mxu0 0
    %2747 = vmatpush1.bf16.msra.mxu0 0
    %2748 = vmatprep.mubr.bf16.mxu0 0
    %2749 = vmatmul.mubr.bf16.gmra.mrb[0].mxu0 %v2391
    %v2750 = vpop.f32.mrb[0].mxu0
    %v2751 = vadd.f32 %v2657, %v2750
    %v2752 = vpop.f32.mrb[0].mxu0
    %v2753 = vpop.f32.mrb[0].mxu0
    %v2754 = vpop.f32.mrb[0].mxu0
    %2755 = vdwg.mxu0
    %v2757 = vsel %vm1203, %v2640, 0
    %2759 = vmatprep.subr.bf16.mxu0 0
    %2760 = vmatpush1.bf16.msra.mxu0 %v2757
    %2761 = vmatprep.subr.bf16.mxu0 0
    %2762 = vmatpush1.bf16.msra.mxu0 0
    %2763 = vmatprep.subr.bf16.mxu0 0
    %2764 = vmatpush1.bf16.msra.mxu0 0
    %2765 = vmatprep.subr.bf16.mxu0 0
    %2766 = vmatpush1.bf16.msra.mxu0 0
    %2767 = vmatprep.subr.bf16.mxu0 0
    %2768 = vmatpush1.bf16.msra.mxu0 0
    %2769 = vmatprep.subr.bf16.mxu0 0
    %2770 = vmatpush1.bf16.msra.mxu0 0
    %2771 = vmatprep.subr.bf16.mxu0 0
    %2772 = vmatpush1.bf16.msra.mxu0 0
    %2773 = vmatprep.subr.bf16.mxu0 0
    %2774 = vmatpush1.bf16.msra.mxu0 0
    %2775 = vmatprep.subr.bf16.mxu0 0
    %2776 = vmatpush1.bf16.msra.mxu0 0
    %2777 = vmatprep.subr.bf16.mxu0 0
    %2778 = vmatpush1.bf16.msra.mxu0 0
    %2779 = vmatprep.subr.bf16.mxu0 0
    %2780 = vmatpush1.bf16.msra.mxu0 0
    %2781 = vmatprep.subr.bf16.mxu0 0
    %2782 = vmatpush1.bf16.msra.mxu0 0
    %2783 = vmatprep.subr.bf16.mxu0 0
    %2784 = vmatpush1.bf16.msra.mxu0 0
    %2785 = vmatprep.subr.bf16.mxu0 0
    %2786 = vmatpush1.bf16.msra.mxu0 0
    %2787 = vmatprep.subr.bf16.mxu0 0
    %2788 = vmatpush1.bf16.msra.mxu0 0
    %2789 = vmatprep.subr.bf16.mxu0 0
    %2790 = vmatpush1.bf16.msra.mxu0 0
    %2791 = vmatprep.mubr.bf16.mxu0 0
    %2792 = vmatmul.mubr.bf16.gmra.mrb[0].mxu0 %v2437
    %v2793 = vpop.f32.mrb[0].mxu0
    %v2794 = vadd.f32 %v2661, %v2793
    %v2795 = vpop.f32.mrb[0].mxu0
    %v2796 = vpop.f32.mrb[0].mxu0
    %v2797 = vpop.f32.mrb[0].mxu0
    %2798 = vdwg.mxu0
    %v2800 = vsel %vm1203, %v2641, 0
    %2802 = vmatprep.subr.bf16.mxu0 0
    %2803 = vmatpush1.bf16.msra.mxu0 %v2800
    %2804 = vmatprep.subr.bf16.mxu0 0
    %2805 = vmatpush1.bf16.msra.mxu0 0
    %2806 = vmatprep.subr.bf16.mxu0 0
    %2807 = vmatpush1.bf16.msra.mxu0 0
    %2808 = vmatprep.subr.bf16.mxu0 0
    %2809 = vmatpush1.bf16.msra.mxu0 0
    %2810 = vmatprep.subr.bf16.mxu0 0
    %2811 = vmatpush1.bf16.msra.mxu0 0
    %2812 = vmatprep.subr.bf16.mxu0 0
    %2813 = vmatpush1.bf16.msra.mxu0 0
    %2814 = vmatprep.subr.bf16.mxu0 0
    %2815 = vmatpush1.bf16.msra.mxu0 0
    %2816 = vmatprep.subr.bf16.mxu0 0
    %2817 = vmatpush1.bf16.msra.mxu0 0
    %2818 = vmatprep.subr.bf16.mxu0 0
    %2819 = vmatpush1.bf16.msra.mxu0 0
    %2820 = vmatprep.subr.bf16.mxu0 0
    %2821 = vmatpush1.bf16.msra.mxu0 0
    %2822 = vmatprep.subr.bf16.mxu0 0
    %2823 = vmatpush1.bf16.msra.mxu0 0
    %2824 = vmatprep.subr.bf16.mxu0 0
    %2825 = vmatpush1.bf16.msra.mxu0 0
    %2826 = vmatprep.subr.bf16.mxu0 0
    %2827 = vmatpush1.bf16.msra.mxu0 0
    %2828 = vmatprep.subr.bf16.mxu0 0
    %2829 = vmatpush1.bf16.msra.mxu0 0
    %2830 = vmatprep.subr.bf16.mxu0 0
    %2831 = vmatpush1.bf16.msra.mxu0 0
    %2832 = vmatprep.subr.bf16.mxu0 0
    %2833 = vmatpush1.bf16.msra.mxu0 0
    %2834 = vmatprep.mubr.bf16.mxu0 0
    %2835 = vmatmul.mubr.bf16.gmra.mrb[0].mxu0 %v2483
    %v2836 = vpop.f32.mrb[0].mxu0
    %v2837 = vadd.f32 %v2665, %v2836
    %v2838 = vpop.f32.mrb[0].mxu0
    %v2839 = vpop.f32.mrb[0].mxu0
    %v2840 = vpop.f32.mrb[0].mxu0
    %2841 = vdwg.mxu0
    %v2842 = vmax.f32 %v2708, 0.0
    %v2843 = vmax.f32 %v2751, 0.0
    %v2844 = vmax.f32 %v2794, 0.0
    %v2845 = vmax.f32 %v2837, 0.0
    %v2846 = vpack.c.bf16 %v2235, %v2235
    %v2847 = vpack.c.bf16 %v2242, %v2242
    %v2848 = vld [vmem:[%s8] sm:$0xf]
    %v2849 = vld [vmem:[%s8 + $0x4] sm:$0xf]
    %v2850 = vld [vmem:[%s8 + $0x8] sm:$0xf]
    %v2851 = vld [vmem:[%s8 + $0xc] sm:$0xf]
    %v2852 = vld [vmem:[%s9] sm:$0x1]
    %v2854 = vlaneseq
    %v2855 = vshrl.u32 %v2854, 7
    %v2856 = vsub.s32 0, %v2855
    %v2857 = vrot.slane %v2852, %v2856
    %v2861 = vunpack.c.l.b16 %v2846
    %v2862 = vunpack.c.l.b16 %v2847
    %v2863 = vsel %vm391, %v2862, %v2861
    %v2864 = vpack.c.b16 %v2863, %v2863
    %v2869 = vunpack.c.l.b16 %v2848
    %v2870 = vunpack.c.l.b16 %v2849
    %v2871 = vunpack.c.l.b16 %v2850
    %v2872 = vunpack.c.l.b16 %v2851
    %v2873 = vpack.c.b16 %v2870, %v2869
    %v2874 = vpack.c.b16 %v2872, %v2871
    %v2878 = vsel %vm226, %v2864, 0
    %2880 = vmatprep.subr.bf16.mxu0 0
    %2881 = vmatpush1.bf16.msra.mxu0 %v2873
    %2882 = vmatprep.subr.bf16.mxu0 0
    %2883 = vmatpush1.bf16.msra.mxu0 %v2874
    %2884 = vmatprep.subr.bf16.mxu0 0
    %2885 = vmatpush1.bf16.msra.mxu0 0
    %2886 = vmatprep.subr.bf16.mxu0 0
    %2887 = vmatpush1.bf16.msra.mxu0 0
    %2888 = vmatprep.subr.bf16.mxu0 0
    %2889 = vmatpush1.bf16.msra.mxu0 0
    %2890 = vmatprep.subr.bf16.mxu0 0
    %2891 = vmatpush1.bf16.msra.mxu0 0
    %2892 = vmatprep.subr.bf16.mxu0 0
    %2893 = vmatpush1.bf16.msra.mxu0 0
    %2894 = vmatprep.subr.bf16.mxu0 0
    %2895 = vmatpush1.bf16.msra.mxu0 0
    %2896 = vmatprep.subr.bf16.mxu0 0
    %2897 = vmatpush1.bf16.msra.mxu0 0
    %2898 = vmatprep.subr.bf16.mxu0 0
    %2899 = vmatpush1.bf16.msra.mxu0 0
    %2900 = vmatprep.subr.bf16.mxu0 0
    %2901 = vmatpush1.bf16.msra.mxu0 0
    %2902 = vmatprep.subr.bf16.mxu0 0
    %2903 = vmatpush1.bf16.msra.mxu0 0
    %2904 = vmatprep.subr.bf16.mxu0 0
    %2905 = vmatpush1.bf16.msra.mxu0 0
    %2906 = vmatprep.subr.bf16.mxu0 0
    %2907 = vmatpush1.bf16.msra.mxu0 0
    %2908 = vmatprep.subr.bf16.mxu0 0
    %2909 = vmatpush1.bf16.msra.mxu0 0
    %2910 = vmatprep.subr.bf16.mxu0 0
    %2911 = vmatpush1.bf16.msra.mxu0 0
    %2912 = vmatprep.mubr.bf16.mxu0 0
    %2913 = vmatmul.mubr.bf16.gmra.mrb[0].mxu0 %v2878
    %v2914 = vpop.f32.mrb[0].mxu0
    %v2915 = vadd.f32 %v2857, %v2914
    %v2916 = vpop.f32.mrb[0].mxu0
    %v2917 = vpop.f32.mrb[0].mxu0
    %v2918 = vpop.f32.mrb[0].mxu0
    %2919 = vdwg.mxu0
    %v2921 = vrot.slane %v2915, 6
    %v2923 = vsel %vm1197, %v2915, %v2921
    %v2926 = vunpack.c.l.s4 1966171168
    %v2927 = vunpack.c.0.s8 %v2926
    %v2928 = vlaneseq
    %v2929 = vshrl.u32 %v2928, 7
    %v2930 = vsub.s32 %v2927, %v2929
    %v2931 = vrot.slane %v2923, %v2930
    %v2932 = vcombine.high %v2931, %v2931
    %v2934 = vunpack.c.l.s4 1966171168
    %v2935 = vunpack.c.0.s8 %v2934
    %v2936 = vlaneseq
    %v2937 = vshrl.u32 %v2936, 7
    %v2938 = vsub.s32 %v2935, %v2937
    %v2939 = vrot.slane %v2931, %v2938
    %v2941 = vunpack.c.l.s4 1966171168
    %v2942 = vunpack.c.0.s8 %v2941
    %v2943 = vlaneseq
    %v2944 = vshrl.u32 %v2943, 7
    %v2945 = vsub.s32 %v2942, %v2944
    %v2946 = vrot.slane %v2932, %v2945
    %v2947 = vcombine.high %v2939, %v2939
    %v2948 = vcombine.high %v2946, %v2946
    %v2949 = vpack.c.bf16 %v2843, %v2842
    %v2950 = vpack.c.bf16 %v2845, %v2844
    %v2951 = vld [vmem:[#allocation11] sm:$0xf]
    %v2952 = vld [vmem:[#allocation11 + $0x4] sm:$0xf]
    %v2953 = vld [vmem:[#allocation12] sm:$0x1]
    %v2955 = vlaneseq
    %v2956 = vshrl.u32 %v2955, 7
    %v2957 = vsub.s32 0, %v2956
    %v2958 = vrot.slane %v2953, %v2957
    %v2962 = vunpack.c.l.b16 %v2951
    %v2963 = vunpack.c.l.b16 %v2952
    %v2964 = vpack.c.b16 %v2963, %v2962
    %v2967 = vsel %vm2223, %v2949, 0
    %v2970 = vsel %vm2223, %v2950, 0
    %2972 = vmatprep.subr.bf16.mxu0 0
    %2973 = vmatpush1.bf16.msra.mxu0 %v2964
    %2974 = vmatprep.subr.bf16.mxu0 0
    %2975 = vmatpush1.bf16.msra.mxu0 0
    %2976 = vmatprep.subr.bf16.mxu0 0
    %2977 = vmatpush1.bf16.msra.mxu0 0
    %2978 = vmatprep.subr.bf16.mxu0 0
    %2979 = vmatpush1.bf16.msra.mxu0 0
    %2980 = vmatprep.subr.bf16.mxu0 0
    %2981 = vmatpush1.bf16.msra.mxu0 0
    %2982 = vmatprep.subr.bf16.mxu0 0
    %2983 = vmatpush1.bf16.msra.mxu0 0
    %2984 = vmatprep.subr.bf16.mxu0 0
    %2985 = vmatpush1.bf16.msra.mxu0 0
    %2986 = vmatprep.subr.bf16.mxu0 0
    %2987 = vmatpush1.bf16.msra.mxu0 0
    %2988 = vmatprep.subr.bf16.mxu0 0
    %2989 = vmatpush1.bf16.msra.mxu0 0
    %2990 = vmatprep.subr.bf16.mxu0 0
    %2991 = vmatpush1.bf16.msra.mxu0 0
    %2992 = vmatprep.subr.bf16.mxu0 0
    %2993 = vmatpush1.bf16.msra.mxu0 0
    %2994 = vmatprep.subr.bf16.mxu0 0
    %2995 = vmatpush1.bf16.msra.mxu0 0
    %2996 = vmatprep.subr.bf16.mxu0 0
    %2997 = vmatpush1.bf16.msra.mxu0 0
    %2998 = vmatprep.subr.bf16.mxu0 0
    %2999 = vmatpush1.bf16.msra.mxu0 0
    %3000 = vmatprep.subr.bf16.mxu0 0
    %3001 = vmatpush1.bf16.msra.mxu0 0
    %3002 = vmatprep.subr.bf16.mxu0 0
    %3003 = vmatpush1.bf16.msra.mxu0 0
    %3004 = vmatprep.mubr.bf16.mxu0 0
    %3005 = vmatmul.mubr.bf16.gmra.mrb[0].mxu0 %v2967
    %v3006 = vpop.f32.mrb[0].mxu0
    %v3007 = vadd.f32 %v2958, %v3006
    %v3008 = vpop.f32.mrb[0].mxu0
    %v3009 = vpop.f32.mrb[0].mxu0
    %v3010 = vadd.f32 %v2958, %v3009
    %v3011 = vpop.f32.mrb[0].mxu0
    %3012 = vmatprep.mubr.bf16.mxu0 0
    %3013 = vmatmul.mubr.bf16.gmra.mrb[0].mxu0 %v2970
    %v3014 = vpop.f32.mrb[0].mxu0
    %v3015 = vadd.f32 %v2958, %v3014
    %v3016 = vpop.f32.mrb[0].mxu0
    %v3017 = vpop.f32.mrb[0].mxu0
    %v3018 = vadd.f32 %v2958, %v3017
    %v3019 = vpop.f32.mrb[0].mxu0
    %3020 = vdwg.mxu0
    %v3021 = vlaneseq
    %v3022 = vshrl.u32 %v3021, 7
    %v3023 = vsub.s32 0, %v3022
    %v3024 = vrot.slane %v2939, %v3023
    %v3025 = vlaneseq
    %v3026 = vshrl.u32 %v3025, 7
    %v3027 = vsub.s32 0, %v3026
    %v3028 = vrot.slane %v2946, %v3027
    %v3029 = vlaneseq
    %v3030 = vshrl.u32 %v3029, 7
    %v3031 = vsub.s32 0, %v3030
    %v3032 = vrot.slane %v2947, %v3031
    %v3033 = vlaneseq
    %v3034 = vshrl.u32 %v3033, 7
    %v3035 = vsub.s32 0, %v3034
    %v3036 = vrot.slane %v2948, %v3035
    %v3041 = vadd.f32 %v3024, %v3007
    %v3042 = vadd.f32 %v3028, %v3010
    %v3043 = vadd.f32 %v3032, %v3015
    %v3044 = vadd.f32 %v3036, %v3018
    %v3045 = vtanh.pop %v3041
    %v3046 = vtanh.pop %v3042
    %v3047 = vtanh.pop %v3043
    %v3048 = vtanh.pop %v3044
    %v3049 = vpack.c.bf16 %v3046, %v3045
    %v3050 = vpack.c.bf16 %v3048, %v3047
    %v3051 = vld [vmem:[%s12] sm:$0xf]
    %v3052 = vld [vmem:[%s12 + $0x4] sm:$0xf]
    %v3053 = vld [vmem:[#allocation2] sm:$0x1]
    %v3055 = vlaneseq
    %v3056 = vshrl.u32 %v3055, 7
    %v3057 = vsub.s32 0, %v3056
    %v3058 = vrot.slane %v3053, %v3057
    %v3062 = vunpack.c.l.b16 %v3051
    %v3063 = vunpack.c.l.b16 %v3052
    %v3064 = vpack.c.b16 %v3063, %v3062
    %v3067 = vsel %vm2223, %v3049, 0
    %v3070 = vsel %vm2223, %v3050, 0
    %3072 = vmatprep.subr.bf16.mxu0 0
    %3073 = vmatpush1.bf16.msra.mxu0 %v3064
    %3074 = vmatprep.subr.bf16.mxu0 0
    %3075 = vmatpush1.bf16.msra.mxu0 0
    %3076 = vmatprep.subr.bf16.mxu0 0
    %3077 = vmatpush1.bf16.msra.mxu0 0
    %3078 = vmatprep.subr.bf16.mxu0 0
    %3079 = vmatpush1.bf16.msra.mxu0 0
    %3080 = vmatprep.subr.bf16.mxu0 0
    %3081 = vmatpush1.bf16.msra.mxu0 0
    %3082 = vmatprep.subr.bf16.mxu0 0
    %3083 = vmatpush1.bf16.msra.mxu0 0
    %3084 = vmatprep.subr.bf16.mxu0 0
    %3085 = vmatpush1.bf16.msra.mxu0 0
    %3086 = vmatprep.subr.bf16.mxu0 0
    %3087 = vmatpush1.bf16.msra.mxu0 0
    %3088 = vmatprep.subr.bf16.mxu0 0
    %3089 = vmatpush1.bf16.msra.mxu0 0
    %3090 = vmatprep.subr.bf16.mxu0 0
    %3091 = vmatpush1.bf16.msra.mxu0 0
    %3092 = vmatprep.subr.bf16.mxu0 0
    %3093 = vmatpush1.bf16.msra.mxu0 0
    %3094 = vmatprep.subr.bf16.mxu0 0
    %3095 = vmatpush1.bf16.msra.mxu0 0
    %3096 = vmatprep.subr.bf16.mxu0 0
    %3097 = vmatpush1.bf16.msra.mxu0 0
    %3098 = vmatprep.subr.bf16.mxu0 0
    %3099 = vmatpush1.bf16.msra.mxu0 0
    %3100 = vmatprep.subr.bf16.mxu0 0
    %3101 = vmatpush1.bf16.msra.mxu0 0
    %3102 = vmatprep.subr.bf16.mxu0 0
    %3103 = vmatpush1.bf16.msra.mxu0 0
    %3104 = vmatprep.mubr.bf16.mxu0 0
    %3105 = vmatmul.mubr.bf16.gmra.mrb[0].mxu0 %v3067
    %v3106 = vpop.f32.mrb[0].mxu0
    %v3107 = vadd.f32 %v3058, %v3106
    %v3108 = vpop.f32.mrb[0].mxu0
    %v3109 = vpop.f32.mrb[0].mxu0
    %v3110 = vadd.f32 %v3058, %v3109
    %v3111 = vpop.f32.mrb[0].mxu0
    %3112 = vmatprep.mubr.bf16.mxu0 0
    %3113 = vmatmul.mubr.bf16.gmra.mrb[0].mxu0 %v3070
    %v3114 = vpop.f32.mrb[0].mxu0
    %v3115 = vadd.f32 %v3058, %v3114
    %v3116 = vpop.f32.mrb[0].mxu0
    %v3117 = vpop.f32.mrb[0].mxu0
    %v3118 = vadd.f32 %v3058, %v3117
    %v3119 = vpop.f32.mrb[0].mxu0
    %3120 = vdwg.mxu0
    %vm3121 = vcmask 7168
    %v3122 = vsel %vm3121, %v3107, -inf
    %v3123 = vrot.slane %v3122, 4
    %v3124 = vmax.f32 %v3122, %v3123
    %v3125 = vrot.slane %v3124, 2
    %v3126 = vmax.f32 %v3124, %v3125
    %v3127 = vrot.slane %v3126, 1
    %v3128 = vmax.f32 %v3126, %v3127
    %v3129 = vsel %vm3121, %v3110, -inf
    %v3130 = vrot.slane %v3129, 4
    %v3131 = vmax.f32 %v3129, %v3130
    %v3132 = vrot.slane %v3131, 2
    %v3133 = vmax.f32 %v3131, %v3132
    %v3134 = vrot.slane %v3133, 1
    %v3135 = vmax.f32 %v3133, %v3134
    %v3136 = vsel %vm3121, %v3115, -inf
    %v3137 = vrot.slane %v3136, 4
    %v3138 = vmax.f32 %v3136, %v3137
    %v3139 = vrot.slane %v3138, 2
    %v3140 = vmax.f32 %v3138, %v3139
    %v3141 = vrot.slane %v3140, 1
    %v3142 = vmax.f32 %v3140, %v3141
    %v3143 = vsel %vm3121, %v3118, -inf
    %v3144 = vrot.slane %v3143, 4
    %v3145 = vmax.f32 %v3143, %v3144
    %v3146 = vrot.slane %v3145, 2
    %v3147 = vmax.f32 %v3145, %v3146
    %v3148 = vrot.slane %v3147, 1
    %v3149 = vmax.f32 %v3147, %v3148
    %v3150 = vsub.f32 %v3107, %v3128
    %v3151 = vsub.f32 %v3110, %v3135
    %v3152 = vsub.f32 %v3115, %v3142
    %v3153 = vsub.f32 %v3118, %v3149
    %v3154 = vmul.f32 %v3150, 1.442695
    %v3155 = vpow.pop %v3154
    %v3156 = vmul.f32 %v3151, 1.442695
    %v3157 = vpow.pop %v3156
    %v3158 = vmul.f32 %v3152, 1.442695
    %v3159 = vpow.pop %v3158
    %v3160 = vmul.f32 %v3153, 1.442695
    %v3161 = vpow.pop %v3160
    %v3162 = vsel %vm3121, %v3155, 0.0
    %v3163 = vrot.slane %v3162, 4
    %v3164 = vadd.f32 %v3162, %v3163
    %v3165 = vrot.slane %v3164, 2
    %v3166 = vadd.f32 %v3164, %v3165
    %v3167 = vrot.slane %v3166, 1
    %v3168 = vadd.f32 %v3166, %v3167
    %v3169 = vsel %vm3121, %v3157, 0.0
    %v3170 = vrot.slane %v3169, 4
    %v3171 = vadd.f32 %v3169, %v3170
    %v3172 = vrot.slane %v3171, 2
    %v3173 = vadd.f32 %v3171, %v3172
    %v3174 = vrot.slane %v3173, 1
    %v3175 = vadd.f32 %v3173, %v3174
    %v3176 = vsel %vm3121, %v3159, 0.0
    %v3177 = vrot.slane %v3176, 4
    %v3178 = vadd.f32 %v3176, %v3177
    %v3179 = vrot.slane %v3178, 2
    %v3180 = vadd.f32 %v3178, %v3179
    %v3181 = vrot.slane %v3180, 1
    %v3182 = vadd.f32 %v3180, %v3181
    %v3183 = vsel %vm3121, %v3161, 0.0
    %v3184 = vrot.slane %v3183, 4
    %v3185 = vadd.f32 %v3183, %v3184
    %v3186 = vrot.slane %v3185, 2
    %v3187 = vadd.f32 %v3185, %v3186
    %v3188 = vrot.slane %v3187, 1
    %v3189 = vadd.f32 %v3187, %v3188
    %v3190 = vrcp.pop %v3168
    %v3191 = vrcp.pop %v3175
    %v3192 = vrcp.pop %v3182
    %v3193 = vrcp.pop %v3189
    %v3194 = vmul.f32 %v3155, %v3190
    %v3195 = vmul.f32 %v3157, %v3191
    %v3196 = vmul.f32 %v3159, %v3192
    %v3197 = vmul.f32 %v3161, %v3193
    %3199 = vset.pattern.permute.xlu0 0
    %3200 = vperm.xlu0 %3199, %v3194
    %v3201 = vpop.permute.xlu0 %3200
    %3204 = vset.pattern.permute.xlu0 0
    %3205 = vperm.xlu0 %3204, %v3195
    %v3206 = vpop.permute.xlu0 %3205
    %3209 = vset.pattern.permute.xlu0 0
    %3210 = vperm.xlu0 %3209, %v3196
    %v3211 = vpop.permute.xlu0 %3210
    %3214 = vset.pattern.permute.xlu0 0
    %3215 = vperm.xlu0 %3214, %v3197
    %v3216 = vpop.permute.xlu0 %3215
    %v3218 = vmul.f32 %v3201, %v2842
    %v3219 = vmul.f32 %v3206, %v2843
    %v3220 = vmul.f32 %v3211, %v2844
    %v3221 = vmul.f32 %v3216, %v2845
    %3224 = vrot.lane.b32.xlu0 %v3218, 32
    %v3225 = vpop.permute.xlu0 %3224
    %3226 = vrot.lane.b32.xlu0 %v3219, 32
    %v3227 = vpop.permute.xlu0 %3226
    %3232 = vrot.lane.b32.xlu0 %v3220, 48
    %v3233 = vpop.permute.xlu0 %3232
    %3234 = vrot.lane.b32.xlu0 %v3221, 48
    %v3235 = vpop.permute.xlu0 %3234
    %v3238 = vsel %vm226, %v2227, %v3225
    %v3239 = vsel %vm226, %v2228, %v3227
    %vm3240 = vcmask 392192
    %v3241 = vsel %vm3240, %v3238, %v3233
    %v3242 = vsel %vm3240, %v3239, %v3235
    %v3243 = vpack.c.bf16 %v3242, %v3241
    %v3244 = vld [vmem:[%s19] sm:$0xf]
    %v3245 = vld [vmem:[%s19 + $0x4] sm:$0xf]
    %v3246 = vld [vmem:[%s19 + $0x8] sm:$0xf]
    %v3247 = vld [vmem:[%s19 + $0xc] sm:$0xf]
    %v3248 = vld [vmem:[%s19 + $0x10] sm:$0xf]
    %v3249 = vld [vmem:[%s19 + $0x14] sm:$0xf]
    %v3250 = vld [vmem:[%s19 + $0x18] sm:$0xf]
    %v3251 = vld [vmem:[%s19 + $0x1c] sm:$0xf]
    %v3252 = vld [vmem:[%s21] sm:$0x1]
    %v3254 = vlaneseq
    %v3255 = vshrl.u32 %v3254, 7
    %v3256 = vsub.s32 0, %v3255
    %v3257 = vrot.slane %v3252, %v3256
    %v3267 = vunpack.c.l.b16 %v3244
    %v3268 = vunpack.c.l.b16 %v3245
    %v3269 = vunpack.c.l.b16 %v3246
    %v3270 = vunpack.c.l.b16 %v3247
    %v3271 = vunpack.c.l.b16 %v3248
    %v3272 = vunpack.c.l.b16 %v3249
    %v3273 = vunpack.c.l.b16 %v3250
    %v3274 = vunpack.c.l.b16 %v3251
    %v3275 = vpack.c.b16 %v3268, %v3267
    %v3276 = vpack.c.b16 %v3270, %v3269
    %v3277 = vpack.c.b16 %v3272, %v3271
    %v3278 = vpack.c.b16 %v3274, %v3273
    %vm3283 = vcmask 523264
    %v3285 = vsel %vm3283, %v3243, 0
    %3287 = vmatprep.subr.bf16.mxu0 0
    %3288 = vmatpush1.bf16.msra.mxu0 %v3275
    %3289 = vmatprep.subr.bf16.mxu0 0
    %3290 = vmatpush1.bf16.msra.mxu0 %v3276
    %3291 = vmatprep.subr.bf16.mxu0 0
    %3292 = vmatpush1.bf16.msra.mxu0 %v3277
    %3293 = vmatprep.subr.bf16.mxu0 0
    %3294 = vmatpush1.bf16.msra.mxu0 %v3278
    %3295 = vmatprep.subr.bf16.mxu0 0
    %3296 = vmatpush1.bf16.msra.mxu0 0
    %3297 = vmatprep.subr.bf16.mxu0 0
    %3298 = vmatpush1.bf16.msra.mxu0 0
    %3299 = vmatprep.subr.bf16.mxu0 0
    %3300 = vmatpush1.bf16.msra.mxu0 0
    %3301 = vmatprep.subr.bf16.mxu0 0
    %3302 = vmatpush1.bf16.msra.mxu0 0
    %3303 = vmatprep.subr.bf16.mxu0 0
    %3304 = vmatpush1.bf16.msra.mxu0 0
    %3305 = vmatprep.subr.bf16.mxu0 0
    %3306 = vmatpush1.bf16.msra.mxu0 0
    %3307 = vmatprep.subr.bf16.mxu0 0
    %3308 = vmatpush1.bf16.msra.mxu0 0
    %3309 = vmatprep.subr.bf16.mxu0 0
    %3310 = vmatpush1.bf16.msra.mxu0 0
    %3311 = vmatprep.subr.bf16.mxu0 0
    %3312 = vmatpush1.bf16.msra.mxu0 0
    %3313 = vmatprep.subr.bf16.mxu0 0
    %3314 = vmatpush1.bf16.msra.mxu0 0
    %3315 = vmatprep.subr.bf16.mxu0 0
    %3316 = vmatpush1.bf16.msra.mxu0 0
    %3317 = vmatprep.subr.bf16.mxu0 0
    %3318 = vmatpush1.bf16.msra.mxu0 0
    %3319 = vmatprep.mubr.bf16.mxu0 0
    %3320 = vmatmul.mubr.bf16.gmra.mrb[0].mxu0 %v3285
    %v3321 = vpop.f32.mrb[0].mxu0
    %v3322 = vadd.f32 %v3257, %v3321
    %v3323 = vpop.f32.mrb[0].mxu0
    %v3324 = vpop.f32.mrb[0].mxu0
    %v3325 = vadd.f32 %v3257, %v3324
    %v3326 = vpop.f32.mrb[0].mxu0
    %3327 = vdwg.mxu0
    %v3328 = vld [vmem:[%s20] sm:$0xf]
    %v3329 = vld [vmem:[%s20 + $0x4] sm:$0xf]
    %v3330 = vld [vmem:[%s20 + $0x8] sm:$0xf]
    %v3331 = vld [vmem:[%s20 + $0xc] sm:$0xf]
    %v3336 = vunpack.c.l.b16 %v3328
    %v3337 = vunpack.c.l.b16 %v3329
    %v3338 = vunpack.c.l.b16 %v3330
    %v3339 = vunpack.c.l.b16 %v3331
    %v3340 = vpack.c.b16 %v3337, %v3336
    %v3341 = vpack.c.b16 %v3339, %v3338
    %3344 = vmatprep.subr.bf16.mxu0 0
    %3345 = vmatpush1.bf16.msra.mxu0 %v3340
    %3346 = vmatprep.subr.bf16.mxu0 0
    %3347 = vmatpush1.bf16.msra.mxu0 %v3341
    %3348 = vmatprep.subr.bf16.mxu0 0
    %3349 = vmatpush1.bf16.msra.mxu0 0
    %3350 = vmatprep.subr.bf16.mxu0 0
    %3351 = vmatpush1.bf16.msra.mxu0 0
    %3352 = vmatprep.subr.bf16.mxu0 0
    %3353 = vmatpush1.bf16.msra.mxu0 0
    %3354 = vmatprep.subr.bf16.mxu0 0
    %3355 = vmatpush1.bf16.msra.mxu0 0
    %3356 = vmatprep.subr.bf16.mxu0 0
    %3357 = vmatpush1.bf16.msra.mxu0 0
    %3358 = vmatprep.subr.bf16.mxu0 0
    %3359 = vmatpush1.bf16.msra.mxu0 0
    %3360 = vmatprep.subr.bf16.mxu0 0
    %3361 = vmatpush1.bf16.msra.mxu0 0
    %3362 = vmatprep.subr.bf16.mxu0 0
    %3363 = vmatpush1.bf16.msra.mxu0 0
    %3364 = vmatprep.subr.bf16.mxu0 0
    %3365 = vmatpush1.bf16.msra.mxu0 0
    %3366 = vmatprep.subr.bf16.mxu0 0
    %3367 = vmatpush1.bf16.msra.mxu0 0
    %3368 = vmatprep.subr.bf16.mxu0 0
    %3369 = vmatpush1.bf16.msra.mxu0 0
    %3370 = vmatprep.subr.bf16.mxu0 0
    %3371 = vmatpush1.bf16.msra.mxu0 0
    %3372 = vmatprep.subr.bf16.mxu0 0
    %3373 = vmatpush1.bf16.msra.mxu0 0
    %3374 = vmatprep.subr.bf16.mxu0 0
    %3375 = vmatpush1.bf16.msra.mxu0 0
    %3376 = vmatprep.mubr.bf16.mxu0 0
    %3377 = vmatmul.mubr.bf16.gmra.mrb[0].mxu0 %v288
    %v3378 = vpop.f32.mrb[0].mxu0
    %v3379 = vadd.f32 0.0, %v3378
    %v3380 = vpop.f32.mrb[0].mxu0
    %v3381 = vpop.f32.mrb[0].mxu0
    %v3382 = vpop.f32.mrb[0].mxu0
    %3383 = vdwg.mxu0
    %v3385 = vrot.slane %v3379, 1
    %v3388 = vadd.f32 %v3322, %v3379
    %v3389 = vadd.f32 %v3325, %v3385
    %v3390 = vxor.u32 %v3388, 2147483648
    %v3391 = vxor.u32 %v3389, 2147483648
    %v3392 = vmul.f32 %v3390, 1.442695
    %v3393 = vpow.pop %v3392
    %v3394 = vmul.f32 %v3391, 1.442695
    %v3395 = vpow.pop %v3394
    %v3396 = vadd.f32 %v3393, 1.0
    %v3397 = vadd.f32 %v3395, 1.0
    %v3398 = vrcp.pop %v3396
    %v3399 = vmul.f32 1.0, %v3398
    %v3400 = vrcp.pop %v3397
    %v3401 = vmul.f32 1.0, %v3400
    %v3402 = vtanh.pop %v3388
    %v3403 = vtanh.pop %v3389
    %v3404 = vmul.f32 %v3399, 0.0
    %v3405 = vmul.f32 %v3401, 0.0
    %3408 = vrot.lane.b32.xlu0 %v3402, 64
    %v3409 = vpop.permute.xlu0 %3408
    %3410 = vrot.lane.b32.xlu0 %v3403, 64
    %v3411 = vpop.permute.xlu0 %3410
    %v3414 = vmul.f32 %v3399, %v3409
    %v3415 = vmul.f32 %v3401, %v3411
    %3418 = vrot.lane.b32.xlu0 %v3414, 32
    %v3419 = vpop.permute.xlu0 %3418
    %3420 = vrot.lane.b32.xlu0 %v3415, 32
    %v3421 = vpop.permute.xlu0 %3420
    %v3424 = vadd.f32 %v3404, %v3419
    %v3425 = vadd.f32 %v3405, %v3421
    %v3426 = vtanh.pop %v3424
    %v3427 = vtanh.pop %v3425
    %3430 = vrot.lane.b32.xlu0 %v3426, 64
    %v3431 = vpop.permute.xlu0 %3430
    %3432 = vrot.lane.b32.xlu0 %v3427, 64
    %v3433 = vpop.permute.xlu0 %3432
    %v3436 = vmul.f32 %v3399, %v3431
    %v3437 = vmul.f32 %v3401, %v3433
    %v3438 = vpack.c.bf16 %v3436, %v3436
    %v3439 = vpack.c.bf16 %v3437, %v3437
    %v3442 = vunpack.c.l.b16 %v3438
    %v3443 = vunpack.c.l.b16 %v3439
    %v3444 = vrot.slane %v3443, 7
    %v3445 = vsel %vm391, %v3444, %v3442
    %v3446 = vpack.c.b16 %v3445, %v3445
    %3447 = vrot.lane.b32.xlu0 %v3446, 32
    %v3448 = vpop.permute.xlu0 %3447
    %v3450 = vsel %vm226, %v3448, 0
    %3452 = vmatprep.subr.bf16.mxu0 0
    %3453 = vmatpush1.bf16.msra.mxu0 %v3340
    %3454 = vmatprep.subr.bf16.mxu0 0
    %3455 = vmatpush1.bf16.msra.mxu0 %v3341
    %3456 = vmatprep.subr.bf16.mxu0 0
    %3457 = vmatpush1.bf16.msra.mxu0 0
    %3458 = vmatprep.subr.bf16.mxu0 0
    %3459 = vmatpush1.bf16.msra.mxu0 0
    %3460 = vmatprep.subr.bf16.mxu0 0
    %3461 = vmatpush1.bf16.msra.mxu0 0
    %3462 = vmatprep.subr.bf16.mxu0 0
    %3463 = vmatpush1.bf16.msra.mxu0 0
    %3464 = vmatprep.subr.bf16.mxu0 0
    %3465 = vmatpush1.bf16.msra.mxu0 0
    %3466 = vmatprep.subr.bf16.mxu0 0
    %3467 = vmatpush1.bf16.msra.mxu0 0
    %3468 = vmatprep.subr.bf16.mxu0 0
    %3469 = vmatpush1.bf16.msra.mxu0 0
    %3470 = vmatprep.subr.bf16.mxu0 0
    %3471 = vmatpush1.bf16.msra.mxu0 0
    %3472 = vmatprep.subr.bf16.mxu0 0
    %3473 = vmatpush1.bf16.msra.mxu0 0
    %3474 = vmatprep.subr.bf16.mxu0 0
    %3475 = vmatpush1.bf16.msra.mxu0 0
    %3476 = vmatprep.subr.bf16.mxu0 0
    %3477 = vmatpush1.bf16.msra.mxu0 0
    %3478 = vmatprep.subr.bf16.mxu0 0
    %3479 = vmatpush1.bf16.msra.mxu0 0
    %3480 = vmatprep.subr.bf16.mxu0 0
    %3481 = vmatpush1.bf16.msra.mxu0 0
    %3482 = vmatprep.subr.bf16.mxu0 0
    %3483 = vmatpush1.bf16.msra.mxu0 0
    %3484 = vmatprep.mubr.bf16.mxu0 0
    %3485 = vmatmul.mubr.bf16.gmra.mrb[0].mxu0 %v3450
    %v3486 = vpop.f32.mrb[0].mxu0
    %v3487 = vadd.f32 0.0, %v3486
    %v3488 = vpop.f32.mrb[0].mxu0
    %v3489 = vpop.f32.mrb[0].mxu0
    %v3490 = vpop.f32.mrb[0].mxu0
    %3491 = vdwg.mxu0
    %v3493 = vrot.slane %v3487, 7
    %v3496 = vadd.f32 %v3322, %v3493
    %v3497 = vadd.f32 %v3325, %v3487
    %v3498 = vxor.u32 %v3496, 2147483648
    %v3499 = vxor.u32 %v3497, 2147483648
    %v3500 = vmul.f32 %v3498, 1.442695
    %v3501 = vpow.pop %v3500
    %v3502 = vmul.f32 %v3499, 1.442695
    %v3503 = vpow.pop %v3502
    %v3504 = vadd.f32 %v3501, 1.0
    %v3505 = vadd.f32 %v3503, 1.0
    %v3506 = vrcp.pop %v3504
    %v3507 = vmul.f32 1.0, %v3506
    %v3508 = vrcp.pop %v3505
    %v3509 = vmul.f32 1.0, %v3508
    %v3510 = vtanh.pop %v3496
    %v3511 = vtanh.pop %v3497
    %v3514 = vrot.slane %v3424, 7
    %v3515 = vrot.slane %v3425, 7
    %v3518 = vmul.f32 %v3507, %v3514
    %v3519 = vmul.f32 %v3509, %v3515
    %3522 = vrot.lane.b32.xlu0 %v3510, 64
    %v3523 = vpop.permute.xlu0 %3522
    %3524 = vrot.lane.b32.xlu0 %v3511, 64
    %v3525 = vpop.permute.xlu0 %3524
    %v3528 = vmul.f32 %v3507, %v3523
    %v3529 = vmul.f32 %v3509, %v3525
    %3532 = vrot.lane.b32.xlu0 %v3528, 32
    %v3533 = vpop.permute.xlu0 %3532
    %3534 = vrot.lane.b32.xlu0 %v3529, 32
    %v3535 = vpop.permute.xlu0 %3534
    %v3538 = vadd.f32 %v3518, %v3533
    %v3539 = vadd.f32 %v3519, %v3535
    %v3540 = vtanh.pop %v3538
    %v3541 = vtanh.pop %v3539
    %3544 = vrot.lane.b32.xlu0 %v3540, 64
    %v3545 = vpop.permute.xlu0 %3544
    %3546 = vrot.lane.b32.xlu0 %v3541, 64
    %v3547 = vpop.permute.xlu0 %3546
    %v3550 = vmul.f32 %v3507, %v3545
    %v3551 = vmul.f32 %v3509, %v3547
    %v3554 = vrot.slane %v3550, 1
    %v3555 = vrot.slane %v3551, 1
    %v3558 = vmax.f32 %v3436, %v3554
    %v3559 = vmax.f32 %v3437, %v3555
    %v3560 = vpack.c.bf16 %v3550, %v3550
    %v3561 = vpack.c.bf16 %v3551, %v3551
    %v3564 = vunpack.c.l.b16 %v3560
    %v3565 = vunpack.c.l.b16 %v3561
    %v3566 = vrot.slane %v3564, 1
    %v3567 = vsel %vm391, %v3565, %v3566
    %v3568 = vpack.c.b16 %v3567, %v3567
    %3569 = vrot.lane.b32.xlu0 %v3568, 32
    %v3570 = vpop.permute.xlu0 %3569
    %v3572 = vsel %vm226, %v3570, 0
    %3574 = vmatprep.subr.bf16.mxu0 0
    %3575 = vmatpush1.bf16.msra.mxu0 %v3340
    %3576 = vmatprep.subr.bf16.mxu0 0
    %3577 = vmatpush1.bf16.msra.mxu0 %v3341
    %3578 = vmatprep.subr.bf16.mxu0 0
    %3579 = vmatpush1.bf16.msra.mxu0 0
    %3580 = vmatprep.subr.bf16.mxu0 0
    %3581 = vmatpush1.bf16.msra.mxu0 0
    %3582 = vmatprep.subr.bf16.mxu0 0
    %3583 = vmatpush1.bf16.msra.mxu0 0
    %3584 = vmatprep.subr.bf16.mxu0 0
    %3585 = vmatpush1.bf16.msra.mxu0 0
    %3586 = vmatprep.subr.bf16.mxu0 0
    %3587 = vmatpush1.bf16.msra.mxu0 0
    %3588 = vmatprep.subr.bf16.mxu0 0
    %3589 = vmatpush1.bf16.msra.mxu0 0
    %3590 = vmatprep.subr.bf16.mxu0 0
    %3591 = vmatpush1.bf16.msra.mxu0 0
    %3592 = vmatprep.subr.bf16.mxu0 0
    %3593 = vmatpush1.bf16.msra.mxu0 0
    %3594 = vmatprep.subr.bf16.mxu0 0
    %3595 = vmatpush1.bf16.msra.mxu0 0
    %3596 = vmatprep.subr.bf16.mxu0 0
    %3597 = vmatpush1.bf16.msra.mxu0 0
    %3598 = vmatprep.subr.bf16.mxu0 0
    %3599 = vmatpush1.bf16.msra.mxu0 0
    %3600 = vmatprep.subr.bf16.mxu0 0
    %3601 = vmatpush1.bf16.msra.mxu0 0
    %3602 = vmatprep.subr.bf16.mxu0 0
    %3603 = vmatpush1.bf16.msra.mxu0 0
    %3604 = vmatprep.subr.bf16.mxu0 0
    %3605 = vmatpush1.bf16.msra.mxu0 0
    %3606 = vmatprep.mubr.bf16.mxu0 0
    %3607 = vmatmul.mubr.bf16.gmra.mrb[0].mxu0 %v3572
    %v3608 = vpop.f32.mrb[0].mxu0
    %v3609 = vadd.f32 0.0, %v3608
    %v3610 = vpop.f32.mrb[0].mxu0
    %v3611 = vpop.f32.mrb[0].mxu0
    %v3612 = vpop.f32.mrb[0].mxu0
    %3613 = vdwg.mxu0
    %v3615 = vrot.slane %v3609, 6
    %v3616 = vrot.slane %v3609, 7
    %v3619 = vadd.f32 %v3322, %v3615
    %v3620 = vadd.f32 %v3325, %v3616
    %v3621 = vxor.u32 %v3619, 2147483648
    %v3622 = vxor.u32 %v3620, 2147483648
    %v3623 = vmul.f32 %v3621, 1.442695
    %v3624 = vpow.pop %v3623
    %v3625 = vmul.f32 %v3622, 1.442695
    %v3626 = vpow.pop %v3625
    %v3627 = vadd.f32 %v3624, 1.0
    %v3628 = vadd.f32 %v3626, 1.0
    %v3629 = vrcp.pop %v3627
    %v3630 = vmul.f32 1.0, %v3629
    %v3631 = vrcp.pop %v3628
    %v3632 = vmul.f32 1.0, %v3631
    %v3633 = vtanh.pop %v3619
    %v3634 = vtanh.pop %v3620
    %v3637 = vrot.slane %v3538, 7
    %v3638 = vrot.slane %v3539, 7
    %v3641 = vmul.f32 %v3630, %v3637
    %v3642 = vmul.f32 %v3632, %v3638
    %3645 = vrot.lane.b32.xlu0 %v3633, 64
    %v3646 = vpop.permute.xlu0 %3645
    %3647 = vrot.lane.b32.xlu0 %v3634, 64
    %v3648 = vpop.permute.xlu0 %3647
    %v3651 = vmul.f32 %v3630, %v3646
    %v3652 = vmul.f32 %v3632, %v3648
    %3655 = vrot.lane.b32.xlu0 %v3651, 32
    %v3656 = vpop.permute.xlu0 %3655
    %3657 = vrot.lane.b32.xlu0 %v3652, 32
    %v3658 = vpop.permute.xlu0 %3657
    %v3661 = vadd.f32 %v3641, %v3656
    %v3662 = vadd.f32 %v3642, %v3658
    %v3663 = vtanh.pop %v3661
    %v3664 = vtanh.pop %v3662
    %3667 = vrot.lane.b32.xlu0 %v3663, 64
    %v3668 = vpop.permute.xlu0 %3667
    %3669 = vrot.lane.b32.xlu0 %v3664, 64
    %v3670 = vpop.permute.xlu0 %3669
    %v3673 = vmul.f32 %v3630, %v3668
    %v3674 = vmul.f32 %v3632, %v3670
    %v3677 = vrot.slane %v3673, 2
    %v3678 = vrot.slane %v3674, 2
    %v3681 = vmax.f32 %v3558, %v3677
    %v3682 = vmax.f32 %v3559, %v3678
    %v3683 = vpack.c.bf16 %v3673, %v3673
    %v3684 = vpack.c.bf16 %v3674, %v3674
    %v3687 = vunpack.c.l.b16 %v3683
    %v3688 = vunpack.c.l.b16 %v3684
    %v3689 = vrot.slane %v3687, 2
    %v3690 = vrot.slane %v3688, 1
    %v3691 = vsel %vm391, %v3690, %v3689
    %v3692 = vpack.c.b16 %v3691, %v3691
    %3693 = vrot.lane.b32.xlu0 %v3692, 32
    %v3694 = vpop.permute.xlu0 %3693
    %v3696 = vsel %vm226, %v3694, 0
    %3698 = vmatprep.subr.bf16.mxu0 0
    %3699 = vmatpush1.bf16.msra.mxu0 %v3340
    %3700 = vmatprep.subr.bf16.mxu0 0
    %3701 = vmatpush1.bf16.msra.mxu0 %v3341
    %3702 = vmatprep.subr.bf16.mxu0 0
    %3703 = vmatpush1.bf16.msra.mxu0 0
    %3704 = vmatprep.subr.bf16.mxu0 0
    %3705 = vmatpush1.bf16.msra.mxu0 0
    %3706 = vmatprep.subr.bf16.mxu0 0
    %3707 = vmatpush1.bf16.msra.mxu0 0
    %3708 = vmatprep.subr.bf16.mxu0 0
    %3709 = vmatpush1.bf16.msra.mxu0 0
    %3710 = vmatprep.subr.bf16.mxu0 0
    %3711 = vmatpush1.bf16.msra.mxu0 0
    %3712 = vmatprep.subr.bf16.mxu0 0
    %3713 = vmatpush1.bf16.msra.mxu0 0
    %3714 = vmatprep.subr.bf16.mxu0 0
    %3715 = vmatpush1.bf16.msra.mxu0 0
    %3716 = vmatprep.subr.bf16.mxu0 0
    %3717 = vmatpush1.bf16.msra.mxu0 0
    %3718 = vmatprep.subr.bf16.mxu0 0
    %3719 = vmatpush1.bf16.msra.mxu0 0
    %3720 = vmatprep.subr.bf16.mxu0 0
    %3721 = vmatpush1.bf16.msra.mxu0 0
    %3722 = vmatprep.subr.bf16.mxu0 0
    %3723 = vmatpush1.bf16.msra.mxu0 0
    %3724 = vmatprep.subr.bf16.mxu0 0
    %3725 = vmatpush1.bf16.msra.mxu0 0
    %3726 = vmatprep.subr.bf16.mxu0 0
    %3727 = vmatpush1.bf16.msra.mxu0 0
    %3728 = vmatprep.subr.bf16.mxu0 0
    %3729 = vmatpush1.bf16.msra.mxu0 0
    %3730 = vmatprep.mubr.bf16.mxu0 0
    %3731 = vmatmul.mubr.bf16.gmra.mrb[0].mxu0 %v3696
    %v3732 = vpop.f32.mrb[0].mxu0
    %v3733 = vadd.f32 0.0, %v3732
    %v3734 = vpop.f32.mrb[0].mxu0
    %v3735 = vpop.f32.mrb[0].mxu0
    %v3736 = vpop.f32.mrb[0].mxu0
    %3737 = vdwg.mxu0
    %v3739 = vrot.slane %v3733, 5
    %v3740 = vrot.slane %v3733, 6
    %v3743 = vadd.f32 %v3322, %v3739
    %v3744 = vadd.f32 %v3325, %v3740
    %v3745 = vxor.u32 %v3743, 2147483648
    %v3746 = vxor.u32 %v3744, 2147483648
    %v3747 = vmul.f32 %v3745, 1.442695
    %v3748 = vpow.pop %v3747
    %v3749 = vmul.f32 %v3746, 1.442695
    %v3750 = vpow.pop %v3749
    %v3751 = vadd.f32 %v3748, 1.0
    %v3752 = vadd.f32 %v3750, 1.0
    %v3753 = vrcp.pop %v3751
    %v3754 = vmul.f32 1.0, %v3753
    %v3755 = vrcp.pop %v3752
    %v3756 = vmul.f32 1.0, %v3755
    %v3757 = vtanh.pop %v3743
    %v3758 = vtanh.pop %v3744
    %v3761 = vrot.slane %v3661, 7
    %v3762 = vrot.slane %v3662, 7
    %v3765 = vmul.f32 %v3754, %v3761
    %v3766 = vmul.f32 %v3756, %v3762
    %3769 = vrot.lane.b32.xlu0 %v3757, 64
    %v3770 = vpop.permute.xlu0 %3769
    %3771 = vrot.lane.b32.xlu0 %v3758, 64
    %v3772 = vpop.permute.xlu0 %3771
    %v3775 = vmul.f32 %v3754, %v3770
    %v3776 = vmul.f32 %v3756, %v3772
    %3779 = vrot.lane.b32.xlu0 %v3775, 32
    %v3780 = vpop.permute.xlu0 %3779
    %3781 = vrot.lane.b32.xlu0 %v3776, 32
    %v3782 = vpop.permute.xlu0 %3781
    %v3785 = vadd.f32 %v3765, %v3780
    %v3786 = vadd.f32 %v3766, %v3782
    %v3787 = vtanh.pop %v3785
    %v3788 = vtanh.pop %v3786
    %3791 = vrot.lane.b32.xlu0 %v3787, 64
    %v3792 = vpop.permute.xlu0 %3791
    %3793 = vrot.lane.b32.xlu0 %v3788, 64
    %v3794 = vpop.permute.xlu0 %3793
    %v3797 = vmul.f32 %v3754, %v3792
    %v3798 = vmul.f32 %v3756, %v3794
    %v3801 = vrot.slane %v3797, 3
    %v3802 = vrot.slane %v3798, 3
    %v3805 = vmax.f32 %v3681, %v3801
    %v3806 = vmax.f32 %v3682, %v3802
    %v3807 = vpack.c.bf16 %v3797, %v3797
    %v3808 = vpack.c.bf16 %v3798, %v3798
    %v3811 = vunpack.c.l.b16 %v3807
    %v3812 = vunpack.c.l.b16 %v3808
    %v3813 = vrot.slane %v3811, 3
    %v3814 = vrot.slane %v3812, 2
    %v3815 = vsel %vm391, %v3814, %v3813
    %v3816 = vpack.c.b16 %v3815, %v3815
    %3817 = vrot.lane.b32.xlu0 %v3816, 32
    %v3818 = vpop.permute.xlu0 %3817
    %v3820 = vsel %vm226, %v3818, 0
    %3822 = vmatprep.subr.bf16.mxu0 0
    %3823 = vmatpush1.bf16.msra.mxu0 %v3340
    %3824 = vmatprep.subr.bf16.mxu0 0
    %3825 = vmatpush1.bf16.msra.mxu0 %v3341
    %3826 = vmatprep.subr.bf16.mxu0 0
    %3827 = vmatpush1.bf16.msra.mxu0 0
    %3828 = vmatprep.subr.bf16.mxu0 0
    %3829 = vmatpush1.bf16.msra.mxu0 0
    %3830 = vmatprep.subr.bf16.mxu0 0
    %3831 = vmatpush1.bf16.msra.mxu0 0
    %3832 = vmatprep.subr.bf16.mxu0 0
    %3833 = vmatpush1.bf16.msra.mxu0 0
    %3834 = vmatprep.subr.bf16.mxu0 0
    %3835 = vmatpush1.bf16.msra.mxu0 0
    %3836 = vmatprep.subr.bf16.mxu0 0
    %3837 = vmatpush1.bf16.msra.mxu0 0
    %3838 = vmatprep.subr.bf16.mxu0 0
    %3839 = vmatpush1.bf16.msra.mxu0 0
    %3840 = vmatprep.subr.bf16.mxu0 0
    %3841 = vmatpush1.bf16.msra.mxu0 0
    %3842 = vmatprep.subr.bf16.mxu0 0
    %3843 = vmatpush1.bf16.msra.mxu0 0
    %3844 = vmatprep.subr.bf16.mxu0 0
    %3845 = vmatpush1.bf16.msra.mxu0 0
    %3846 = vmatprep.subr.bf16.mxu0 0
    %3847 = vmatpush1.bf16.msra.mxu0 0
    %3848 = vmatprep.subr.bf16.mxu0 0
    %3849 = vmatpush1.bf16.msra.mxu0 0
    %3850 = vmatprep.subr.bf16.mxu0 0
    %3851 = vmatpush1.bf16.msra.mxu0 0
    %3852 = vmatprep.subr.bf16.mxu0 0
    %3853 = vmatpush1.bf16.msra.mxu0 0
    %3854 = vmatprep.mubr.bf16.mxu0 0
    %3855 = vmatmul.mubr.bf16.gmra.mrb[0].mxu0 %v3820
    %v3856 = vpop.f32.mrb[0].mxu0
    %v3857 = vadd.f32 0.0, %v3856
    %v3858 = vpop.f32.mrb[0].mxu0
    %v3859 = vpop.f32.mrb[0].mxu0
    %v3860 = vpop.f32.mrb[0].mxu0
    %3861 = vdwg.mxu0
    %v3863 = vrot.slane %v3857, 4
    %v3864 = vrot.slane %v3857, 5
    %v3867 = vadd.f32 %v3322, %v3863
    %v3868 = vadd.f32 %v3325, %v3864
    %v3869 = vxor.u32 %v3867, 2147483648
    %v3870 = vxor.u32 %v3868, 2147483648
    %v3871 = vmul.f32 %v3869, 1.442695
    %v3872 = vpow.pop %v3871
    %v3873 = vmul.f32 %v3870, 1.442695
    %v3874 = vpow.pop %v3873
    %v3875 = vadd.f32 %v3872, 1.0
    %v3876 = vadd.f32 %v3874, 1.0
    %v3877 = vrcp.pop %v3875
    %v3878 = vmul.f32 1.0, %v3877
    %v3879 = vrcp.pop %v3876
    %v3880 = vmul.f32 1.0, %v3879
    %v3881 = vtanh.pop %v3867
    %v3882 = vtanh.pop %v3868
    %v3885 = vrot.slane %v3785, 7
    %v3886 = vrot.slane %v3786, 7
    %v3889 = vmul.f32 %v3878, %v3885
    %v3890 = vmul.f32 %v3880, %v3886
    %3893 = vrot.lane.b32.xlu0 %v3881, 64
    %v3894 = vpop.permute.xlu0 %3893
    %3895 = vrot.lane.b32.xlu0 %v3882, 64
    %v3896 = vpop.permute.xlu0 %3895
    %v3899 = vmul.f32 %v3878, %v3894
    %v3900 = vmul.f32 %v3880, %v3896
    %3903 = vrot.lane.b32.xlu0 %v3899, 32
    %v3904 = vpop.permute.xlu0 %3903
    %3905 = vrot.lane.b32.xlu0 %v3900, 32
    %v3906 = vpop.permute.xlu0 %3905
    %v3909 = vadd.f32 %v3889, %v3904
    %v3910 = vadd.f32 %v3890, %v3906
    %v3911 = vtanh.pop %v3909
    %v3912 = vtanh.pop %v3910
    %3915 = vrot.lane.b32.xlu0 %v3911, 64
    %v3916 = vpop.permute.xlu0 %3915
    %3917 = vrot.lane.b32.xlu0 %v3912, 64
    %v3918 = vpop.permute.xlu0 %3917
    %v3921 = vmul.f32 %v3878, %v3916
    %v3922 = vmul.f32 %v3880, %v3918
    %v3925 = vrot.slane %v3921, 4
    %v3926 = vrot.slane %v3922, 4
    %v3929 = vmax.f32 %v3805, %v3925
    %v3930 = vmax.f32 %v3806, %v3926
    %v3931 = vpack.c.bf16 %v3921, %v3921
    %v3932 = vpack.c.bf16 %v3922, %v3922
    %v3935 = vunpack.c.l.b16 %v3931
    %v3936 = vunpack.c.l.b16 %v3932
    %v3937 = vrot.slane %v3935, 4
    %v3938 = vrot.slane %v3936, 3
    %v3939 = vsel %vm391, %v3938, %v3937
    %v3940 = vpack.c.b16 %v3939, %v3939
    %3941 = vrot.lane.b32.xlu0 %v3940, 32
    %v3942 = vpop.permute.xlu0 %3941
    %v3944 = vsel %vm226, %v3942, 0
    %3946 = vmatprep.subr.bf16.mxu0 0
    %3947 = vmatpush1.bf16.msra.mxu0 %v3340
    %3948 = vmatprep.subr.bf16.mxu0 0
    %3949 = vmatpush1.bf16.msra.mxu0 %v3341
    %3950 = vmatprep.subr.bf16.mxu0 0
    %3951 = vmatpush1.bf16.msra.mxu0 0
    %3952 = vmatprep.subr.bf16.mxu0 0
    %3953 = vmatpush1.bf16.msra.mxu0 0
    %3954 = vmatprep.subr.bf16.mxu0 0
    %3955 = vmatpush1.bf16.msra.mxu0 0
    %3956 = vmatprep.subr.bf16.mxu0 0
    %3957 = vmatpush1.bf16.msra.mxu0 0
    %3958 = vmatprep.subr.bf16.mxu0 0
    %3959 = vmatpush1.bf16.msra.mxu0 0
    %3960 = vmatprep.subr.bf16.mxu0 0
    %3961 = vmatpush1.bf16.msra.mxu0 0
    %3962 = vmatprep.subr.bf16.mxu0 0
    %3963 = vmatpush1.bf16.msra.mxu0 0
    %3964 = vmatprep.subr.bf16.mxu0 0
    %3965 = vmatpush1.bf16.msra.mxu0 0
    %3966 = vmatprep.subr.bf16.mxu0 0
    %3967 = vmatpush1.bf16.msra.mxu0 0
    %3968 = vmatprep.subr.bf16.mxu0 0
    %3969 = vmatpush1.bf16.msra.mxu0 0
    %3970 = vmatprep.subr.bf16.mxu0 0
    %3971 = vmatpush1.bf16.msra.mxu0 0
    %3972 = vmatprep.subr.bf16.mxu0 0
    %3973 = vmatpush1.bf16.msra.mxu0 0
    %3974 = vmatprep.subr.bf16.mxu0 0
    %3975 = vmatpush1.bf16.msra.mxu0 0
    %3976 = vmatprep.subr.bf16.mxu0 0
    %3977 = vmatpush1.bf16.msra.mxu0 0
    %3978 = vmatprep.mubr.bf16.mxu0 0
    %3979 = vmatmul.mubr.bf16.gmra.mrb[0].mxu0 %v3944
    %v3980 = vpop.f32.mrb[0].mxu0
    %v3981 = vadd.f32 0.0, %v3980
    %v3982 = vpop.f32.mrb[0].mxu0
    %v3983 = vpop.f32.mrb[0].mxu0
    %v3984 = vpop.f32.mrb[0].mxu0
    %3985 = vdwg.mxu0
    %v3987 = vrot.slane %v3981, 3
    %v3988 = vrot.slane %v3981, 4
    %v3991 = vadd.f32 %v3322, %v3987
    %v3992 = vadd.f32 %v3325, %v3988
    %v3993 = vxor.u32 %v3991, 2147483648
    %v3994 = vxor.u32 %v3992, 2147483648
    %v3995 = vmul.f32 %v3993, 1.442695
    %v3996 = vpow.pop %v3995
    %v3997 = vmul.f32 %v3994, 1.442695
    %v3998 = vpow.pop %v3997
    %v3999 = vadd.f32 %v3996, 1.0
    %v4000 = vadd.f32 %v3998, 1.0
    %v4001 = vrcp.pop %v3999
    %v4002 = vmul.f32 1.0, %v4001
    %v4003 = vrcp.pop %v4000
    %v4004 = vmul.f32 1.0, %v4003
    %v4005 = vtanh.pop %v3991
    %v4006 = vtanh.pop %v3992
    %v4009 = vrot.slane %v3909, 7
    %v4010 = vrot.slane %v3910, 7
    %v4013 = vmul.f32 %v4002, %v4009
    %v4014 = vmul.f32 %v4004, %v4010
    %4017 = vrot.lane.b32.xlu0 %v4005, 64
    %v4018 = vpop.permute.xlu0 %4017
    %4019 = vrot.lane.b32.xlu0 %v4006, 64
    %v4020 = vpop.permute.xlu0 %4019
    %v4023 = vmul.f32 %v4002, %v4018
    %v4024 = vmul.f32 %v4004, %v4020
    %4027 = vrot.lane.b32.xlu0 %v4023, 32
    %v4028 = vpop.permute.xlu0 %4027
    %4029 = vrot.lane.b32.xlu0 %v4024, 32
    %v4030 = vpop.permute.xlu0 %4029
    %v4033 = vadd.f32 %v4013, %v4028
    %v4034 = vadd.f32 %v4014, %v4030
    %v4035 = vtanh.pop %v4033
    %v4036 = vtanh.pop %v4034
    %4039 = vrot.lane.b32.xlu0 %v4035, 64
    %v4040 = vpop.permute.xlu0 %4039
    %4041 = vrot.lane.b32.xlu0 %v4036, 64
    %v4042 = vpop.permute.xlu0 %4041
    %v4045 = vmul.f32 %v4002, %v4040
    %v4046 = vmul.f32 %v4004, %v4042
    %v4049 = vrot.slane %v4045, 5
    %v4050 = vrot.slane %v4046, 5
    %v4053 = vmax.f32 %v3929, %v4049
    %v4054 = vmax.f32 %v3930, %v4050
    %v4055 = vpack.c.bf16 %v4045, %v4045
    %v4056 = vpack.c.bf16 %v4046, %v4046
    %v4059 = vunpack.c.l.b16 %v4055
    %v4060 = vunpack.c.l.b16 %v4056
    %v4061 = vrot.slane %v4059, 5
    %v4062 = vrot.slane %v4060, 4
    %v4063 = vsel %vm391, %v4062, %v4061
    %v4064 = vpack.c.b16 %v4063, %v4063
    %4065 = vrot.lane.b32.xlu0 %v4064, 32
    %v4066 = vpop.permute.xlu0 %4065
    %v4068 = vsel %vm226, %v4066, 0
    %4070 = vmatprep.subr.bf16.mxu0 0
    %4071 = vmatpush1.bf16.msra.mxu0 %v3340
    %4072 = vmatprep.subr.bf16.mxu0 0
    %4073 = vmatpush1.bf16.msra.mxu0 %v3341
    %4074 = vmatprep.subr.bf16.mxu0 0
    %4075 = vmatpush1.bf16.msra.mxu0 0
    %4076 = vmatprep.subr.bf16.mxu0 0
    %4077 = vmatpush1.bf16.msra.mxu0 0
    %4078 = vmatprep.subr.bf16.mxu0 0
    %4079 = vmatpush1.bf16.msra.mxu0 0
    %4080 = vmatprep.subr.bf16.mxu0 0
    %4081 = vmatpush1.bf16.msra.mxu0 0
    %4082 = vmatprep.subr.bf16.mxu0 0
    %4083 = vmatpush1.bf16.msra.mxu0 0
    %4084 = vmatprep.subr.bf16.mxu0 0
    %4085 = vmatpush1.bf16.msra.mxu0 0
    %4086 = vmatprep.subr.bf16.mxu0 0
    %4087 = vmatpush1.bf16.msra.mxu0 0
    %4088 = vmatprep.subr.bf16.mxu0 0
    %4089 = vmatpush1.bf16.msra.mxu0 0
    %4090 = vmatprep.subr.bf16.mxu0 0
    %4091 = vmatpush1.bf16.msra.mxu0 0
    %4092 = vmatprep.subr.bf16.mxu0 0
    %4093 = vmatpush1.bf16.msra.mxu0 0
    %4094 = vmatprep.subr.bf16.mxu0 0
    %4095 = vmatpush1.bf16.msra.mxu0 0
    %4096 = vmatprep.subr.bf16.mxu0 0
    %4097 = vmatpush1.bf16.msra.mxu0 0
    %4098 = vmatprep.subr.bf16.mxu0 0
    %4099 = vmatpush1.bf16.msra.mxu0 0
    %4100 = vmatprep.subr.bf16.mxu0 0
    %4101 = vmatpush1.bf16.msra.mxu0 0
    %4102 = vmatprep.mubr.bf16.mxu0 0
    %4103 = vmatmul.mubr.bf16.gmra.mrb[0].mxu0 %v4068
    %v4104 = vpop.f32.mrb[0].mxu0
    %v4105 = vadd.f32 0.0, %v4104
    %v4106 = vpop.f32.mrb[0].mxu0
    %v4107 = vpop.f32.mrb[0].mxu0
    %v4108 = vpop.f32.mrb[0].mxu0
    %4109 = vdwg.mxu0
    %v4111 = vrot.slane %v4105, 2
    %v4112 = vrot.slane %v4105, 3
    %v4115 = vadd.f32 %v3322, %v4111
    %v4116 = vadd.f32 %v3325, %v4112
    %v4117 = vxor.u32 %v4115, 2147483648
    %v4118 = vxor.u32 %v4116, 2147483648
    %v4119 = vmul.f32 %v4117, 1.442695
    %v4120 = vpow.pop %v4119
    %v4121 = vmul.f32 %v4118, 1.442695
    %v4122 = vpow.pop %v4121
    %v4123 = vadd.f32 %v4120, 1.0
    %v4124 = vadd.f32 %v4122, 1.0
    %v4125 = vrcp.pop %v4123
    %v4126 = vmul.f32 1.0, %v4125
    %v4127 = vrcp.pop %v4124
    %v4128 = vmul.f32 1.0, %v4127
    %v4129 = vtanh.pop %v4115
    %v4130 = vtanh.pop %v4116
    %v4133 = vrot.slane %v4033, 7
    %v4134 = vrot.slane %v4034, 7
    %v4137 = vmul.f32 %v4126, %v4133
    %v4138 = vmul.f32 %v4128, %v4134
    %4141 = vrot.lane.b32.xlu0 %v4129, 64
    %v4142 = vpop.permute.xlu0 %4141
    %4143 = vrot.lane.b32.xlu0 %v4130, 64
    %v4144 = vpop.permute.xlu0 %4143
    %v4147 = vmul.f32 %v4126, %v4142
    %v4148 = vmul.f32 %v4128, %v4144
    %4151 = vrot.lane.b32.xlu0 %v4147, 32
    %v4152 = vpop.permute.xlu0 %4151
    %4153 = vrot.lane.b32.xlu0 %v4148, 32
    %v4154 = vpop.permute.xlu0 %4153
    %v4157 = vadd.f32 %v4137, %v4152
    %v4158 = vadd.f32 %v4138, %v4154
    %v4159 = vtanh.pop %v4157
    %v4160 = vtanh.pop %v4158
    %4163 = vrot.lane.b32.xlu0 %v4159, 64
    %v4164 = vpop.permute.xlu0 %4163
    %4165 = vrot.lane.b32.xlu0 %v4160, 64
    %v4166 = vpop.permute.xlu0 %4165
    %v4169 = vmul.f32 %v4126, %v4164
    %v4170 = vmul.f32 %v4128, %v4166
    %v4173 = vrot.slane %v4169, 6
    %v4174 = vrot.slane %v4170, 6
    %v4177 = vmax.f32 %v4053, %v4173
    %v4178 = vmax.f32 %v4054, %v4174
    %v4179 = vpack.c.bf16 %v4169, %v4169
    %v4180 = vpack.c.bf16 %v4170, %v4170
    %v4183 = vunpack.c.l.b16 %v4179
    %v4184 = vunpack.c.l.b16 %v4180
    %v4185 = vrot.slane %v4183, 6
    %v4186 = vrot.slane %v4184, 5
    %v4187 = vsel %vm391, %v4186, %v4185
    %v4188 = vpack.c.b16 %v4187, %v4187
    %4189 = vrot.lane.b32.xlu0 %v4188, 32
    %v4190 = vpop.permute.xlu0 %4189
    %v4192 = vsel %vm226, %v4190, 0
    %4194 = vmatprep.subr.bf16.mxu0 0
    %4195 = vmatpush1.bf16.msra.mxu0 %v3340
    %4196 = vmatprep.subr.bf16.mxu0 0
    %4197 = vmatpush1.bf16.msra.mxu0 %v3341
    %4198 = vmatprep.subr.bf16.mxu0 0
    %4199 = vmatpush1.bf16.msra.mxu0 0
    %4200 = vmatprep.subr.bf16.mxu0 0
    %4201 = vmatpush1.bf16.msra.mxu0 0
    %4202 = vmatprep.subr.bf16.mxu0 0
    %4203 = vmatpush1.bf16.msra.mxu0 0
    %4204 = vmatprep.subr.bf16.mxu0 0
    %4205 = vmatpush1.bf16.msra.mxu0 0
    %4206 = vmatprep.subr.bf16.mxu0 0
    %4207 = vmatpush1.bf16.msra.mxu0 0
    %4208 = vmatprep.subr.bf16.mxu0 0
    %4209 = vmatpush1.bf16.msra.mxu0 0
    %4210 = vmatprep.subr.bf16.mxu0 0
    %4211 = vmatpush1.bf16.msra.mxu0 0
    %4212 = vmatprep.subr.bf16.mxu0 0
    %4213 = vmatpush1.bf16.msra.mxu0 0
    %4214 = vmatprep.subr.bf16.mxu0 0
    %4215 = vmatpush1.bf16.msra.mxu0 0
    %4216 = vmatprep.subr.bf16.mxu0 0
    %4217 = vmatpush1.bf16.msra.mxu0 0
    %4218 = vmatprep.subr.bf16.mxu0 0
    %4219 = vmatpush1.bf16.msra.mxu0 0
    %4220 = vmatprep.subr.bf16.mxu0 0
    %4221 = vmatpush1.bf16.msra.mxu0 0
    %4222 = vmatprep.subr.bf16.mxu0 0
    %4223 = vmatpush1.bf16.msra.mxu0 0
    %4224 = vmatprep.subr.bf16.mxu0 0
    %4225 = vmatpush1.bf16.msra.mxu0 0
    %4226 = vmatprep.mubr.bf16.mxu0 0
    %4227 = vmatmul.mubr.bf16.gmra.mrb[0].mxu0 %v4192
    %v4228 = vpop.f32.mrb[0].mxu0
    %v4229 = vadd.f32 0.0, %v4228
    %v4230 = vpop.f32.mrb[0].mxu0
    %v4231 = vpop.f32.mrb[0].mxu0
    %v4232 = vpop.f32.mrb[0].mxu0
    %4233 = vdwg.mxu0
    %v4235 = vrot.slane %v4229, 1
    %v4236 = vrot.slane %v4229, 2
    %v4239 = vadd.f32 %v3322, %v4235
    %v4240 = vadd.f32 %v3325, %v4236
    %v4241 = vxor.u32 %v4239, 2147483648
    %v4242 = vxor.u32 %v4240, 2147483648
    %v4243 = vmul.f32 %v4241, 1.442695
    %v4244 = vpow.pop %v4243
    %v4245 = vmul.f32 %v4242, 1.442695
    %v4246 = vpow.pop %v4245
    %v4247 = vadd.f32 %v4244, 1.0
    %v4248 = vadd.f32 %v4246, 1.0
    %v4249 = vrcp.pop %v4247
    %v4250 = vmul.f32 1.0, %v4249
    %v4251 = vrcp.pop %v4248
    %v4252 = vmul.f32 1.0, %v4251
    %v4253 = vtanh.pop %v4239
    %v4254 = vtanh.pop %v4240
    %v4257 = vrot.slane %v4157, 7
    %v4258 = vrot.slane %v4158, 7
    %v4261 = vmul.f32 %v4250, %v4257
    %v4262 = vmul.f32 %v4252, %v4258
    %4265 = vrot.lane.b32.xlu0 %v4253, 64
    %v4266 = vpop.permute.xlu0 %4265
    %4267 = vrot.lane.b32.xlu0 %v4254, 64
    %v4268 = vpop.permute.xlu0 %4267
    %v4271 = vmul.f32 %v4250, %v4266
    %v4272 = vmul.f32 %v4252, %v4268
    %4275 = vrot.lane.b32.xlu0 %v4271, 32
    %v4276 = vpop.permute.xlu0 %4275
    %4277 = vrot.lane.b32.xlu0 %v4272, 32
    %v4278 = vpop.permute.xlu0 %4277
    %v4281 = vadd.f32 %v4261, %v4276
    %v4282 = vadd.f32 %v4262, %v4278
    %v4283 = vtanh.pop %v4281
    %v4284 = vtanh.pop %v4282
    %4287 = vrot.lane.b32.xlu0 %v4283, 64
    %v4288 = vpop.permute.xlu0 %4287
    %4289 = vrot.lane.b32.xlu0 %v4284, 64
    %v4290 = vpop.permute.xlu0 %4289
    %v4293 = vmul.f32 %v4250, %v4288
    %v4294 = vmul.f32 %v4252, %v4290
    %v4297 = vrot.slane %v4293, 7
    %v4298 = vrot.slane %v4294, 7
    %v4301 = vmax.f32 %v4177, %v4297
    %v4302 = vmax.f32 %v4178, %v4298
    %v4303 = vpack.c.bf16 %v4301, %v4301
    %v4304 = vpack.c.bf16 %v4302, %v4302
    %v4305 = vld [vmem:[%s22] sm:$0xf]
    %v4306 = vld [vmem:[%s22 + $0x4] sm:$0xf]
    %v4307 = vld [vmem:[%s22 + $0x8] sm:$0xf]
    %v4308 = vld [vmem:[%s22 + $0xc] sm:$0xf]
    %v4309 = vld [vmem:[#allocation3] sm:$0x1]
    %v4311 = vlaneseq
    %v4312 = vshrl.u32 %v4311, 7
    %v4313 = vsub.s32 0, %v4312
    %v4314 = vrot.slane %v4309, %v4313
    %v4318 = vunpack.c.l.b16 %v4303
    %v4319 = vunpack.c.l.b16 %v4304
    %v4320 = vrot.slane %v4319, 7
    %v4321 = vsel %vm391, %v4320, %v4318
    %v4322 = vpack.c.b16 %v4321, %v4321
    %4323 = vrot.lane.b32.xlu0 %v4322, 32
    %v4324 = vpop.permute.xlu0 %4323
    %v4329 = vunpack.c.l.b16 %v4305
    %v4330 = vunpack.c.l.b16 %v4306
    %v4331 = vunpack.c.l.b16 %v4307
    %v4332 = vunpack.c.l.b16 %v4308
    %v4333 = vpack.c.b16 %v4330, %v4329
    %v4334 = vpack.c.b16 %v4332, %v4331
    %v4338 = vsel %vm226, %v4324, 0
    %4340 = vmatprep.subr.bf16.mxu0 0
    %4341 = vmatpush1.bf16.msra.mxu0 %v4333
    %4342 = vmatprep.subr.bf16.mxu0 0
    %4343 = vmatpush1.bf16.msra.mxu0 %v4334
    %4344 = vmatprep.subr.bf16.mxu0 0
    %4345 = vmatpush1.bf16.msra.mxu0 0
    %4346 = vmatprep.subr.bf16.mxu0 0
    %4347 = vmatpush1.bf16.msra.mxu0 0
    %4348 = vmatprep.subr.bf16.mxu0 0
    %4349 = vmatpush1.bf16.msra.mxu0 0
    %4350 = vmatprep.subr.bf16.mxu0 0
    %4351 = vmatpush1.bf16.msra.mxu0 0
    %4352 = vmatprep.subr.bf16.mxu0 0
    %4353 = vmatpush1.bf16.msra.mxu0 0
    %4354 = vmatprep.subr.bf16.mxu0 0
    %4355 = vmatpush1.bf16.msra.mxu0 0
    %4356 = vmatprep.subr.bf16.mxu0 0
    %4357 = vmatpush1.bf16.msra.mxu0 0
    %4358 = vmatprep.subr.bf16.mxu0 0
    %4359 = vmatpush1.bf16.msra.mxu0 0
    %4360 = vmatprep.subr.bf16.mxu0 0
    %4361 = vmatpush1.bf16.msra.mxu0 0
    %4362 = vmatprep.subr.bf16.mxu0 0
    %4363 = vmatpush1.bf16.msra.mxu0 0
    %4364 = vmatprep.subr.bf16.mxu0 0
    %4365 = vmatpush1.bf16.msra.mxu0 0
    %4366 = vmatprep.subr.bf16.mxu0 0
    %4367 = vmatpush1.bf16.msra.mxu0 0
    %4368 = vmatprep.subr.bf16.mxu0 0
    %4369 = vmatpush1.bf16.msra.mxu0 0
    %4370 = vmatprep.subr.bf16.mxu0 0
    %4371 = vmatpush1.bf16.msra.mxu0 0
    %4372 = vmatprep.mubr.bf16.mxu0 0
    %4373 = vmatmul.mubr.bf16.gmra.mrb[0].mxu0 %v4338
    %v4374 = vpop.f32.mrb[0].mxu0
    %v4375 = vadd.f32 %v4314, %v4374
    %v4376 = vpop.f32.mrb[0].mxu0
    %v4377 = vpop.f32.mrb[0].mxu0
    %v4378 = vpop.f32.mrb[0].mxu0
    %4379 = vdwg.mxu0
    %v4380 = vxor.u32 %v4375, 2147483648
    %v4381 = vmul.f32 %v4380, 1.442695
    %v4382 = vpow.pop %v4381
    %v4383 = vadd.f32 %v4382, 1.0
    %v4384 = vrcp.pop %v4383
    %v4385 = vmul.f32 1.0, %v4384
    %vm4386 = vcmask 1024
    %4387 = vst.msk [vmem:[%s24] sm:$0x3] %vm4386, %v4385
    // Predicated region
    $region134: #{tpu_custom_call.1} parent=1 // pred_check
      _
    $region135: #{tpu_custom_call.1} parent=1 // pred_check_branch
      %4389 = sbr.rel (0) target = $region137
    $region136: #{tpu_custom_call.1} parent=1 // pred_region
      _
    $region137: #{tpu_custom_call.1} parent=1 // pred_fallthru
      _
    // Predicated region
    $region138: #{tpu_custom_call.1} parent=1 // pred_check
      _
    $region139: #{tpu_custom_call.1} parent=1 // pred_check_branch
      %4391 = sbr.rel (0) target = $region141
    $region140: #{tpu_custom_call.1} parent=1 // pred_region
      _
    $region141: #{tpu_custom_call.1} parent=1 // pred_fallthru
      _
    %4392 = vsyncpa [#allocation5], 1
    %4393 = vsyncpa [#allocation7], 1
    %4394 = vsyncpa [#allocation10], 1
    %4395 = vsyncpa [#allocation13], 1
    %4396 = vsyncpa [#allocation16], 1

</llo_original>
